<compile_context>
chip_gen: v7x
topology: tpu7x:2x2x1
jax: 0.10.0
libtpu: 0.0.40
codegen_flags: <defaults>
</compile_context>

<pallas_src>
import jax
import jax.numpy as jnp
from jax.experimental import pallas as pl
from jax.experimental.pallas import tpu as pltpu

TB = 256  # batch tile (rows per grid step)


def mlp_kernel(x_ref, w1_ref, b1_ref, w2_ref, b2_ref, w3_ref, b3_ref, o_ref):
    x = x_ref[...]            # (TB, 3) f32
    w1 = w1_ref[...]          # (3, 1024) f32

    # ---- Layer 1 on the VPU: K=3 would waste the MXU contraction dimension. ----
    h1 = (x[:, 0:1] * w1[0:1, :]
          + x[:, 1:2] * w1[1:2, :]
          + x[:, 2:3] * w1[2:3, :]
          + b1_ref[...])                                   # (TB, 1024) f32
    h1 = jnp.maximum(h1, 0.0)

    # ---- Layer 2 on the MXU: bf16 operands, f32 accumulation. ----
    h2 = jnp.dot(h1.astype(jnp.bfloat16), w2_ref[...],
                 preferred_element_type=jnp.float32) + b2_ref[...]   # (TB, 256) f32
    h2 = jnp.maximum(h2, 0.0)

    # ---- Layer 3 as an NT matmul so the result lands lane-dense: (1, TB). ----
    out = jax.lax.dot_general(
        w3_ref[...],                       # (1, 256) bf16  (PyTorch (out, in) layout)
        h2.astype(jnp.bfloat16),           # (TB, 256) bf16
        dimension_numbers=(((1,), (1,)), ((), ())),
        preferred_element_type=jnp.float32,
    ) + b3_ref[0]                          # (1, TB) f32, scalar bias from SMEM

    o_ref[...] = out.astype(o_ref.dtype)


def mlp_forward(x, params):
    w1, b1, w2, b2, w3, b3 = params
    B = x.shape[0]
    Bp = ((B + TB - 1) // TB) * TB
    if Bp != B:
        x = jnp.pad(x, ((0, Bp - B), (0, 0)))

    out_row = pl.pallas_call(
        mlp_kernel,
        out_shape=jax.ShapeDtypeStruct((1, Bp), jnp.float32),
        grid=(Bp // TB,),
        in_specs=[
            pl.BlockSpec((TB, 3), lambda i: (i, 0)),            # x: tiled over batch
            pl.BlockSpec((3, 1024), lambda i: (0, 0)),          # w1: resident
            pl.BlockSpec((1, 1024), lambda i: (0, 0)),          # b1: resident
            pl.BlockSpec((1024, 256), lambda i: (0, 0)),        # w2 (bf16): resident
            pl.BlockSpec((1, 256), lambda i: (0, 0)),           # b2: resident
            pl.BlockSpec((1, 256), lambda i: (0, 0)),           # w3 (bf16): resident
            pl.BlockSpec(memory_space=pltpu.MemorySpace.SMEM),  # b3: scalar in SMEM
        ],
        out_specs=pl.BlockSpec((1, TB), lambda i: (0, i)),      # lane-dense output row
        compiler_params=pltpu.CompilerParams(
            dimension_semantics=("parallel",),                  # megacore sharding on v7x
        ),
    )(x, w1, b1, w2, b2, w3, b3)

    return out_row[0, :B].reshape(B, 1)


def init_params(key):
    # Mimics PyTorch's default U(-1/sqrt(fan_in), 1/sqrt(fan_in)) Linear init.
    def uniform(k, shape, fan_in):
        bound = 1.0 / jnp.sqrt(fan_in)
        return jax.random.uniform(k, shape, jnp.float32, -bound, bound)

    k1w, k1b, k2w, k2b, k3w, k3b = jax.random.split(key, 6)
    w1 = uniform(k1w, (3, 1024), 3.0)                          # (in, out) f32
    b1 = uniform(k1b, (1, 1024), 3.0)
    w2 = uniform(k2w, (1024, 256), 1024.0).astype(jnp.bfloat16)  # (in, out) bf16
    b2 = uniform(k2b, (1, 256), 1024.0)
    w3 = uniform(k3w, (1, 256), 256.0).astype(jnp.bfloat16)     # (out, in) bf16
    b3 = uniform(k3b, (1,), 256.0)
    return (w1, b1, w2, b2, w3, b3)


def reference_forward(x, params):
    # Pure-JAX reference with the same dtype scheme as the kernel (bf16 MXU inputs,
    # f32 accumulation) so the comparison validates the kernel, not quantization.
    w1, b1, w2, b2, w3, b3 = params
    h1 = jnp.maximum(
        jnp.dot(x, w1, precision=jax.lax.Precision.HIGHEST) + b1, 0.0)
    h2 = jnp.maximum(
        jnp.dot(h1.astype(jnp.bfloat16), w2,
                preferred_element_type=jnp.float32) + b2, 0.0)
    out = jnp.dot(h2.astype(jnp.bfloat16), w3.T,
                  preferred_element_type=jnp.float32) + b3
    return out  # (B, 1)


if __name__ == "__main__":
    key = jax.random.PRNGKey(0)
    kp, kx = jax.random.split(key)
    params = init_params(kp)

    # Batch of "three numbers" samples; intentionally not a multiple of TB to
    # exercise the pad/slice path (pads to 512 -> grid of 2 batch tiles).
    B = 500
    x = jax.random.uniform(kx, (B, 3), jnp.float32)

    out = jax.block_until_ready(mlp_forward(x, params))
    ref = reference_forward(x, params)

    assert out.shape == (B, 1)
    assert jnp.allclose(out, ref, atol=1e-3, rtol=1e-3), float(
        jnp.max(jnp.abs(out - ref)))

    print("KERNEL_OK")
</pallas_src>

<mosaic_0001>
module attributes {stable_mosaic.version = 11 : i64} {
  func.func @mlp_kernel(%arg0: i32, %arg1: memref<256x3xf32, #tpu.memory_space<vmem>>, %arg2: memref<3x1024xf32, #tpu.memory_space<vmem>>, %arg3: memref<1x1024xf32, #tpu.memory_space<vmem>>, %arg4: memref<1024x256xbf16, #tpu.memory_space<vmem>>, %arg5: memref<1x256xf32, #tpu.memory_space<vmem>>, %arg6: memref<1x256xbf16, #tpu.memory_space<vmem>>, %arg7: memref<1xf32, #tpu.memory_space<smem>>, %arg8: memref<1x256xf32, #tpu.memory_space<vmem>>) attributes {dimension_semantics = [#tpu.dimension_semantics<parallel>], iteration_bounds = array<i64: 2>, scalar_prefetch = 0 : i64, scratch_operands = 0 : i64, tpu.core_type = #tpu.core_type<tc>, window_params = [{transform_indices = @transform_0, window_bounds = array<i64: 256, 3>}, {pipeline_mode = #tpu.pipeline_mode<synchronous>, transform_indices = @transform_1, window_bounds = array<i64: 3, 1024>}, {pipeline_mode = #tpu.pipeline_mode<synchronous>, transform_indices = @transform_2, window_bounds = array<i64: 1, 1024>}, {pipeline_mode = #tpu.pipeline_mode<synchronous>, transform_indices = @transform_3, window_bounds = array<i64: 1024, 256>}, {pipeline_mode = #tpu.pipeline_mode<synchronous>, transform_indices = @transform_4, window_bounds = array<i64: 1, 256>}, {pipeline_mode = #tpu.pipeline_mode<synchronous>, transform_indices = @transform_5, window_bounds = array<i64: 1, 256>}, {transform_indices = @transform_6, window_bounds = array<i64: 1>}, {transform_indices = @transform_7, window_bounds = array<i64: 1, 256>}]} {
    %c0 = arith.constant 0 : index
    %c0_0 = arith.constant 0 : index
    %0 = vector.load %arg1[%c0, %c0_0] : memref<256x3xf32, #tpu.memory_space<vmem>>, vector<256x3xf32>
    %c0_1 = arith.constant 0 : index
    %c0_2 = arith.constant 0 : index
    %1 = vector.load %arg2[%c0_1, %c0_2] : memref<3x1024xf32, #tpu.memory_space<vmem>>, vector<3x1024xf32>
    %2 = vector.extract_strided_slice %0 {offsets = [0, 0], sizes = [256, 1], strides = [1, 1]} : vector<256x3xf32> to vector<256x1xf32>
    %3 = vector.extract_strided_slice %1 {offsets = [0, 0], sizes = [1, 1024], strides = [1, 1]} : vector<3x1024xf32> to vector<1x1024xf32>
    %4 = vector.broadcast %2 : vector<256x1xf32> to vector<256x1024xf32>
    %5 = vector.broadcast %3 : vector<1x1024xf32> to vector<256x1024xf32>
    %6 = arith.mulf %4, %5 : vector<256x1024xf32>
    %7 = vector.extract_strided_slice %0 {offsets = [0, 1], sizes = [256, 1], strides = [1, 1]} : vector<256x3xf32> to vector<256x1xf32>
    %8 = vector.extract_strided_slice %1 {offsets = [1, 0], sizes = [1, 1024], strides = [1, 1]} : vector<3x1024xf32> to vector<1x1024xf32>
    %9 = vector.broadcast %7 : vector<256x1xf32> to vector<256x1024xf32>
    %10 = vector.broadcast %8 : vector<1x1024xf32> to vector<256x1024xf32>
    %11 = arith.mulf %9, %10 : vector<256x1024xf32>
    %12 = arith.addf %6, %11 : vector<256x1024xf32>
    %13 = vector.extract_strided_slice %0 {offsets = [0, 2], sizes = [256, 1], strides = [1, 1]} : vector<256x3xf32> to vector<256x1xf32>
    %14 = vector.extract_strided_slice %1 {offsets = [2, 0], sizes = [1, 1024], strides = [1, 1]} : vector<3x1024xf32> to vector<1x1024xf32>
    %15 = vector.broadcast %13 : vector<256x1xf32> to vector<256x1024xf32>
    %16 = vector.broadcast %14 : vector<1x1024xf32> to vector<256x1024xf32>
    %17 = arith.mulf %15, %16 : vector<256x1024xf32>
    %18 = arith.addf %12, %17 : vector<256x1024xf32>
    %c0_3 = arith.constant 0 : index
    %c0_4 = arith.constant 0 : index
    %19 = vector.load %arg3[%c0_3, %c0_4] : memref<1x1024xf32, #tpu.memory_space<vmem>>, vector<1x1024xf32>
    %20 = vector.broadcast %19 : vector<1x1024xf32> to vector<256x1024xf32>
    %21 = arith.addf %18, %20 : vector<256x1024xf32>
    %cst = arith.constant 0.000000e+00 : f32
    %22 = vector.broadcast %cst : f32 to vector<256x1024xf32>
    %23 = arith.maximumf %21, %22 : vector<256x1024xf32>
    %24 = arith.truncf %23 : vector<256x1024xf32> to vector<256x1024xbf16>
    %c0_5 = arith.constant 0 : index
    %c0_6 = arith.constant 0 : index
    %25 = vector.load %arg4[%c0_5, %c0_6] : memref<1024x256xbf16, #tpu.memory_space<vmem>>, vector<1024x256xbf16>
    %cst_7 = arith.constant dense<0.000000e+00> : vector<256x256xf32>
    %26 = tpu.matmul %24, %25, %cst_7 {dimension_numbers = #tpu.dot_dimension_numbers<[1], [0], [0], [1], [0, 0, 1, 1], [], []>} : vector<256x1024xbf16>, vector<1024x256xbf16>, vector<256x256xf32> -> vector<256x256xf32>
    %c0_8 = arith.constant 0 : index
    %c0_9 = arith.constant 0 : index
    %27 = vector.load %arg5[%c0_8, %c0_9] : memref<1x256xf32, #tpu.memory_space<vmem>>, vector<1x256xf32>
    %28 = vector.broadcast %27 : vector<1x256xf32> to vector<256x256xf32>
    %29 = arith.addf %26, %28 : vector<256x256xf32>
    %cst_10 = arith.constant 0.000000e+00 : f32
    %30 = vector.broadcast %cst_10 : f32 to vector<256x256xf32>
    %31 = arith.maximumf %29, %30 : vector<256x256xf32>
    %c0_11 = arith.constant 0 : index
    %c0_12 = arith.constant 0 : index
    %32 = vector.load %arg6[%c0_11, %c0_12] : memref<1x256xbf16, #tpu.memory_space<vmem>>, vector<1x256xbf16>
    %33 = arith.truncf %31 : vector<256x256xf32> to vector<256x256xbf16>
    %cst_13 = arith.constant dense<0.000000e+00> : vector<1x256xf32>
    %34 = tpu.matmul %32, %33, %cst_13 {dimension_numbers = #tpu.dot_dimension_numbers<[1], [1], [0], [0], [0, 0, 1, 0], [], []>} : vector<1x256xbf16>, vector<256x256xbf16>, vector<1x256xf32> -> vector<1x256xf32>
    %c0_14 = arith.constant 0 : index
    %35 = memref.load %arg7[%c0_14] : memref<1xf32, #tpu.memory_space<smem>>
    %36 = vector.broadcast %35 : f32 to vector<1x256xf32>
    %37 = arith.addf %34, %36 : vector<1x256xf32>
    %c0_15 = arith.constant 0 : index
    %c0_16 = arith.constant 0 : index
    %38 = vector.load %arg8[%c0_15, %c0_16] : memref<1x256xf32, #tpu.memory_space<vmem>>, vector<1x256xf32>
    tpu.vector_store %arg8[%c0_15, %c0_16], %37 {strides = array<i32>} : memref<1x256xf32, #tpu.memory_space<vmem>>, vector<1x256xf32>,
    return
  }
  func.func @transform_0(%arg0: i32) -> (i32, i32) {
    %c0_i32 = arith.constant 0 : i32
    %c0_i32_0 = arith.constant 0 : i32
    return %arg0, %c0_i32 : i32, i32
  }
  func.func @transform_1(%arg0: i32) -> (i32, i32) {
    %c0_i32 = arith.constant 0 : i32
    %c0_i32_0 = arith.constant 0 : i32
    %c0_i32_1 = arith.constant 0 : i32
    return %c0_i32, %c0_i32_0 : i32, i32
  }
  func.func @transform_2(%arg0: i32) -> (i32, i32) {
    %c0_i32 = arith.constant 0 : i32
    %c0_i32_0 = arith.constant 0 : i32
    %c0_i32_1 = arith.constant 0 : i32
    return %c0_i32, %c0_i32_0 : i32, i32
  }
  func.func @transform_3(%arg0: i32) -> (i32, i32) {
    %c0_i32 = arith.constant 0 : i32
    %c0_i32_0 = arith.constant 0 : i32
    %c0_i32_1 = arith.constant 0 : i32
    return %c0_i32, %c0_i32_0 : i32, i32
  }
  func.func @transform_4(%arg0: i32) -> (i32, i32) {
    %c0_i32 = arith.constant 0 : i32
    %c0_i32_0 = arith.constant 0 : i32
    %c0_i32_1 = arith.constant 0 : i32
    return %c0_i32, %c0_i32_0 : i32, i32
  }
  func.func @transform_5(%arg0: i32) -> (i32, i32) {
    %c0_i32 = arith.constant 0 : i32
    %c0_i32_0 = arith.constant 0 : i32
    %c0_i32_1 = arith.constant 0 : i32
    return %c0_i32, %c0_i32_0 : i32, i32
  }
  func.func @transform_6(%arg0: i32) -> i32 {
    %c0_i32 = arith.constant 0 : i32
    %c0_i32_0 = arith.constant 0 : i32
    return %c0_i32 : i32
  }
  func.func @transform_7(%arg0: i32) -> (i32, i32) {
    %c0_i32 = arith.constant 0 : i32
    %c0_i32_0 = arith.constant 0 : i32
    return %c0_i32, %arg0 : i32, i32
  }
}

</mosaic_0001>

<llo_original>
// kernel: tpu_custom_call.1
$region0: #{tpu_custom_call.1}
  #allocation0 [shape = 'u32[]', space=smem, size = 0x4, offset = 0x4, fixed_abs, tag = 'smem constant byte address 0x4 - core index']
  #allocation1 [shape = 'u32[144,128]{1,0:T(1,128)}', space=vmem, size = 0x12000, scoped, tag = 'internal scratch']
  #allocation2 [shape = 'f32[1]{0:T(128)S(6)}', space=smem, size = 0x200, scoped, tag = 'scoped memory for tpu_custom_call.1']
  %s0 = inlined_call_operand.vmem [shape: f32[512,3], index: 0, kind: input, shape index: {}]
  %s1 = inlined_call_operand.vmem [shape: f32[3,1024], index: 1, kind: input, shape index: {}]
  %s2 = inlined_call_operand.vmem [shape: f32[1,1024], index: 2, kind: input, shape index: {}]
  %s3 = inlined_call_operand.hbm [shape: bf16[1024,256], index: 3, kind: input, shape index: {}]
  %s4 = inlined_call_operand.vmem [shape: f32[1,256], index: 4, kind: input, shape index: {}]
  %s5 = inlined_call_operand.vmem [shape: bf16[1,256], index: 5, kind: input, shape index: {}]
  %s6 = inlined_call_operand.<no memory space> [shape: f32[1], index: 6, kind: input, shape index: {}]
  %s7 = inlined_call_operand.hbm [shape: f32[1,512], index: 7, kind: output, shape index: {}]
  %s8 = sld [smem:[#allocation0]]
  $region65: #{tpu_custom_call.1} parent=0
    _
  %s10 = ssub.s32 1, %s8
  %s11 = scalar_select 0, %s10, %s8
  %12 = sst [smem:[#allocation2]] %s6
  $region1: #{tpu_custom_call.1} parent=0
    #allocation3 [shape = 'u8[524288]{0}', space=vmem, size = 0x80000, scoped, tag = 'input window, operand 3, single buffered']
    #allocation4 [shape = 's32[2]{0}', space=sflag, size = 0x8, scoped, tag = 'scoped memory for tpu_custom_call.1']
    #allocation5 [shape = 's32[2]{0}', space=sflag, size = 0x8, scoped, tag = 'scoped memory for tpu_custom_call.1']
    #allocation6 [shape = 'u8[2048]{0}', space=vmem, size = 0x800, scoped, tag = 'output window, operand 0']
    %13 = vsyncpa [#allocation4], 0
    %14 = vsyncpa [#allocation5], 0
    %s15 = scalar_lea.sflag [#allocation5], 1
    %16 = vsyncpa %s15, 0
    loop: start=0, step=1, limit=4
    $region2: #{tpu_custom_call.1} parent=1 // loop_pre_header
      _
    $region3: #{tpu_custom_call.1} parent=1 // loop_header
      %s18 = sphi 0, %s22
      %p19 = scmp.ge.s32.totalorder %s18, 4
      %s28 = sphi 0, %s30
      %s31 = sphi 0, %s28
      %s32 = sphi 0, %s31
      %s48 = sphi 0, %s32
      %s52 = sphi 0, %s52
      %s54 = sphi 0, %s52
      %s55 = sphi 0, %s54
      %s69 = sphi 0, %s55
      %s73 = sphi 0, %s73
      %s75 = sphi 0, %s73
      %s76 = sphi 0, %s75
      %s90 = sphi 0, %s76
      %s94 = sphi 0, %s94
      %s96 = sphi 0, %s94
      %s97 = sphi 0, %s96
      %s111 = sphi 0, %s97
      %s115 = sphi 0, %s115
      %s117 = sphi 0, %s115
      %s118 = sphi 0, %s117
      %s132 = sphi 0, %s118
      %s136 = sphi 0, %s136
      %s138 = sphi 0, %s136
      %s139 = sphi 0, %s138
      %s153 = sphi 0, %s139
      %s157 = sphi 0, %s157
      %s159 = sphi 0, %s157
      %s160 = sphi 0, %s159
      %s174 = sphi 0, %s160
      %s180 = sphi 0, %s182
      %s183 = sphi 0, %s180
      %s184 = sphi 0, %s183
      %s200 = sphi 0, %s184
    $region4: #{tpu_custom_call.1} parent=1 // loop_header_branch
      %21 = sbr.rel (%p19) target = $region8
    $region5: #{tpu_custom_call.1} parent=1 // loop_body
      %s23 = ssub.s32 %s18, 1
      %s24 = ssub.s32 %s18, 2
      %s25 = sadd.s32 %s18, 1
      %s26 = ssub.s32 %s18, %s25
      %p27 = scmp.eq.s32.totalorder %s26, 0
      %s29 = sadd.s32 %s28, 1
      %s30 = scalar_select %p27, %s28, %s29
      %p33 = pneg %p27
      %p34 = scmp.eq.s32.totalorder %s18, 1
      %p35 = por %p33, %p34
      %p36 = scmp.ne.s32.totalorder %s28, %s31
      %p37 = scmp.eq.s32.totalorder %s18, 0
      %p38 = por %p36, %p37
      %p39 = scmp.ne.s32.totalorder %s28, %s31
      %p40 = scmp.eq.s32.totalorder %s23, 1
      %p41 = por %p39, %p40
      %p42 = scmp.ne.s32.totalorder %s31, %s32
      %p43 = scmp.eq.s32.totalorder %s23, 0
      %p44 = por %p42, %p43
      %p45 = scmp.ne.s32.totalorder %s31, %s32
      %p46 = scmp.eq.s32.totalorder %s24, 1
      %p47 = por %p45, %p46
      %p49 = scmp.ne.s32.totalorder %s32, %s48
      %p50 = scmp.eq.s32.totalorder %s24, 0
      %p51 = por %p49, %p50
      %s53 = sadd.s32 %s52, 1
      %p56 = scmp.eq.s32.totalorder %s18, 1
      %p57 = scmp.ne.s32.totalorder %s52, %s54
      %p58 = scmp.eq.s32.totalorder %s18, 0
      %p59 = por %p57, %p58
      %p60 = scmp.ne.s32.totalorder %s52, %s54
      %p61 = scmp.eq.s32.totalorder %s23, 1
      %p62 = por %p60, %p61
      %p63 = scmp.ne.s32.totalorder %s54, %s55
      %p64 = scmp.eq.s32.totalorder %s23, 0
      %p65 = por %p63, %p64
      %p66 = scmp.ne.s32.totalorder %s54, %s55
      %p67 = scmp.eq.s32.totalorder %s24, 1
      %p68 = por %p66, %p67
      %p70 = scmp.ne.s32.totalorder %s55, %s69
      %p71 = scmp.eq.s32.totalorder %s24, 0
      %p72 = por %p70, %p71
      %s74 = sadd.s32 %s73, 1
      %p77 = scmp.eq.s32.totalorder %s18, 1
      %p78 = scmp.ne.s32.totalorder %s73, %s75
      %p79 = scmp.eq.s32.totalorder %s18, 0
      %p80 = por %p78, %p79
      %p81 = scmp.ne.s32.totalorder %s73, %s75
      %p82 = scmp.eq.s32.totalorder %s23, 1
      %p83 = por %p81, %p82
      %p84 = scmp.ne.s32.totalorder %s75, %s76
      %p85 = scmp.eq.s32.totalorder %s23, 0
      %p86 = por %p84, %p85
      %p87 = scmp.ne.s32.totalorder %s75, %s76
      %p88 = scmp.eq.s32.totalorder %s24, 1
      %p89 = por %p87, %p88
      %p91 = scmp.ne.s32.totalorder %s76, %s90
      %p92 = scmp.eq.s32.totalorder %s24, 0
      %p93 = por %p91, %p92
      %s95 = sadd.s32 %s94, 1
      %p98 = scmp.eq.s32.totalorder %s18, 1
      %p99 = scmp.ne.s32.totalorder %s94, %s96
      %p100 = scmp.eq.s32.totalorder %s18, 0
      %p101 = por %p99, %p100
      %p102 = scmp.ne.s32.totalorder %s94, %s96
      %p103 = scmp.eq.s32.totalorder %s23, 1
      %p104 = por %p102, %p103
      %p105 = scmp.ne.s32.totalorder %s96, %s97
      %p106 = scmp.eq.s32.totalorder %s23, 0
      %p107 = por %p105, %p106
      %p108 = scmp.ne.s32.totalorder %s96, %s97
      %p109 = scmp.eq.s32.totalorder %s24, 1
      %p110 = por %p108, %p109
      %p112 = scmp.ne.s32.totalorder %s97, %s111
      %p113 = scmp.eq.s32.totalorder %s24, 0
      %p114 = por %p112, %p113
      %s116 = sadd.s32 %s115, 1
      %p119 = scmp.eq.s32.totalorder %s18, 1
      %p120 = scmp.ne.s32.totalorder %s115, %s117
      %p121 = scmp.eq.s32.totalorder %s18, 0
      %p122 = por %p120, %p121
      %p123 = scmp.ne.s32.totalorder %s115, %s117
      %p124 = scmp.eq.s32.totalorder %s23, 1
      %p125 = por %p123, %p124
      %p126 = scmp.ne.s32.totalorder %s117, %s118
      %p127 = scmp.eq.s32.totalorder %s23, 0
      %p128 = por %p126, %p127
      %p129 = scmp.ne.s32.totalorder %s117, %s118
      %p130 = scmp.eq.s32.totalorder %s24, 1
      %p131 = por %p129, %p130
      %p133 = scmp.ne.s32.totalorder %s118, %s132
      %p134 = scmp.eq.s32.totalorder %s24, 0
      %p135 = por %p133, %p134
      %s137 = sadd.s32 %s136, 1
      %p140 = scmp.eq.s32.totalorder %s18, 1
      %p141 = scmp.ne.s32.totalorder %s136, %s138
      %p142 = scmp.eq.s32.totalorder %s18, 0
      %p143 = por %p141, %p142
      %p144 = scmp.ne.s32.totalorder %s136, %s138
      %p145 = scmp.eq.s32.totalorder %s23, 1
      %p146 = por %p144, %p145
      %p147 = scmp.ne.s32.totalorder %s138, %s139
      %p148 = scmp.eq.s32.totalorder %s23, 0
      %p149 = por %p147, %p148
      %p150 = scmp.ne.s32.totalorder %s138, %s139
      %p151 = scmp.eq.s32.totalorder %s24, 1
      %p152 = por %p150, %p151
      %p154 = scmp.ne.s32.totalorder %s139, %s153
      %p155 = scmp.eq.s32.totalorder %s24, 0
      %p156 = por %p154, %p155
      %s158 = sadd.s32 %s157, 1
      %p161 = scmp.eq.s32.totalorder %s18, 1
      %p162 = scmp.ne.s32.totalorder %s157, %s159
      %p163 = scmp.eq.s32.totalorder %s18, 0
      %p164 = por %p162, %p163
      %p165 = scmp.ne.s32.totalorder %s157, %s159
      %p166 = scmp.eq.s32.totalorder %s23, 1
      %p167 = por %p165, %p166
      %p168 = scmp.ne.s32.totalorder %s159, %s160
      %p169 = scmp.eq.s32.totalorder %s23, 0
      %p170 = por %p168, %p169
      %p171 = scmp.ne.s32.totalorder %s159, %s160
      %p172 = scmp.eq.s32.totalorder %s24, 1
      %p173 = por %p171, %p172
      %p175 = scmp.ne.s32.totalorder %s160, %s174
      %p176 = scmp.eq.s32.totalorder %s24, 0
      %p177 = por %p175, %p176
      %s178 = ssub.s32 %s18, %s25
      %p179 = scmp.eq.s32.totalorder %s178, 0
      %s181 = sadd.s32 %s180, 1
      %s182 = scalar_select %p179, %s180, %s181
      %p185 = pneg %p179
      %p186 = scmp.eq.s32.totalorder %s18, 1
      %p187 = por %p185, %p186
      %p188 = scmp.ne.s32.totalorder %s180, %s183
      %p189 = scmp.eq.s32.totalorder %s18, 0
      %p190 = por %p188, %p189
      %p191 = scmp.ne.s32.totalorder %s180, %s183
      %p192 = scmp.eq.s32.totalorder %s23, 1
      %p193 = por %p191, %p192
      %p194 = scmp.ne.s32.totalorder %s183, %s184
      %p195 = scmp.eq.s32.totalorder %s23, 0
      %p196 = por %p194, %p195
      %p197 = scmp.ne.s32.totalorder %s183, %s184
      %p198 = scmp.eq.s32.totalorder %s24, 1
      %p199 = por %p197, %p198
      %p201 = scmp.ne.s32.totalorder %s184, %s200
      %p202 = scmp.eq.s32.totalorder %s24, 0
      %p203 = por %p201, %p202
      %p204 = scmp.le.s32.totalorder 1, %s18
      %p205 = scmp.lt.s32.totalorder %s18, 3
      %p206 = pnand %p204, %p205
      %p207 = pneg %p206
      // Predicated region
      $region9: #{tpu_custom_call.1} parent=5 // pred_check
        _
      $region10: #{tpu_custom_call.1} parent=5 // pred_check_branch
        %209 = sbr.rel (%p206) target = $region12
      $region11: #{tpu_custom_call.1} parent=5 // pred_region
        %s210 = ssub.s32 %s18, 1
        // Predicated region
        $region13: #{tpu_custom_call.1} parent=11 // pred_check
          %p211 = pneg %p65
        $region14: #{tpu_custom_call.1} parent=11 // pred_check_branch
          %213 = sbr.rel (%p211) target = $region16
        $region15: #{tpu_custom_call.1} parent=11 // pred_region
          _
        $region16: #{tpu_custom_call.1} parent=11 // pred_fallthru
          _
        // Predicated region
        $region17: #{tpu_custom_call.1} parent=11 // pred_check
          %p214 = pneg %p86
        $region18: #{tpu_custom_call.1} parent=11 // pred_check_branch
          %216 = sbr.rel (%p214) target = $region20
        $region19: #{tpu_custom_call.1} parent=11 // pred_region
          _
        $region20: #{tpu_custom_call.1} parent=11 // pred_fallthru
          _
        // Predicated region
        $region21: #{tpu_custom_call.1} parent=11 // pred_check
          %p217 = pneg %p107
        $region22: #{tpu_custom_call.1} parent=11 // pred_check_branch
          %219 = sbr.rel (%p217) target = $region24
        $region23: #{tpu_custom_call.1} parent=11 // pred_region
          %s221 = ssub.s32 16384, 16384
          %222 = vsyncadd [#allocation4], %s221
          %s223 = sshll.u32 [#allocation3], 4
          %s224 = int_to_ptr.vmem [resolvable:$true] %s223
          %229 = dma.hbm_to_vmem [thread:$0]  %s3, 16384, %s224, [#allocation4], 128, 128, 8
        $region24: #{tpu_custom_call.1} parent=11 // pred_fallthru
          _
        // Predicated region
        $region25: #{tpu_custom_call.1} parent=11 // pred_check
          %p230 = pneg %p128
        $region26: #{tpu_custom_call.1} parent=11 // pred_check_branch
          %232 = sbr.rel (%p230) target = $region28
        $region27: #{tpu_custom_call.1} parent=11 // pred_region
          _
        $region28: #{tpu_custom_call.1} parent=11 // pred_fallthru
          _
        // Predicated region
        $region29: #{tpu_custom_call.1} parent=11 // pred_check
          %p233 = pneg %p149
        $region30: #{tpu_custom_call.1} parent=11 // pred_check_branch
          %235 = sbr.rel (%p233) target = $region32
        $region31: #{tpu_custom_call.1} parent=11 // pred_region
          _
        $region32: #{tpu_custom_call.1} parent=11 // pred_fallthru
          _
        // Predicated region
        $region33: #{tpu_custom_call.1} parent=11 // pred_check
          %p236 = pneg %p170
        $region34: #{tpu_custom_call.1} parent=11 // pred_check_branch
          %238 = sbr.rel (%p236) target = $region36
        $region35: #{tpu_custom_call.1} parent=11 // pred_region
          _
        $region36: #{tpu_custom_call.1} parent=11 // pred_fallthru
          _
      $region12: #{tpu_custom_call.1} parent=5 // pred_fallthru
        _
      %p239 = scmp.lt.s32.totalorder %s18, 2
      // Predicated region
      $region37: #{tpu_custom_call.1} parent=5 // pred_check
        %p240 = pneg %p239
      $region38: #{tpu_custom_call.1} parent=5 // pred_check_branch
        %242 = sbr.rel (%p240) target = $region40
      $region39: #{tpu_custom_call.1} parent=5 // pred_region
        // Predicated region
        $region41: #{tpu_custom_call.1} parent=39 // pred_check
          %p243 = pneg %p38
        $region42: #{tpu_custom_call.1} parent=39 // pred_check_branch
          %245 = sbr.rel (%p243) target = $region44
        $region43: #{tpu_custom_call.1} parent=39 // pred_region
          %s246 = smul.u32 32, %s18
          %p247 = scmp.lt.s32.totalorder %s246, 63
          %s248 = scalar_select %p247, %s246, 63
          %s249 = smul.addr %s248, 8
          %s250 = scalar_lea.vmem %s0, %s249
          %s251 = smul.u32 32, %s18
        $region44: #{tpu_custom_call.1} parent=39 // pred_fallthru
          _
      $region40: #{tpu_custom_call.1} parent=5 // pred_fallthru
        _
      %p252 = scmp.le.s32.totalorder 1, %s18
      %p253 = scmp.lt.s32.totalorder %s18, 3
      %p254 = pnand %p252, %p253
      %p255 = pneg %p254
      // Predicated region
      $region45: #{tpu_custom_call.1} parent=5 // pred_check
        _
      $region46: #{tpu_custom_call.1} parent=5 // pred_check_branch
        %257 = sbr.rel (%p254) target = $region48
      $region47: #{tpu_custom_call.1} parent=5 // pred_region
        %s258 = ssub.s32 %s18, 1
        // Predicated region
        $region49: #{tpu_custom_call.1} parent=47 // pred_check
          %p259 = pneg %p107
        $region50: #{tpu_custom_call.1} parent=47 // pred_check_branch
          %261 = sbr.rel (%p259) target = $region52
        $region51: #{tpu_custom_call.1} parent=47 // pred_region
          %262 = dma.done [#allocation4], 16384
        $region52: #{tpu_custom_call.1} parent=47 // pred_fallthru
          _
        %s263 = smul.u32 32, %s23
        %p264 = scmp.lt.s32.totalorder %s263, 63
        %s265 = scalar_select %p264, %s263, 63
        %s266 = smul.addr %s265, 8
        %s267 = scalar_lea.vmem %s0, %s266
        %p268 = pneg %p44
        %p269 = pneg %p41
        %p270 = pneg %p65
        %p271 = pneg %p62
        %p272 = pneg %p86
        %p273 = pneg %p83
        %p274 = pneg %p107
        %p275 = pneg %p104
        %p276 = pneg %p128
        %p277 = pneg %p125
        %p278 = pneg %p149
        %p279 = pneg %p146
        %p280 = pneg %p170
        %p281 = pneg %p167
        %p282 = pneg %p196
        %p283 = pneg %p193
        %s284 = sand.u32 %s183, 1
        %s285 = scalar_lea.sflag [#allocation5], %s284
        %s286 = sand.u32 %s183, 1
        %s287 = smul.addr %s286, 2
        %s288 = scalar_lea.vmem [#allocation6], %s287
        %s289 = smul.u32 32, %s23
        %p290 = scmp.lt.s32.totalorder %s289, 63
        %s291 = scalar_select %p290, %s289, 63
        %s292 = smul.addr %s291, 8
        %s293 = scalar_lea.vmem %s0, %s292
        %s294 = smul.u32 32, %s23
        %s295 = smul.u32 2, %s23
        %v296 = vld [vmem:[%s293] sm:$0xff]
        %v297 = vld [vmem:[%s293 + $0x8] sm:$0xff]
        %v298 = vld [vmem:[%s293 + $0x10] sm:$0xff]
        %v299 = vld [vmem:[%s293 + $0x18] sm:$0xff]
        %v300 = vld [vmem:[%s293 + $0x20] sm:$0xff]
        %v301 = vld [vmem:[%s293 + $0x28] sm:$0xff]
        %v302 = vld [vmem:[%s293 + $0x30] sm:$0xff]
        %v303 = vld [vmem:[%s293 + $0x38] sm:$0xff]
        %v304 = vld [vmem:[%s293 + $0x40] sm:$0xff]
        %v305 = vld [vmem:[%s293 + $0x48] sm:$0xff]
        %v306 = vld [vmem:[%s293 + $0x50] sm:$0xff]
        %v307 = vld [vmem:[%s293 + $0x58] sm:$0xff]
        %v308 = vld [vmem:[%s293 + $0x60] sm:$0xff]
        %v309 = vld [vmem:[%s293 + $0x68] sm:$0xff]
        %v310 = vld [vmem:[%s293 + $0x70] sm:$0xff]
        %v311 = vld [vmem:[%s293 + $0x78] sm:$0xff]
        %v312 = vld [vmem:[%s293 + $0x80] sm:$0xff]
        %v313 = vld [vmem:[%s293 + $0x88] sm:$0xff]
        %v314 = vld [vmem:[%s293 + $0x90] sm:$0xff]
        %v315 = vld [vmem:[%s293 + $0x98] sm:$0xff]
        %v316 = vld [vmem:[%s293 + $0xa0] sm:$0xff]
        %v317 = vld [vmem:[%s293 + $0xa8] sm:$0xff]
        %v318 = vld [vmem:[%s293 + $0xb0] sm:$0xff]
        %v319 = vld [vmem:[%s293 + $0xb8] sm:$0xff]
        %v320 = vld [vmem:[%s293 + $0xc0] sm:$0xff]
        %v321 = vld [vmem:[%s293 + $0xc8] sm:$0xff]
        %v322 = vld [vmem:[%s293 + $0xd0] sm:$0xff]
        %v323 = vld [vmem:[%s293 + $0xd8] sm:$0xff]
        %v324 = vld [vmem:[%s293 + $0xe0] sm:$0xff]
        %v325 = vld [vmem:[%s293 + $0xe8] sm:$0xff]
        %v326 = vld [vmem:[%s293 + $0xf0] sm:$0xff]
        %v327 = vld [vmem:[%s293 + $0xf8] sm:$0xff]
        %v328 = vld [vmem:[%s1] sm:$0x77]
        %v329 = vld [vmem:[%s1 + $0x8] sm:$0x77]
        %v330 = vld [vmem:[%s1 + $0x10] sm:$0x77]
        %v331 = vld [vmem:[%s1 + $0x18] sm:$0x77]
        %333 = vset.pattern.permute.xlu0 0
        %334 = vperm.xlu0 %333, %v296
        %v335 = vpop.permute.xlu0 %334
        %338 = vset.pattern.permute.xlu0 0
        %339 = vperm.xlu0 %338, %v297
        %v340 = vpop.permute.xlu0 %339
        %343 = vset.pattern.permute.xlu0 0
        %344 = vperm.xlu0 %343, %v298
        %v345 = vpop.permute.xlu0 %344
        %348 = vset.pattern.permute.xlu0 0
        %349 = vperm.xlu0 %348, %v299
        %v350 = vpop.permute.xlu0 %349
        %353 = vset.pattern.permute.xlu0 0
        %354 = vperm.xlu0 %353, %v300
        %v355 = vpop.permute.xlu0 %354
        %358 = vset.pattern.permute.xlu0 0
        %359 = vperm.xlu0 %358, %v301
        %v360 = vpop.permute.xlu0 %359
        %363 = vset.pattern.permute.xlu0 0
        %364 = vperm.xlu0 %363, %v302
        %v365 = vpop.permute.xlu0 %364
        %368 = vset.pattern.permute.xlu0 0
        %369 = vperm.xlu0 %368, %v303
        %v370 = vpop.permute.xlu0 %369
        %373 = vset.pattern.permute.xlu0 0
        %374 = vperm.xlu0 %373, %v304
        %v375 = vpop.permute.xlu0 %374
        %378 = vset.pattern.permute.xlu0 0
        %379 = vperm.xlu0 %378, %v305
        %v380 = vpop.permute.xlu0 %379
        %383 = vset.pattern.permute.xlu0 0
        %384 = vperm.xlu0 %383, %v306
        %v385 = vpop.permute.xlu0 %384
        %388 = vset.pattern.permute.xlu0 0
        %389 = vperm.xlu0 %388, %v307
        %v390 = vpop.permute.xlu0 %389
        %393 = vset.pattern.permute.xlu0 0
        %394 = vperm.xlu0 %393, %v308
        %v395 = vpop.permute.xlu0 %394
        %398 = vset.pattern.permute.xlu0 0
        %399 = vperm.xlu0 %398, %v309
        %v400 = vpop.permute.xlu0 %399
        %403 = vset.pattern.permute.xlu0 0
        %404 = vperm.xlu0 %403, %v310
        %v405 = vpop.permute.xlu0 %404
        %408 = vset.pattern.permute.xlu0 0
        %409 = vperm.xlu0 %408, %v311
        %v410 = vpop.permute.xlu0 %409
        %413 = vset.pattern.permute.xlu0 0
        %414 = vperm.xlu0 %413, %v312
        %v415 = vpop.permute.xlu0 %414
        %418 = vset.pattern.permute.xlu0 0
        %419 = vperm.xlu0 %418, %v313
        %v420 = vpop.permute.xlu0 %419
        %423 = vset.pattern.permute.xlu0 0
        %424 = vperm.xlu0 %423, %v314
        %v425 = vpop.permute.xlu0 %424
        %428 = vset.pattern.permute.xlu0 0
        %429 = vperm.xlu0 %428, %v315
        %v430 = vpop.permute.xlu0 %429
        %433 = vset.pattern.permute.xlu0 0
        %434 = vperm.xlu0 %433, %v316
        %v435 = vpop.permute.xlu0 %434
        %438 = vset.pattern.permute.xlu0 0
        %439 = vperm.xlu0 %438, %v317
        %v440 = vpop.permute.xlu0 %439
        %443 = vset.pattern.permute.xlu0 0
        %444 = vperm.xlu0 %443, %v318
        %v445 = vpop.permute.xlu0 %444
        %448 = vset.pattern.permute.xlu0 0
        %449 = vperm.xlu0 %448, %v319
        %v450 = vpop.permute.xlu0 %449
        %453 = vset.pattern.permute.xlu0 0
        %454 = vperm.xlu0 %453, %v320
        %v455 = vpop.permute.xlu0 %454
        %458 = vset.pattern.permute.xlu0 0
        %459 = vperm.xlu0 %458, %v321
        %v460 = vpop.permute.xlu0 %459
        %463 = vset.pattern.permute.xlu0 0
        %464 = vperm.xlu0 %463, %v322
        %v465 = vpop.permute.xlu0 %464
        %468 = vset.pattern.permute.xlu0 0
        %469 = vperm.xlu0 %468, %v323
        %v470 = vpop.permute.xlu0 %469
        %473 = vset.pattern.permute.xlu0 0
        %474 = vperm.xlu0 %473, %v324
        %v475 = vpop.permute.xlu0 %474
        %478 = vset.pattern.permute.xlu0 0
        %479 = vperm.xlu0 %478, %v325
        %v480 = vpop.permute.xlu0 %479
        %483 = vset.pattern.permute.xlu0 0
        %484 = vperm.xlu0 %483, %v326
        %v485 = vpop.permute.xlu0 %484
        %488 = vset.pattern.permute.xlu0 0
        %489 = vperm.xlu0 %488, %v327
        %v490 = vpop.permute.xlu0 %489
        %v496 = vlaneseq
        %v497 = vshrl.u32 %v496, 7
        %v498 = vsub.s32 0, %v497
        %v499 = vrot.slane %v328, %v498
        %v500 = vlaneseq
        %v501 = vshrl.u32 %v500, 7
        %v502 = vsub.s32 4, %v501
        %v503 = vrot.slane %v328, %v502
        %v504 = vlaneseq
        %v505 = vshrl.u32 %v504, 7
        %v506 = vsub.s32 0, %v505
        %v507 = vrot.slane %v329, %v506
        %v508 = vlaneseq
        %v509 = vshrl.u32 %v508, 7
        %v510 = vsub.s32 4, %v509
        %v511 = vrot.slane %v329, %v510
        %v512 = vlaneseq
        %v513 = vshrl.u32 %v512, 7
        %v514 = vsub.s32 0, %v513
        %v515 = vrot.slane %v330, %v514
        %v516 = vlaneseq
        %v517 = vshrl.u32 %v516, 7
        %v518 = vsub.s32 4, %v517
        %v519 = vrot.slane %v330, %v518
        %v520 = vlaneseq
        %v521 = vshrl.u32 %v520, 7
        %v522 = vsub.s32 0, %v521
        %v523 = vrot.slane %v331, %v522
        %v524 = vlaneseq
        %v525 = vshrl.u32 %v524, 7
        %v526 = vsub.s32 4, %v525
        %v527 = vrot.slane %v331, %v526
        %v536 = vlaneseq
        %v537 = vshrl.u32 %v536, 7
        %v538 = vsub.s32 0, %v537
        %v539 = vrot.slane %v499, %v538
        %v540 = vlaneseq
        %v541 = vshrl.u32 %v540, 7
        %v542 = vsub.s32 0, %v541
        %v543 = vrot.slane %v503, %v542
        %v544 = vlaneseq
        %v545 = vshrl.u32 %v544, 7
        %v546 = vsub.s32 0, %v545
        %v547 = vrot.slane %v507, %v546
        %v548 = vlaneseq
        %v549 = vshrl.u32 %v548, 7
        %v550 = vsub.s32 0, %v549
        %v551 = vrot.slane %v511, %v550
        %v552 = vlaneseq
        %v553 = vshrl.u32 %v552, 7
        %v554 = vsub.s32 0, %v553
        %v555 = vrot.slane %v515, %v554
        %v556 = vlaneseq
        %v557 = vshrl.u32 %v556, 7
        %v558 = vsub.s32 0, %v557
        %v559 = vrot.slane %v519, %v558
        %v560 = vlaneseq
        %v561 = vshrl.u32 %v560, 7
        %v562 = vsub.s32 0, %v561
        %v563 = vrot.slane %v523, %v562
        %v564 = vlaneseq
        %v565 = vshrl.u32 %v564, 7
        %v566 = vsub.s32 0, %v565
        %v567 = vrot.slane %v527, %v566
        %v568 = vmul.f32 %v335, %v539
        %v569 = vmul.f32 %v335, %v543
        %v570 = vmul.f32 %v335, %v547
        %v571 = vmul.f32 %v335, %v551
        %v572 = vmul.f32 %v335, %v555
        %v573 = vmul.f32 %v335, %v559
        %v574 = vmul.f32 %v335, %v563
        %v575 = vmul.f32 %v335, %v567
        %v576 = vmul.f32 %v340, %v539
        %v577 = vmul.f32 %v340, %v543
        %v578 = vmul.f32 %v340, %v547
        %v579 = vmul.f32 %v340, %v551
        %v580 = vmul.f32 %v340, %v555
        %v581 = vmul.f32 %v340, %v559
        %v582 = vmul.f32 %v340, %v563
        %v583 = vmul.f32 %v340, %v567
        %v584 = vmul.f32 %v345, %v539
        %v585 = vmul.f32 %v345, %v543
        %v586 = vmul.f32 %v345, %v547
        %v587 = vmul.f32 %v345, %v551
        %v588 = vmul.f32 %v345, %v555
        %v589 = vmul.f32 %v345, %v559
        %v590 = vmul.f32 %v345, %v563
        %v591 = vmul.f32 %v345, %v567
        %v592 = vmul.f32 %v350, %v539
        %v593 = vmul.f32 %v350, %v543
        %v594 = vmul.f32 %v350, %v547
        %v595 = vmul.f32 %v350, %v551
        %v596 = vmul.f32 %v350, %v555
        %v597 = vmul.f32 %v350, %v559
        %v598 = vmul.f32 %v350, %v563
        %v599 = vmul.f32 %v350, %v567
        %v600 = vmul.f32 %v355, %v539
        %v601 = vmul.f32 %v355, %v543
        %v602 = vmul.f32 %v355, %v547
        %v603 = vmul.f32 %v355, %v551
        %v604 = vmul.f32 %v355, %v555
        %v605 = vmul.f32 %v355, %v559
        %v606 = vmul.f32 %v355, %v563
        %v607 = vmul.f32 %v355, %v567
        %v608 = vmul.f32 %v360, %v539
        %v609 = vmul.f32 %v360, %v543
        %v610 = vmul.f32 %v360, %v547
        %v611 = vmul.f32 %v360, %v551
        %v612 = vmul.f32 %v360, %v555
        %v613 = vmul.f32 %v360, %v559
        %v614 = vmul.f32 %v360, %v563
        %v615 = vmul.f32 %v360, %v567
        %v616 = vmul.f32 %v365, %v539
        %v617 = vmul.f32 %v365, %v543
        %v618 = vmul.f32 %v365, %v547
        %v619 = vmul.f32 %v365, %v551
        %v620 = vmul.f32 %v365, %v555
        %v621 = vmul.f32 %v365, %v559
        %v622 = vmul.f32 %v365, %v563
        %v623 = vmul.f32 %v365, %v567
        %v624 = vmul.f32 %v370, %v539
        %v625 = vmul.f32 %v370, %v543
        %v626 = vmul.f32 %v370, %v547
        %v627 = vmul.f32 %v370, %v551
        %v628 = vmul.f32 %v370, %v555
        %v629 = vmul.f32 %v370, %v559
        %v630 = vmul.f32 %v370, %v563
        %v631 = vmul.f32 %v370, %v567
        %v632 = vmul.f32 %v375, %v539
        %v633 = vmul.f32 %v375, %v543
        %v634 = vmul.f32 %v375, %v547
        %v635 = vmul.f32 %v375, %v551
        %v636 = vmul.f32 %v375, %v555
        %v637 = vmul.f32 %v375, %v559
        %v638 = vmul.f32 %v375, %v563
        %v639 = vmul.f32 %v375, %v567
        %v640 = vmul.f32 %v380, %v539
        %v641 = vmul.f32 %v380, %v543
        %v642 = vmul.f32 %v380, %v547
        %v643 = vmul.f32 %v380, %v551
        %v644 = vmul.f32 %v380, %v555
        %v645 = vmul.f32 %v380, %v559
        %v646 = vmul.f32 %v380, %v563
        %v647 = vmul.f32 %v380, %v567
        %v648 = vmul.f32 %v385, %v539
        %v649 = vmul.f32 %v385, %v543
        %v650 = vmul.f32 %v385, %v547
        %v651 = vmul.f32 %v385, %v551
        %v652 = vmul.f32 %v385, %v555
        %v653 = vmul.f32 %v385, %v559
        %v654 = vmul.f32 %v385, %v563
        %v655 = vmul.f32 %v385, %v567
        %v656 = vmul.f32 %v390, %v539
        %v657 = vmul.f32 %v390, %v543
        %v658 = vmul.f32 %v390, %v547
        %v659 = vmul.f32 %v390, %v551
        %v660 = vmul.f32 %v390, %v555
        %v661 = vmul.f32 %v390, %v559
        %v662 = vmul.f32 %v390, %v563
        %v663 = vmul.f32 %v390, %v567
        %v664 = vmul.f32 %v395, %v539
        %v665 = vmul.f32 %v395, %v543
        %v666 = vmul.f32 %v395, %v547
        %v667 = vmul.f32 %v395, %v551
        %v668 = vmul.f32 %v395, %v555
        %v669 = vmul.f32 %v395, %v559
        %v670 = vmul.f32 %v395, %v563
        %v671 = vmul.f32 %v395, %v567
        %v672 = vmul.f32 %v400, %v539
        %v673 = vmul.f32 %v400, %v543
        %v674 = vmul.f32 %v400, %v547
        %v675 = vmul.f32 %v400, %v551
        %v676 = vmul.f32 %v400, %v555
        %v677 = vmul.f32 %v400, %v559
        %v678 = vmul.f32 %v400, %v563
        %v679 = vmul.f32 %v400, %v567
        %v680 = vmul.f32 %v405, %v539
        %v681 = vmul.f32 %v405, %v543
        %v682 = vmul.f32 %v405, %v547
        %v683 = vmul.f32 %v405, %v551
        %v684 = vmul.f32 %v405, %v555
        %v685 = vmul.f32 %v405, %v559
        %v686 = vmul.f32 %v405, %v563
        %v687 = vmul.f32 %v405, %v567
        %v688 = vmul.f32 %v410, %v539
        %v689 = vmul.f32 %v410, %v543
        %v690 = vmul.f32 %v410, %v547
        %v691 = vmul.f32 %v410, %v551
        %v692 = vmul.f32 %v410, %v555
        %v693 = vmul.f32 %v410, %v559
        %v694 = vmul.f32 %v410, %v563
        %v695 = vmul.f32 %v410, %v567
        %v696 = vmul.f32 %v415, %v539
        %v697 = vmul.f32 %v415, %v543
        %v698 = vmul.f32 %v415, %v547
        %v699 = vmul.f32 %v415, %v551
        %v700 = vmul.f32 %v415, %v555
        %v701 = vmul.f32 %v415, %v559
        %v702 = vmul.f32 %v415, %v563
        %v703 = vmul.f32 %v415, %v567
        %v704 = vmul.f32 %v420, %v539
        %v705 = vmul.f32 %v420, %v543
        %v706 = vmul.f32 %v420, %v547
        %v707 = vmul.f32 %v420, %v551
        %v708 = vmul.f32 %v420, %v555
        %v709 = vmul.f32 %v420, %v559
        %v710 = vmul.f32 %v420, %v563
        %v711 = vmul.f32 %v420, %v567
        %v712 = vmul.f32 %v425, %v539
        %v713 = vmul.f32 %v425, %v543
        %v714 = vmul.f32 %v425, %v547
        %v715 = vmul.f32 %v425, %v551
        %v716 = vmul.f32 %v425, %v555
        %v717 = vmul.f32 %v425, %v559
        %v718 = vmul.f32 %v425, %v563
        %v719 = vmul.f32 %v425, %v567
        %v720 = vmul.f32 %v430, %v539
        %v721 = vmul.f32 %v430, %v543
        %v722 = vmul.f32 %v430, %v547
        %v723 = vmul.f32 %v430, %v551
        %v724 = vmul.f32 %v430, %v555
        %v725 = vmul.f32 %v430, %v559
        %v726 = vmul.f32 %v430, %v563
        %v727 = vmul.f32 %v430, %v567
        %v728 = vmul.f32 %v435, %v539
        %v729 = vmul.f32 %v435, %v543
        %v730 = vmul.f32 %v435, %v547
        %v731 = vmul.f32 %v435, %v551
        %v732 = vmul.f32 %v435, %v555
        %v733 = vmul.f32 %v435, %v559
        %v734 = vmul.f32 %v435, %v563
        %v735 = vmul.f32 %v435, %v567
        %v736 = vmul.f32 %v440, %v539
        %v737 = vmul.f32 %v440, %v543
        %v738 = vmul.f32 %v440, %v547
        %v739 = vmul.f32 %v440, %v551
        %v740 = vmul.f32 %v440, %v555
        %v741 = vmul.f32 %v440, %v559
        %v742 = vmul.f32 %v440, %v563
        %v743 = vmul.f32 %v440, %v567
        %v744 = vmul.f32 %v445, %v539
        %v745 = vmul.f32 %v445, %v543
        %v746 = vmul.f32 %v445, %v547
        %v747 = vmul.f32 %v445, %v551
        %v748 = vmul.f32 %v445, %v555
        %v749 = vmul.f32 %v445, %v559
        %v750 = vmul.f32 %v445, %v563
        %v751 = vmul.f32 %v445, %v567
        %v752 = vmul.f32 %v450, %v539
        %v753 = vmul.f32 %v450, %v543
        %v754 = vmul.f32 %v450, %v547
        %v755 = vmul.f32 %v450, %v551
        %v756 = vmul.f32 %v450, %v555
        %v757 = vmul.f32 %v450, %v559
        %v758 = vmul.f32 %v450, %v563
        %v759 = vmul.f32 %v450, %v567
        %v760 = vmul.f32 %v455, %v539
        %v761 = vmul.f32 %v455, %v543
        %v762 = vmul.f32 %v455, %v547
        %v763 = vmul.f32 %v455, %v551
        %v764 = vmul.f32 %v455, %v555
        %v765 = vmul.f32 %v455, %v559
        %v766 = vmul.f32 %v455, %v563
        %v767 = vmul.f32 %v455, %v567
        %v768 = vmul.f32 %v460, %v539
        %v769 = vmul.f32 %v460, %v543
        %v770 = vmul.f32 %v460, %v547
        %v771 = vmul.f32 %v460, %v551
        %v772 = vmul.f32 %v460, %v555
        %v773 = vmul.f32 %v460, %v559
        %v774 = vmul.f32 %v460, %v563
        %v775 = vmul.f32 %v460, %v567
        %v776 = vmul.f32 %v465, %v539
        %v777 = vmul.f32 %v465, %v543
        %v778 = vmul.f32 %v465, %v547
        %v779 = vmul.f32 %v465, %v551
        %v780 = vmul.f32 %v465, %v555
        %v781 = vmul.f32 %v465, %v559
        %v782 = vmul.f32 %v465, %v563
        %v783 = vmul.f32 %v465, %v567
        %v784 = vmul.f32 %v470, %v539
        %v785 = vmul.f32 %v470, %v543
        %v786 = vmul.f32 %v470, %v547
        %v787 = vmul.f32 %v470, %v551
        %v788 = vmul.f32 %v470, %v555
        %v789 = vmul.f32 %v470, %v559
        %v790 = vmul.f32 %v470, %v563
        %v791 = vmul.f32 %v470, %v567
        %v792 = vmul.f32 %v475, %v539
        %v793 = vmul.f32 %v475, %v543
        %v794 = vmul.f32 %v475, %v547
        %v795 = vmul.f32 %v475, %v551
        %v796 = vmul.f32 %v475, %v555
        %v797 = vmul.f32 %v475, %v559
        %v798 = vmul.f32 %v475, %v563
        %v799 = vmul.f32 %v475, %v567
        %v800 = vmul.f32 %v480, %v539
        %v801 = vmul.f32 %v480, %v543
        %v802 = vmul.f32 %v480, %v547
        %v803 = vmul.f32 %v480, %v551
        %v804 = vmul.f32 %v480, %v555
        %v805 = vmul.f32 %v480, %v559
        %v806 = vmul.f32 %v480, %v563
        %v807 = vmul.f32 %v480, %v567
        %v808 = vmul.f32 %v485, %v539
        %v809 = vmul.f32 %v485, %v543
        %v810 = vmul.f32 %v485, %v547
        %v811 = vmul.f32 %v485, %v551
        %v812 = vmul.f32 %v485, %v555
        %v813 = vmul.f32 %v485, %v559
        %v814 = vmul.f32 %v485, %v563
        %v815 = vmul.f32 %v485, %v567
        %v816 = vmul.f32 %v490, %v539
        %v817 = vmul.f32 %v490, %v543
        %v818 = vmul.f32 %v490, %v547
        %v819 = vmul.f32 %v490, %v551
        %v820 = vmul.f32 %v490, %v555
        %v821 = vmul.f32 %v490, %v559
        %v822 = vmul.f32 %v490, %v563
        %v823 = vmul.f32 %v490, %v567
        %824 = vset.pattern.permute.xlu0 1
        %825 = vperm.xlu0 %824, %v296
        %v826 = vpop.permute.xlu0 %825
        %828 = vset.pattern.permute.xlu0 1
        %829 = vperm.xlu0 %828, %v297
        %v830 = vpop.permute.xlu0 %829
        %832 = vset.pattern.permute.xlu0 1
        %833 = vperm.xlu0 %832, %v298
        %v834 = vpop.permute.xlu0 %833
        %836 = vset.pattern.permute.xlu0 1
        %837 = vperm.xlu0 %836, %v299
        %v838 = vpop.permute.xlu0 %837
        %840 = vset.pattern.permute.xlu0 1
        %841 = vperm.xlu0 %840, %v300
        %v842 = vpop.permute.xlu0 %841
        %844 = vset.pattern.permute.xlu0 1
        %845 = vperm.xlu0 %844, %v301
        %v846 = vpop.permute.xlu0 %845
        %848 = vset.pattern.permute.xlu0 1
        %849 = vperm.xlu0 %848, %v302
        %v850 = vpop.permute.xlu0 %849
        %852 = vset.pattern.permute.xlu0 1
        %853 = vperm.xlu0 %852, %v303
        %v854 = vpop.permute.xlu0 %853
        %856 = vset.pattern.permute.xlu0 1
        %857 = vperm.xlu0 %856, %v304
        %v858 = vpop.permute.xlu0 %857
        %860 = vset.pattern.permute.xlu0 1
        %861 = vperm.xlu0 %860, %v305
        %v862 = vpop.permute.xlu0 %861
        %864 = vset.pattern.permute.xlu0 1
        %865 = vperm.xlu0 %864, %v306
        %v866 = vpop.permute.xlu0 %865
        %868 = vset.pattern.permute.xlu0 1
        %869 = vperm.xlu0 %868, %v307
        %v870 = vpop.permute.xlu0 %869
        %872 = vset.pattern.permute.xlu0 1
        %873 = vperm.xlu0 %872, %v308
        %v874 = vpop.permute.xlu0 %873
        %876 = vset.pattern.permute.xlu0 1
        %877 = vperm.xlu0 %876, %v309
        %v878 = vpop.permute.xlu0 %877
        %880 = vset.pattern.permute.xlu0 1
        %881 = vperm.xlu0 %880, %v310
        %v882 = vpop.permute.xlu0 %881
        %884 = vset.pattern.permute.xlu0 1
        %885 = vperm.xlu0 %884, %v311
        %v886 = vpop.permute.xlu0 %885
        %888 = vset.pattern.permute.xlu0 1
        %889 = vperm.xlu0 %888, %v312
        %v890 = vpop.permute.xlu0 %889
        %892 = vset.pattern.permute.xlu0 1
        %893 = vperm.xlu0 %892, %v313
        %v894 = vpop.permute.xlu0 %893
        %896 = vset.pattern.permute.xlu0 1
        %897 = vperm.xlu0 %896, %v314
        %v898 = vpop.permute.xlu0 %897
        %900 = vset.pattern.permute.xlu0 1
        %901 = vperm.xlu0 %900, %v315
        %v902 = vpop.permute.xlu0 %901
        %904 = vset.pattern.permute.xlu0 1
        %905 = vperm.xlu0 %904, %v316
        %v906 = vpop.permute.xlu0 %905
        %908 = vset.pattern.permute.xlu0 1
        %909 = vperm.xlu0 %908, %v317
        %v910 = vpop.permute.xlu0 %909
        %912 = vset.pattern.permute.xlu0 1
        %913 = vperm.xlu0 %912, %v318
        %v914 = vpop.permute.xlu0 %913
        %916 = vset.pattern.permute.xlu0 1
        %917 = vperm.xlu0 %916, %v319
        %v918 = vpop.permute.xlu0 %917
        %920 = vset.pattern.permute.xlu0 1
        %921 = vperm.xlu0 %920, %v320
        %v922 = vpop.permute.xlu0 %921
        %924 = vset.pattern.permute.xlu0 1
        %925 = vperm.xlu0 %924, %v321
        %v926 = vpop.permute.xlu0 %925
        %928 = vset.pattern.permute.xlu0 1
        %929 = vperm.xlu0 %928, %v322
        %v930 = vpop.permute.xlu0 %929
        %932 = vset.pattern.permute.xlu0 1
        %933 = vperm.xlu0 %932, %v323
        %v934 = vpop.permute.xlu0 %933
        %936 = vset.pattern.permute.xlu0 1
        %937 = vperm.xlu0 %936, %v324
        %v938 = vpop.permute.xlu0 %937
        %940 = vset.pattern.permute.xlu0 1
        %941 = vperm.xlu0 %940, %v325
        %v942 = vpop.permute.xlu0 %941
        %944 = vset.pattern.permute.xlu0 1
        %945 = vperm.xlu0 %944, %v326
        %v946 = vpop.permute.xlu0 %945
        %948 = vset.pattern.permute.xlu0 1
        %949 = vperm.xlu0 %948, %v327
        %v950 = vpop.permute.xlu0 %949
        %v952 = vlaneseq
        %v953 = vshrl.u32 %v952, 7
        %v954 = vsub.s32 1, %v953
        %v955 = vrot.slane %v328, %v954
        %v956 = vlaneseq
        %v957 = vshrl.u32 %v956, 7
        %v958 = vsub.s32 5, %v957
        %v959 = vrot.slane %v328, %v958
        %v960 = vlaneseq
        %v961 = vshrl.u32 %v960, 7
        %v962 = vsub.s32 1, %v961
        %v963 = vrot.slane %v329, %v962
        %v964 = vlaneseq
        %v965 = vshrl.u32 %v964, 7
        %v966 = vsub.s32 5, %v965
        %v967 = vrot.slane %v329, %v966
        %v968 = vlaneseq
        %v969 = vshrl.u32 %v968, 7
        %v970 = vsub.s32 1, %v969
        %v971 = vrot.slane %v330, %v970
        %v972 = vlaneseq
        %v973 = vshrl.u32 %v972, 7
        %v974 = vsub.s32 5, %v973
        %v975 = vrot.slane %v330, %v974
        %v976 = vlaneseq
        %v977 = vshrl.u32 %v976, 7
        %v978 = vsub.s32 1, %v977
        %v979 = vrot.slane %v331, %v978
        %v980 = vlaneseq
        %v981 = vshrl.u32 %v980, 7
        %v982 = vsub.s32 5, %v981
        %v983 = vrot.slane %v331, %v982
        %v992 = vlaneseq
        %v993 = vshrl.u32 %v992, 7
        %v994 = vsub.s32 1, %v993
        %v995 = vrot.slane %v955, %v994
        %v996 = vlaneseq
        %v997 = vshrl.u32 %v996, 7
        %v998 = vsub.s32 1, %v997
        %v999 = vrot.slane %v959, %v998
        %v1000 = vlaneseq
        %v1001 = vshrl.u32 %v1000, 7
        %v1002 = vsub.s32 1, %v1001
        %v1003 = vrot.slane %v963, %v1002
        %v1004 = vlaneseq
        %v1005 = vshrl.u32 %v1004, 7
        %v1006 = vsub.s32 1, %v1005
        %v1007 = vrot.slane %v967, %v1006
        %v1008 = vlaneseq
        %v1009 = vshrl.u32 %v1008, 7
        %v1010 = vsub.s32 1, %v1009
        %v1011 = vrot.slane %v971, %v1010
        %v1012 = vlaneseq
        %v1013 = vshrl.u32 %v1012, 7
        %v1014 = vsub.s32 1, %v1013
        %v1015 = vrot.slane %v975, %v1014
        %v1016 = vlaneseq
        %v1017 = vshrl.u32 %v1016, 7
        %v1018 = vsub.s32 1, %v1017
        %v1019 = vrot.slane %v979, %v1018
        %v1020 = vlaneseq
        %v1021 = vshrl.u32 %v1020, 7
        %v1022 = vsub.s32 1, %v1021
        %v1023 = vrot.slane %v983, %v1022
        %v1024 = vmul.f32 %v826, %v995
        %v1025 = vmul.f32 %v826, %v999
        %v1026 = vmul.f32 %v826, %v1003
        %v1027 = vmul.f32 %v826, %v1007
        %v1028 = vmul.f32 %v826, %v1011
        %v1029 = vmul.f32 %v826, %v1015
        %v1030 = vmul.f32 %v826, %v1019
        %v1031 = vmul.f32 %v826, %v1023
        %v1032 = vmul.f32 %v830, %v995
        %v1033 = vmul.f32 %v830, %v999
        %v1034 = vmul.f32 %v830, %v1003
        %v1035 = vmul.f32 %v830, %v1007
        %v1036 = vmul.f32 %v830, %v1011
        %v1037 = vmul.f32 %v830, %v1015
        %v1038 = vmul.f32 %v830, %v1019
        %v1039 = vmul.f32 %v830, %v1023
        %v1040 = vmul.f32 %v834, %v995
        %v1041 = vmul.f32 %v834, %v999
        %v1042 = vmul.f32 %v834, %v1003
        %v1043 = vmul.f32 %v834, %v1007
        %v1044 = vmul.f32 %v834, %v1011
        %v1045 = vmul.f32 %v834, %v1015
        %v1046 = vmul.f32 %v834, %v1019
        %v1047 = vmul.f32 %v834, %v1023
        %v1048 = vmul.f32 %v838, %v995
        %v1049 = vmul.f32 %v838, %v999
        %v1050 = vmul.f32 %v838, %v1003
        %v1051 = vmul.f32 %v838, %v1007
        %v1052 = vmul.f32 %v838, %v1011
        %v1053 = vmul.f32 %v838, %v1015
        %v1054 = vmul.f32 %v838, %v1019
        %v1055 = vmul.f32 %v838, %v1023
        %v1056 = vmul.f32 %v842, %v995
        %v1057 = vmul.f32 %v842, %v999
        %v1058 = vmul.f32 %v842, %v1003
        %v1059 = vmul.f32 %v842, %v1007
        %v1060 = vmul.f32 %v842, %v1011
        %v1061 = vmul.f32 %v842, %v1015
        %v1062 = vmul.f32 %v842, %v1019
        %v1063 = vmul.f32 %v842, %v1023
        %v1064 = vmul.f32 %v846, %v995
        %v1065 = vmul.f32 %v846, %v999
        %v1066 = vmul.f32 %v846, %v1003
        %v1067 = vmul.f32 %v846, %v1007
        %v1068 = vmul.f32 %v846, %v1011
        %v1069 = vmul.f32 %v846, %v1015
        %v1070 = vmul.f32 %v846, %v1019
        %v1071 = vmul.f32 %v846, %v1023
        %v1072 = vmul.f32 %v850, %v995
        %v1073 = vmul.f32 %v850, %v999
        %v1074 = vmul.f32 %v850, %v1003
        %v1075 = vmul.f32 %v850, %v1007
        %v1076 = vmul.f32 %v850, %v1011
        %v1077 = vmul.f32 %v850, %v1015
        %v1078 = vmul.f32 %v850, %v1019
        %v1079 = vmul.f32 %v850, %v1023
        %v1080 = vmul.f32 %v854, %v995
        %v1081 = vmul.f32 %v854, %v999
        %v1082 = vmul.f32 %v854, %v1003
        %v1083 = vmul.f32 %v854, %v1007
        %v1084 = vmul.f32 %v854, %v1011
        %v1085 = vmul.f32 %v854, %v1015
        %v1086 = vmul.f32 %v854, %v1019
        %v1087 = vmul.f32 %v854, %v1023
        %v1088 = vmul.f32 %v858, %v995
        %v1089 = vmul.f32 %v858, %v999
        %v1090 = vmul.f32 %v858, %v1003
        %v1091 = vmul.f32 %v858, %v1007
        %v1092 = vmul.f32 %v858, %v1011
        %v1093 = vmul.f32 %v858, %v1015
        %v1094 = vmul.f32 %v858, %v1019
        %v1095 = vmul.f32 %v858, %v1023
        %v1096 = vmul.f32 %v862, %v995
        %v1097 = vmul.f32 %v862, %v999
        %v1098 = vmul.f32 %v862, %v1003
        %v1099 = vmul.f32 %v862, %v1007
        %v1100 = vmul.f32 %v862, %v1011
        %v1101 = vmul.f32 %v862, %v1015
        %v1102 = vmul.f32 %v862, %v1019
        %v1103 = vmul.f32 %v862, %v1023
        %v1104 = vmul.f32 %v866, %v995
        %v1105 = vmul.f32 %v866, %v999
        %v1106 = vmul.f32 %v866, %v1003
        %v1107 = vmul.f32 %v866, %v1007
        %v1108 = vmul.f32 %v866, %v1011
        %v1109 = vmul.f32 %v866, %v1015
        %v1110 = vmul.f32 %v866, %v1019
        %v1111 = vmul.f32 %v866, %v1023
        %v1112 = vmul.f32 %v870, %v995
        %v1113 = vmul.f32 %v870, %v999
        %v1114 = vmul.f32 %v870, %v1003
        %v1115 = vmul.f32 %v870, %v1007
        %v1116 = vmul.f32 %v870, %v1011
        %v1117 = vmul.f32 %v870, %v1015
        %v1118 = vmul.f32 %v870, %v1019
        %v1119 = vmul.f32 %v870, %v1023
        %v1120 = vmul.f32 %v874, %v995
        %v1121 = vmul.f32 %v874, %v999
        %v1122 = vmul.f32 %v874, %v1003
        %v1123 = vmul.f32 %v874, %v1007
        %v1124 = vmul.f32 %v874, %v1011
        %v1125 = vmul.f32 %v874, %v1015
        %v1126 = vmul.f32 %v874, %v1019
        %v1127 = vmul.f32 %v874, %v1023
        %v1128 = vmul.f32 %v878, %v995
        %v1129 = vmul.f32 %v878, %v999
        %v1130 = vmul.f32 %v878, %v1003
        %v1131 = vmul.f32 %v878, %v1007
        %v1132 = vmul.f32 %v878, %v1011
        %v1133 = vmul.f32 %v878, %v1015
        %v1134 = vmul.f32 %v878, %v1019
        %v1135 = vmul.f32 %v878, %v1023
        %v1136 = vmul.f32 %v882, %v995
        %v1137 = vmul.f32 %v882, %v999
        %v1138 = vmul.f32 %v882, %v1003
        %v1139 = vmul.f32 %v882, %v1007
        %v1140 = vmul.f32 %v882, %v1011
        %v1141 = vmul.f32 %v882, %v1015
        %v1142 = vmul.f32 %v882, %v1019
        %v1143 = vmul.f32 %v882, %v1023
        %v1144 = vmul.f32 %v886, %v995
        %v1145 = vmul.f32 %v886, %v999
        %v1146 = vmul.f32 %v886, %v1003
        %v1147 = vmul.f32 %v886, %v1007
        %v1148 = vmul.f32 %v886, %v1011
        %v1149 = vmul.f32 %v886, %v1015
        %v1150 = vmul.f32 %v886, %v1019
        %v1151 = vmul.f32 %v886, %v1023
        %v1152 = vmul.f32 %v890, %v995
        %v1153 = vmul.f32 %v890, %v999
        %v1154 = vmul.f32 %v890, %v1003
        %v1155 = vmul.f32 %v890, %v1007
        %v1156 = vmul.f32 %v890, %v1011
        %v1157 = vmul.f32 %v890, %v1015
        %v1158 = vmul.f32 %v890, %v1019
        %v1159 = vmul.f32 %v890, %v1023
        %v1160 = vmul.f32 %v894, %v995
        %v1161 = vmul.f32 %v894, %v999
        %v1162 = vmul.f32 %v894, %v1003
        %v1163 = vmul.f32 %v894, %v1007
        %v1164 = vmul.f32 %v894, %v1011
        %v1165 = vmul.f32 %v894, %v1015
        %v1166 = vmul.f32 %v894, %v1019
        %v1167 = vmul.f32 %v894, %v1023
        %v1168 = vmul.f32 %v898, %v995
        %v1169 = vmul.f32 %v898, %v999
        %v1170 = vmul.f32 %v898, %v1003
        %v1171 = vmul.f32 %v898, %v1007
        %v1172 = vmul.f32 %v898, %v1011
        %v1173 = vmul.f32 %v898, %v1015
        %v1174 = vmul.f32 %v898, %v1019
        %v1175 = vmul.f32 %v898, %v1023
        %v1176 = vmul.f32 %v902, %v995
        %v1177 = vmul.f32 %v902, %v999
        %v1178 = vmul.f32 %v902, %v1003
        %v1179 = vmul.f32 %v902, %v1007
        %v1180 = vmul.f32 %v902, %v1011
        %v1181 = vmul.f32 %v902, %v1015
        %v1182 = vmul.f32 %v902, %v1019
        %v1183 = vmul.f32 %v902, %v1023
        %v1184 = vmul.f32 %v906, %v995
        %v1185 = vmul.f32 %v906, %v999
        %v1186 = vmul.f32 %v906, %v1003
        %v1187 = vmul.f32 %v906, %v1007
        %v1188 = vmul.f32 %v906, %v1011
        %v1189 = vmul.f32 %v906, %v1015
        %v1190 = vmul.f32 %v906, %v1019
        %v1191 = vmul.f32 %v906, %v1023
        %v1192 = vmul.f32 %v910, %v995
        %v1193 = vmul.f32 %v910, %v999
        %v1194 = vmul.f32 %v910, %v1003
        %v1195 = vmul.f32 %v910, %v1007
        %v1196 = vmul.f32 %v910, %v1011
        %v1197 = vmul.f32 %v910, %v1015
        %v1198 = vmul.f32 %v910, %v1019
        %v1199 = vmul.f32 %v910, %v1023
        %v1200 = vmul.f32 %v914, %v995
        %v1201 = vmul.f32 %v914, %v999
        %v1202 = vmul.f32 %v914, %v1003
        %v1203 = vmul.f32 %v914, %v1007
        %v1204 = vmul.f32 %v914, %v1011
        %v1205 = vmul.f32 %v914, %v1015
        %v1206 = vmul.f32 %v914, %v1019
        %v1207 = vmul.f32 %v914, %v1023
        %v1208 = vmul.f32 %v918, %v995
        %v1209 = vmul.f32 %v918, %v999
        %v1210 = vmul.f32 %v918, %v1003
        %v1211 = vmul.f32 %v918, %v1007
        %v1212 = vmul.f32 %v918, %v1011
        %v1213 = vmul.f32 %v918, %v1015
        %v1214 = vmul.f32 %v918, %v1019
        %v1215 = vmul.f32 %v918, %v1023
        %v1216 = vmul.f32 %v922, %v995
        %v1217 = vmul.f32 %v922, %v999
        %v1218 = vmul.f32 %v922, %v1003
        %v1219 = vmul.f32 %v922, %v1007
        %v1220 = vmul.f32 %v922, %v1011
        %v1221 = vmul.f32 %v922, %v1015
        %v1222 = vmul.f32 %v922, %v1019
        %v1223 = vmul.f32 %v922, %v1023
        %v1224 = vmul.f32 %v926, %v995
        %v1225 = vmul.f32 %v926, %v999
        %v1226 = vmul.f32 %v926, %v1003
        %v1227 = vmul.f32 %v926, %v1007
        %v1228 = vmul.f32 %v926, %v1011
        %v1229 = vmul.f32 %v926, %v1015
        %v1230 = vmul.f32 %v926, %v1019
        %v1231 = vmul.f32 %v926, %v1023
        %v1232 = vmul.f32 %v930, %v995
        %v1233 = vmul.f32 %v930, %v999
        %v1234 = vmul.f32 %v930, %v1003
        %v1235 = vmul.f32 %v930, %v1007
        %v1236 = vmul.f32 %v930, %v1011
        %v1237 = vmul.f32 %v930, %v1015
        %v1238 = vmul.f32 %v930, %v1019
        %v1239 = vmul.f32 %v930, %v1023
        %v1240 = vmul.f32 %v934, %v995
        %v1241 = vmul.f32 %v934, %v999
        %v1242 = vmul.f32 %v934, %v1003
        %v1243 = vmul.f32 %v934, %v1007
        %v1244 = vmul.f32 %v934, %v1011
        %v1245 = vmul.f32 %v934, %v1015
        %v1246 = vmul.f32 %v934, %v1019
        %v1247 = vmul.f32 %v934, %v1023
        %v1248 = vmul.f32 %v938, %v995
        %v1249 = vmul.f32 %v938, %v999
        %v1250 = vmul.f32 %v938, %v1003
        %v1251 = vmul.f32 %v938, %v1007
        %v1252 = vmul.f32 %v938, %v1011
        %v1253 = vmul.f32 %v938, %v1015
        %v1254 = vmul.f32 %v938, %v1019
        %v1255 = vmul.f32 %v938, %v1023
        %v1256 = vmul.f32 %v942, %v995
        %v1257 = vmul.f32 %v942, %v999
        %v1258 = vmul.f32 %v942, %v1003
        %v1259 = vmul.f32 %v942, %v1007
        %v1260 = vmul.f32 %v942, %v1011
        %v1261 = vmul.f32 %v942, %v1015
        %v1262 = vmul.f32 %v942, %v1019
        %v1263 = vmul.f32 %v942, %v1023
        %v1264 = vmul.f32 %v946, %v995
        %v1265 = vmul.f32 %v946, %v999
        %v1266 = vmul.f32 %v946, %v1003
        %v1267 = vmul.f32 %v946, %v1007
        %v1268 = vmul.f32 %v946, %v1011
        %v1269 = vmul.f32 %v946, %v1015
        %v1270 = vmul.f32 %v946, %v1019
        %v1271 = vmul.f32 %v946, %v1023
        %v1272 = vmul.f32 %v950, %v995
        %v1273 = vmul.f32 %v950, %v999
        %v1274 = vmul.f32 %v950, %v1003
        %v1275 = vmul.f32 %v950, %v1007
        %v1276 = vmul.f32 %v950, %v1011
        %v1277 = vmul.f32 %v950, %v1015
        %v1278 = vmul.f32 %v950, %v1019
        %v1279 = vmul.f32 %v950, %v1023
        %v1280 = vadd.f32 %v568, %v1024
        %v1281 = vadd.f32 %v569, %v1025
        %v1282 = vadd.f32 %v570, %v1026
        %v1283 = vadd.f32 %v571, %v1027
        %v1284 = vadd.f32 %v572, %v1028
        %v1285 = vadd.f32 %v573, %v1029
        %v1286 = vadd.f32 %v574, %v1030
        %v1287 = vadd.f32 %v575, %v1031
        %v1288 = vadd.f32 %v576, %v1032
        %v1289 = vadd.f32 %v577, %v1033
        %v1290 = vadd.f32 %v578, %v1034
        %v1291 = vadd.f32 %v579, %v1035
        %v1292 = vadd.f32 %v580, %v1036
        %v1293 = vadd.f32 %v581, %v1037
        %v1294 = vadd.f32 %v582, %v1038
        %v1295 = vadd.f32 %v583, %v1039
        %v1296 = vadd.f32 %v584, %v1040
        %v1297 = vadd.f32 %v585, %v1041
        %v1298 = vadd.f32 %v586, %v1042
        %v1299 = vadd.f32 %v587, %v1043
        %v1300 = vadd.f32 %v588, %v1044
        %v1301 = vadd.f32 %v589, %v1045
        %v1302 = vadd.f32 %v590, %v1046
        %v1303 = vadd.f32 %v591, %v1047
        %v1304 = vadd.f32 %v592, %v1048
        %v1305 = vadd.f32 %v593, %v1049
        %v1306 = vadd.f32 %v594, %v1050
        %v1307 = vadd.f32 %v595, %v1051
        %v1308 = vadd.f32 %v596, %v1052
        %v1309 = vadd.f32 %v597, %v1053
        %v1310 = vadd.f32 %v598, %v1054
        %v1311 = vadd.f32 %v599, %v1055
        %v1312 = vadd.f32 %v600, %v1056
        %v1313 = vadd.f32 %v601, %v1057
        %v1314 = vadd.f32 %v602, %v1058
        %v1315 = vadd.f32 %v603, %v1059
        %v1316 = vadd.f32 %v604, %v1060
        %v1317 = vadd.f32 %v605, %v1061
        %v1318 = vadd.f32 %v606, %v1062
        %v1319 = vadd.f32 %v607, %v1063
        %v1320 = vadd.f32 %v608, %v1064
        %v1321 = vadd.f32 %v609, %v1065
        %v1322 = vadd.f32 %v610, %v1066
        %v1323 = vadd.f32 %v611, %v1067
        %v1324 = vadd.f32 %v612, %v1068
        %v1325 = vadd.f32 %v613, %v1069
        %v1326 = vadd.f32 %v614, %v1070
        %v1327 = vadd.f32 %v615, %v1071
        %v1328 = vadd.f32 %v616, %v1072
        %v1329 = vadd.f32 %v617, %v1073
        %v1330 = vadd.f32 %v618, %v1074
        %v1331 = vadd.f32 %v619, %v1075
        %v1332 = vadd.f32 %v620, %v1076
        %v1333 = vadd.f32 %v621, %v1077
        %v1334 = vadd.f32 %v622, %v1078
        %v1335 = vadd.f32 %v623, %v1079
        %v1336 = vadd.f32 %v624, %v1080
        %v1337 = vadd.f32 %v625, %v1081
        %v1338 = vadd.f32 %v626, %v1082
        %v1339 = vadd.f32 %v627, %v1083
        %v1340 = vadd.f32 %v628, %v1084
        %v1341 = vadd.f32 %v629, %v1085
        %v1342 = vadd.f32 %v630, %v1086
        %v1343 = vadd.f32 %v631, %v1087
        %v1344 = vadd.f32 %v632, %v1088
        %v1345 = vadd.f32 %v633, %v1089
        %v1346 = vadd.f32 %v634, %v1090
        %v1347 = vadd.f32 %v635, %v1091
        %v1348 = vadd.f32 %v636, %v1092
        %v1349 = vadd.f32 %v637, %v1093
        %v1350 = vadd.f32 %v638, %v1094
        %v1351 = vadd.f32 %v639, %v1095
        %v1352 = vadd.f32 %v640, %v1096
        %v1353 = vadd.f32 %v641, %v1097
        %v1354 = vadd.f32 %v642, %v1098
        %v1355 = vadd.f32 %v643, %v1099
        %v1356 = vadd.f32 %v644, %v1100
        %v1357 = vadd.f32 %v645, %v1101
        %v1358 = vadd.f32 %v646, %v1102
        %v1359 = vadd.f32 %v647, %v1103
        %v1360 = vadd.f32 %v648, %v1104
        %v1361 = vadd.f32 %v649, %v1105
        %v1362 = vadd.f32 %v650, %v1106
        %v1363 = vadd.f32 %v651, %v1107
        %v1364 = vadd.f32 %v652, %v1108
        %v1365 = vadd.f32 %v653, %v1109
        %v1366 = vadd.f32 %v654, %v1110
        %v1367 = vadd.f32 %v655, %v1111
        %v1368 = vadd.f32 %v656, %v1112
        %v1369 = vadd.f32 %v657, %v1113
        %v1370 = vadd.f32 %v658, %v1114
        %v1371 = vadd.f32 %v659, %v1115
        %v1372 = vadd.f32 %v660, %v1116
        %v1373 = vadd.f32 %v661, %v1117
        %v1374 = vadd.f32 %v662, %v1118
        %v1375 = vadd.f32 %v663, %v1119
        %v1376 = vadd.f32 %v664, %v1120
        %v1377 = vadd.f32 %v665, %v1121
        %v1378 = vadd.f32 %v666, %v1122
        %v1379 = vadd.f32 %v667, %v1123
        %v1380 = vadd.f32 %v668, %v1124
        %v1381 = vadd.f32 %v669, %v1125
        %v1382 = vadd.f32 %v670, %v1126
        %v1383 = vadd.f32 %v671, %v1127
        %v1384 = vadd.f32 %v672, %v1128
        %v1385 = vadd.f32 %v673, %v1129
        %v1386 = vadd.f32 %v674, %v1130
        %v1387 = vadd.f32 %v675, %v1131
        %v1388 = vadd.f32 %v676, %v1132
        %v1389 = vadd.f32 %v677, %v1133
        %v1390 = vadd.f32 %v678, %v1134
        %v1391 = vadd.f32 %v679, %v1135
        %v1392 = vadd.f32 %v680, %v1136
        %v1393 = vadd.f32 %v681, %v1137
        %v1394 = vadd.f32 %v682, %v1138
        %v1395 = vadd.f32 %v683, %v1139
        %v1396 = vadd.f32 %v684, %v1140
        %v1397 = vadd.f32 %v685, %v1141
        %v1398 = vadd.f32 %v686, %v1142
        %v1399 = vadd.f32 %v687, %v1143
        %v1400 = vadd.f32 %v688, %v1144
        %v1401 = vadd.f32 %v689, %v1145
        %v1402 = vadd.f32 %v690, %v1146
        %v1403 = vadd.f32 %v691, %v1147
        %v1404 = vadd.f32 %v692, %v1148
        %v1405 = vadd.f32 %v693, %v1149
        %v1406 = vadd.f32 %v694, %v1150
        %v1407 = vadd.f32 %v695, %v1151
        %v1408 = vadd.f32 %v696, %v1152
        %v1409 = vadd.f32 %v697, %v1153
        %v1410 = vadd.f32 %v698, %v1154
        %v1411 = vadd.f32 %v699, %v1155
        %v1412 = vadd.f32 %v700, %v1156
        %v1413 = vadd.f32 %v701, %v1157
        %v1414 = vadd.f32 %v702, %v1158
        %v1415 = vadd.f32 %v703, %v1159
        %v1416 = vadd.f32 %v704, %v1160
        %v1417 = vadd.f32 %v705, %v1161
        %v1418 = vadd.f32 %v706, %v1162
        %v1419 = vadd.f32 %v707, %v1163
        %v1420 = vadd.f32 %v708, %v1164
        %v1421 = vadd.f32 %v709, %v1165
        %v1422 = vadd.f32 %v710, %v1166
        %v1423 = vadd.f32 %v711, %v1167
        %v1424 = vadd.f32 %v712, %v1168
        %v1425 = vadd.f32 %v713, %v1169
        %v1426 = vadd.f32 %v714, %v1170
        %v1427 = vadd.f32 %v715, %v1171
        %v1428 = vadd.f32 %v716, %v1172
        %v1429 = vadd.f32 %v717, %v1173
        %v1430 = vadd.f32 %v718, %v1174
        %v1431 = vadd.f32 %v719, %v1175
        %v1432 = vadd.f32 %v720, %v1176
        %v1433 = vadd.f32 %v721, %v1177
        %v1434 = vadd.f32 %v722, %v1178
        %v1435 = vadd.f32 %v723, %v1179
        %v1436 = vadd.f32 %v724, %v1180
        %v1437 = vadd.f32 %v725, %v1181
        %v1438 = vadd.f32 %v726, %v1182
        %v1439 = vadd.f32 %v727, %v1183
        %v1440 = vadd.f32 %v728, %v1184
        %v1441 = vadd.f32 %v729, %v1185
        %v1442 = vadd.f32 %v730, %v1186
        %v1443 = vadd.f32 %v731, %v1187
        %v1444 = vadd.f32 %v732, %v1188
        %v1445 = vadd.f32 %v733, %v1189
        %v1446 = vadd.f32 %v734, %v1190
        %v1447 = vadd.f32 %v735, %v1191
        %v1448 = vadd.f32 %v736, %v1192
        %v1449 = vadd.f32 %v737, %v1193
        %v1450 = vadd.f32 %v738, %v1194
        %v1451 = vadd.f32 %v739, %v1195
        %v1452 = vadd.f32 %v740, %v1196
        %v1453 = vadd.f32 %v741, %v1197
        %v1454 = vadd.f32 %v742, %v1198
        %v1455 = vadd.f32 %v743, %v1199
        %v1456 = vadd.f32 %v744, %v1200
        %v1457 = vadd.f32 %v745, %v1201
        %v1458 = vadd.f32 %v746, %v1202
        %v1459 = vadd.f32 %v747, %v1203
        %v1460 = vadd.f32 %v748, %v1204
        %v1461 = vadd.f32 %v749, %v1205
        %v1462 = vadd.f32 %v750, %v1206
        %v1463 = vadd.f32 %v751, %v1207
        %v1464 = vadd.f32 %v752, %v1208
        %v1465 = vadd.f32 %v753, %v1209
        %v1466 = vadd.f32 %v754, %v1210
        %v1467 = vadd.f32 %v755, %v1211
        %v1468 = vadd.f32 %v756, %v1212
        %v1469 = vadd.f32 %v757, %v1213
        %v1470 = vadd.f32 %v758, %v1214
        %v1471 = vadd.f32 %v759, %v1215
        %v1472 = vadd.f32 %v760, %v1216
        %v1473 = vadd.f32 %v761, %v1217
        %v1474 = vadd.f32 %v762, %v1218
        %v1475 = vadd.f32 %v763, %v1219
        %v1476 = vadd.f32 %v764, %v1220
        %v1477 = vadd.f32 %v765, %v1221
        %v1478 = vadd.f32 %v766, %v1222
        %v1479 = vadd.f32 %v767, %v1223
        %v1480 = vadd.f32 %v768, %v1224
        %v1481 = vadd.f32 %v769, %v1225
        %v1482 = vadd.f32 %v770, %v1226
        %v1483 = vadd.f32 %v771, %v1227
        %v1484 = vadd.f32 %v772, %v1228
        %v1485 = vadd.f32 %v773, %v1229
        %v1486 = vadd.f32 %v774, %v1230
        %v1487 = vadd.f32 %v775, %v1231
        %v1488 = vadd.f32 %v776, %v1232
        %v1489 = vadd.f32 %v777, %v1233
        %v1490 = vadd.f32 %v778, %v1234
        %v1491 = vadd.f32 %v779, %v1235
        %v1492 = vadd.f32 %v780, %v1236
        %v1493 = vadd.f32 %v781, %v1237
        %v1494 = vadd.f32 %v782, %v1238
        %v1495 = vadd.f32 %v783, %v1239
        %v1496 = vadd.f32 %v784, %v1240
        %v1497 = vadd.f32 %v785, %v1241
        %v1498 = vadd.f32 %v786, %v1242
        %v1499 = vadd.f32 %v787, %v1243
        %v1500 = vadd.f32 %v788, %v1244
        %v1501 = vadd.f32 %v789, %v1245
        %v1502 = vadd.f32 %v790, %v1246
        %v1503 = vadd.f32 %v791, %v1247
        %v1504 = vadd.f32 %v792, %v1248
        %v1505 = vadd.f32 %v793, %v1249
        %v1506 = vadd.f32 %v794, %v1250
        %v1507 = vadd.f32 %v795, %v1251
        %v1508 = vadd.f32 %v796, %v1252
        %v1509 = vadd.f32 %v797, %v1253
        %v1510 = vadd.f32 %v798, %v1254
        %v1511 = vadd.f32 %v799, %v1255
        %v1512 = vadd.f32 %v800, %v1256
        %v1513 = vadd.f32 %v801, %v1257
        %v1514 = vadd.f32 %v802, %v1258
        %v1515 = vadd.f32 %v803, %v1259
        %v1516 = vadd.f32 %v804, %v1260
        %v1517 = vadd.f32 %v805, %v1261
        %v1518 = vadd.f32 %v806, %v1262
        %v1519 = vadd.f32 %v807, %v1263
        %v1520 = vadd.f32 %v808, %v1264
        %v1521 = vadd.f32 %v809, %v1265
        %v1522 = vadd.f32 %v810, %v1266
        %v1523 = vadd.f32 %v811, %v1267
        %v1524 = vadd.f32 %v812, %v1268
        %v1525 = vadd.f32 %v813, %v1269
        %v1526 = vadd.f32 %v814, %v1270
        %v1527 = vadd.f32 %v815, %v1271
        %v1528 = vadd.f32 %v816, %v1272
        %v1529 = vadd.f32 %v817, %v1273
        %v1530 = vadd.f32 %v818, %v1274
        %v1531 = vadd.f32 %v819, %v1275
        %v1532 = vadd.f32 %v820, %v1276
        %v1533 = vadd.f32 %v821, %v1277
        %v1534 = vadd.f32 %v822, %v1278
        %v1535 = vadd.f32 %v823, %v1279
        %1536 = vset.pattern.permute.xlu0 2
        %1537 = vperm.xlu0 %1536, %v296
        %v1538 = vpop.permute.xlu0 %1537
        %1540 = vset.pattern.permute.xlu0 2
        %1541 = vperm.xlu0 %1540, %v297
        %v1542 = vpop.permute.xlu0 %1541
        %1544 = vset.pattern.permute.xlu0 2
        %1545 = vperm.xlu0 %1544, %v298
        %v1546 = vpop.permute.xlu0 %1545
        %1548 = vset.pattern.permute.xlu0 2
        %1549 = vperm.xlu0 %1548, %v299
        %v1550 = vpop.permute.xlu0 %1549
        %1552 = vset.pattern.permute.xlu0 2
        %1553 = vperm.xlu0 %1552, %v300
        %v1554 = vpop.permute.xlu0 %1553
        %1556 = vset.pattern.permute.xlu0 2
        %1557 = vperm.xlu0 %1556, %v301
        %v1558 = vpop.permute.xlu0 %1557
        %1560 = vset.pattern.permute.xlu0 2
        %1561 = vperm.xlu0 %1560, %v302
        %v1562 = vpop.permute.xlu0 %1561
        %1564 = vset.pattern.permute.xlu0 2
        %1565 = vperm.xlu0 %1564, %v303
        %v1566 = vpop.permute.xlu0 %1565
        %1568 = vset.pattern.permute.xlu0 2
        %1569 = vperm.xlu0 %1568, %v304
        %v1570 = vpop.permute.xlu0 %1569
        %1572 = vset.pattern.permute.xlu0 2
        %1573 = vperm.xlu0 %1572, %v305
        %v1574 = vpop.permute.xlu0 %1573
        %1576 = vset.pattern.permute.xlu0 2
        %1577 = vperm.xlu0 %1576, %v306
        %v1578 = vpop.permute.xlu0 %1577
        %1580 = vset.pattern.permute.xlu0 2
        %1581 = vperm.xlu0 %1580, %v307
        %v1582 = vpop.permute.xlu0 %1581
        %1584 = vset.pattern.permute.xlu0 2
        %1585 = vperm.xlu0 %1584, %v308
        %v1586 = vpop.permute.xlu0 %1585
        %1588 = vset.pattern.permute.xlu0 2
        %1589 = vperm.xlu0 %1588, %v309
        %v1590 = vpop.permute.xlu0 %1589
        %1592 = vset.pattern.permute.xlu0 2
        %1593 = vperm.xlu0 %1592, %v310
        %v1594 = vpop.permute.xlu0 %1593
        %1596 = vset.pattern.permute.xlu0 2
        %1597 = vperm.xlu0 %1596, %v311
        %v1598 = vpop.permute.xlu0 %1597
        %1600 = vset.pattern.permute.xlu0 2
        %1601 = vperm.xlu0 %1600, %v312
        %v1602 = vpop.permute.xlu0 %1601
        %1604 = vset.pattern.permute.xlu0 2
        %1605 = vperm.xlu0 %1604, %v313
        %v1606 = vpop.permute.xlu0 %1605
        %1608 = vset.pattern.permute.xlu0 2
        %1609 = vperm.xlu0 %1608, %v314
        %v1610 = vpop.permute.xlu0 %1609
        %1612 = vset.pattern.permute.xlu0 2
        %1613 = vperm.xlu0 %1612, %v315
        %v1614 = vpop.permute.xlu0 %1613
        %1616 = vset.pattern.permute.xlu0 2
        %1617 = vperm.xlu0 %1616, %v316
        %v1618 = vpop.permute.xlu0 %1617
        %1620 = vset.pattern.permute.xlu0 2
        %1621 = vperm.xlu0 %1620, %v317
        %v1622 = vpop.permute.xlu0 %1621
        %1624 = vset.pattern.permute.xlu0 2
        %1625 = vperm.xlu0 %1624, %v318
        %v1626 = vpop.permute.xlu0 %1625
        %1628 = vset.pattern.permute.xlu0 2
        %1629 = vperm.xlu0 %1628, %v319
        %v1630 = vpop.permute.xlu0 %1629
        %1632 = vset.pattern.permute.xlu0 2
        %1633 = vperm.xlu0 %1632, %v320
        %v1634 = vpop.permute.xlu0 %1633
        %1636 = vset.pattern.permute.xlu0 2
        %1637 = vperm.xlu0 %1636, %v321
        %v1638 = vpop.permute.xlu0 %1637
        %1640 = vset.pattern.permute.xlu0 2
        %1641 = vperm.xlu0 %1640, %v322
        %v1642 = vpop.permute.xlu0 %1641
        %1644 = vset.pattern.permute.xlu0 2
        %1645 = vperm.xlu0 %1644, %v323
        %v1646 = vpop.permute.xlu0 %1645
        %1648 = vset.pattern.permute.xlu0 2
        %1649 = vperm.xlu0 %1648, %v324
        %v1650 = vpop.permute.xlu0 %1649
        %1652 = vset.pattern.permute.xlu0 2
        %1653 = vperm.xlu0 %1652, %v325
        %v1654 = vpop.permute.xlu0 %1653
        %1656 = vset.pattern.permute.xlu0 2
        %1657 = vperm.xlu0 %1656, %v326
        %v1658 = vpop.permute.xlu0 %1657
        %1660 = vset.pattern.permute.xlu0 2
        %1661 = vperm.xlu0 %1660, %v327
        %v1662 = vpop.permute.xlu0 %1661
        %v1664 = vlaneseq
        %v1665 = vshrl.u32 %v1664, 7
        %v1666 = vsub.s32 2, %v1665
        %v1667 = vrot.slane %v328, %v1666
        %v1668 = vlaneseq
        %v1669 = vshrl.u32 %v1668, 7
        %v1670 = vsub.s32 6, %v1669
        %v1671 = vrot.slane %v328, %v1670
        %v1672 = vlaneseq
        %v1673 = vshrl.u32 %v1672, 7
        %v1674 = vsub.s32 2, %v1673
        %v1675 = vrot.slane %v329, %v1674
        %v1676 = vlaneseq
        %v1677 = vshrl.u32 %v1676, 7
        %v1678 = vsub.s32 6, %v1677
        %v1679 = vrot.slane %v329, %v1678
        %v1680 = vlaneseq
        %v1681 = vshrl.u32 %v1680, 7
        %v1682 = vsub.s32 2, %v1681
        %v1683 = vrot.slane %v330, %v1682
        %v1684 = vlaneseq
        %v1685 = vshrl.u32 %v1684, 7
        %v1686 = vsub.s32 6, %v1685
        %v1687 = vrot.slane %v330, %v1686
        %v1688 = vlaneseq
        %v1689 = vshrl.u32 %v1688, 7
        %v1690 = vsub.s32 2, %v1689
        %v1691 = vrot.slane %v331, %v1690
        %v1692 = vlaneseq
        %v1693 = vshrl.u32 %v1692, 7
        %v1694 = vsub.s32 6, %v1693
        %v1695 = vrot.slane %v331, %v1694
        %v1704 = vlaneseq
        %v1705 = vshrl.u32 %v1704, 7
        %v1706 = vsub.s32 2, %v1705
        %v1707 = vrot.slane %v1667, %v1706
        %v1708 = vlaneseq
        %v1709 = vshrl.u32 %v1708, 7
        %v1710 = vsub.s32 2, %v1709
        %v1711 = vrot.slane %v1671, %v1710
        %v1712 = vlaneseq
        %v1713 = vshrl.u32 %v1712, 7
        %v1714 = vsub.s32 2, %v1713
        %v1715 = vrot.slane %v1675, %v1714
        %v1716 = vlaneseq
        %v1717 = vshrl.u32 %v1716, 7
        %v1718 = vsub.s32 2, %v1717
        %v1719 = vrot.slane %v1679, %v1718
        %v1720 = vlaneseq
        %v1721 = vshrl.u32 %v1720, 7
        %v1722 = vsub.s32 2, %v1721
        %v1723 = vrot.slane %v1683, %v1722
        %v1724 = vlaneseq
        %v1725 = vshrl.u32 %v1724, 7
        %v1726 = vsub.s32 2, %v1725
        %v1727 = vrot.slane %v1687, %v1726
        %v1728 = vlaneseq
        %v1729 = vshrl.u32 %v1728, 7
        %v1730 = vsub.s32 2, %v1729
        %v1731 = vrot.slane %v1691, %v1730
        %v1732 = vlaneseq
        %v1733 = vshrl.u32 %v1732, 7
        %v1734 = vsub.s32 2, %v1733
        %v1735 = vrot.slane %v1695, %v1734
        %v1736 = vmul.f32 %v1538, %v1707
        %v1737 = vmul.f32 %v1538, %v1711
        %v1738 = vmul.f32 %v1538, %v1715
        %v1739 = vmul.f32 %v1538, %v1719
        %v1740 = vmul.f32 %v1538, %v1723
        %v1741 = vmul.f32 %v1538, %v1727
        %v1742 = vmul.f32 %v1538, %v1731
        %v1743 = vmul.f32 %v1538, %v1735
        %v1744 = vmul.f32 %v1542, %v1707
        %v1745 = vmul.f32 %v1542, %v1711
        %v1746 = vmul.f32 %v1542, %v1715
        %v1747 = vmul.f32 %v1542, %v1719
        %v1748 = vmul.f32 %v1542, %v1723
        %v1749 = vmul.f32 %v1542, %v1727
        %v1750 = vmul.f32 %v1542, %v1731
        %v1751 = vmul.f32 %v1542, %v1735
        %v1752 = vmul.f32 %v1546, %v1707
        %v1753 = vmul.f32 %v1546, %v1711
        %v1754 = vmul.f32 %v1546, %v1715
        %v1755 = vmul.f32 %v1546, %v1719
        %v1756 = vmul.f32 %v1546, %v1723
        %v1757 = vmul.f32 %v1546, %v1727
        %v1758 = vmul.f32 %v1546, %v1731
        %v1759 = vmul.f32 %v1546, %v1735
        %v1760 = vmul.f32 %v1550, %v1707
        %v1761 = vmul.f32 %v1550, %v1711
        %v1762 = vmul.f32 %v1550, %v1715
        %v1763 = vmul.f32 %v1550, %v1719
        %v1764 = vmul.f32 %v1550, %v1723
        %v1765 = vmul.f32 %v1550, %v1727
        %v1766 = vmul.f32 %v1550, %v1731
        %v1767 = vmul.f32 %v1550, %v1735
        %v1768 = vmul.f32 %v1554, %v1707
        %v1769 = vmul.f32 %v1554, %v1711
        %v1770 = vmul.f32 %v1554, %v1715
        %v1771 = vmul.f32 %v1554, %v1719
        %v1772 = vmul.f32 %v1554, %v1723
        %v1773 = vmul.f32 %v1554, %v1727
        %v1774 = vmul.f32 %v1554, %v1731
        %v1775 = vmul.f32 %v1554, %v1735
        %v1776 = vmul.f32 %v1558, %v1707
        %v1777 = vmul.f32 %v1558, %v1711
        %v1778 = vmul.f32 %v1558, %v1715
        %v1779 = vmul.f32 %v1558, %v1719
        %v1780 = vmul.f32 %v1558, %v1723
        %v1781 = vmul.f32 %v1558, %v1727
        %v1782 = vmul.f32 %v1558, %v1731
        %v1783 = vmul.f32 %v1558, %v1735
        %v1784 = vmul.f32 %v1562, %v1707
        %v1785 = vmul.f32 %v1562, %v1711
        %v1786 = vmul.f32 %v1562, %v1715
        %v1787 = vmul.f32 %v1562, %v1719
        %v1788 = vmul.f32 %v1562, %v1723
        %v1789 = vmul.f32 %v1562, %v1727
        %v1790 = vmul.f32 %v1562, %v1731
        %v1791 = vmul.f32 %v1562, %v1735
        %v1792 = vmul.f32 %v1566, %v1707
        %v1793 = vmul.f32 %v1566, %v1711
        %v1794 = vmul.f32 %v1566, %v1715
        %v1795 = vmul.f32 %v1566, %v1719
        %v1796 = vmul.f32 %v1566, %v1723
        %v1797 = vmul.f32 %v1566, %v1727
        %v1798 = vmul.f32 %v1566, %v1731
        %v1799 = vmul.f32 %v1566, %v1735
        %v1800 = vmul.f32 %v1570, %v1707
        %v1801 = vmul.f32 %v1570, %v1711
        %v1802 = vmul.f32 %v1570, %v1715
        %v1803 = vmul.f32 %v1570, %v1719
        %v1804 = vmul.f32 %v1570, %v1723
        %v1805 = vmul.f32 %v1570, %v1727
        %v1806 = vmul.f32 %v1570, %v1731
        %v1807 = vmul.f32 %v1570, %v1735
        %v1808 = vmul.f32 %v1574, %v1707
        %v1809 = vmul.f32 %v1574, %v1711
        %v1810 = vmul.f32 %v1574, %v1715
        %v1811 = vmul.f32 %v1574, %v1719
        %v1812 = vmul.f32 %v1574, %v1723
        %v1813 = vmul.f32 %v1574, %v1727
        %v1814 = vmul.f32 %v1574, %v1731
        %v1815 = vmul.f32 %v1574, %v1735
        %v1816 = vmul.f32 %v1578, %v1707
        %v1817 = vmul.f32 %v1578, %v1711
        %v1818 = vmul.f32 %v1578, %v1715
        %v1819 = vmul.f32 %v1578, %v1719
        %v1820 = vmul.f32 %v1578, %v1723
        %v1821 = vmul.f32 %v1578, %v1727
        %v1822 = vmul.f32 %v1578, %v1731
        %v1823 = vmul.f32 %v1578, %v1735
        %v1824 = vmul.f32 %v1582, %v1707
        %v1825 = vmul.f32 %v1582, %v1711
        %v1826 = vmul.f32 %v1582, %v1715
        %v1827 = vmul.f32 %v1582, %v1719
        %v1828 = vmul.f32 %v1582, %v1723
        %v1829 = vmul.f32 %v1582, %v1727
        %v1830 = vmul.f32 %v1582, %v1731
        %v1831 = vmul.f32 %v1582, %v1735
        %v1832 = vmul.f32 %v1586, %v1707
        %v1833 = vmul.f32 %v1586, %v1711
        %v1834 = vmul.f32 %v1586, %v1715
        %v1835 = vmul.f32 %v1586, %v1719
        %v1836 = vmul.f32 %v1586, %v1723
        %v1837 = vmul.f32 %v1586, %v1727
        %v1838 = vmul.f32 %v1586, %v1731
        %v1839 = vmul.f32 %v1586, %v1735
        %v1840 = vmul.f32 %v1590, %v1707
        %v1841 = vmul.f32 %v1590, %v1711
        %v1842 = vmul.f32 %v1590, %v1715
        %v1843 = vmul.f32 %v1590, %v1719
        %v1844 = vmul.f32 %v1590, %v1723
        %v1845 = vmul.f32 %v1590, %v1727
        %v1846 = vmul.f32 %v1590, %v1731
        %v1847 = vmul.f32 %v1590, %v1735
        %v1848 = vmul.f32 %v1594, %v1707
        %v1849 = vmul.f32 %v1594, %v1711
        %v1850 = vmul.f32 %v1594, %v1715
        %v1851 = vmul.f32 %v1594, %v1719
        %v1852 = vmul.f32 %v1594, %v1723
        %v1853 = vmul.f32 %v1594, %v1727
        %v1854 = vmul.f32 %v1594, %v1731
        %v1855 = vmul.f32 %v1594, %v1735
        %v1856 = vmul.f32 %v1598, %v1707
        %v1857 = vmul.f32 %v1598, %v1711
        %v1858 = vmul.f32 %v1598, %v1715
        %v1859 = vmul.f32 %v1598, %v1719
        %v1860 = vmul.f32 %v1598, %v1723
        %v1861 = vmul.f32 %v1598, %v1727
        %v1862 = vmul.f32 %v1598, %v1731
        %v1863 = vmul.f32 %v1598, %v1735
        %v1864 = vmul.f32 %v1602, %v1707
        %v1865 = vmul.f32 %v1602, %v1711
        %v1866 = vmul.f32 %v1602, %v1715
        %v1867 = vmul.f32 %v1602, %v1719
        %v1868 = vmul.f32 %v1602, %v1723
        %v1869 = vmul.f32 %v1602, %v1727
        %v1870 = vmul.f32 %v1602, %v1731
        %v1871 = vmul.f32 %v1602, %v1735
        %v1872 = vmul.f32 %v1606, %v1707
        %v1873 = vmul.f32 %v1606, %v1711
        %v1874 = vmul.f32 %v1606, %v1715
        %v1875 = vmul.f32 %v1606, %v1719
        %v1876 = vmul.f32 %v1606, %v1723
        %v1877 = vmul.f32 %v1606, %v1727
        %v1878 = vmul.f32 %v1606, %v1731
        %v1879 = vmul.f32 %v1606, %v1735
        %v1880 = vmul.f32 %v1610, %v1707
        %v1881 = vmul.f32 %v1610, %v1711
        %v1882 = vmul.f32 %v1610, %v1715
        %v1883 = vmul.f32 %v1610, %v1719
        %v1884 = vmul.f32 %v1610, %v1723
        %v1885 = vmul.f32 %v1610, %v1727
        %v1886 = vmul.f32 %v1610, %v1731
        %v1887 = vmul.f32 %v1610, %v1735
        %v1888 = vmul.f32 %v1614, %v1707
        %v1889 = vmul.f32 %v1614, %v1711
        %v1890 = vmul.f32 %v1614, %v1715
        %v1891 = vmul.f32 %v1614, %v1719
        %v1892 = vmul.f32 %v1614, %v1723
        %v1893 = vmul.f32 %v1614, %v1727
        %v1894 = vmul.f32 %v1614, %v1731
        %v1895 = vmul.f32 %v1614, %v1735
        %v1896 = vmul.f32 %v1618, %v1707
        %v1897 = vmul.f32 %v1618, %v1711
        %v1898 = vmul.f32 %v1618, %v1715
        %v1899 = vmul.f32 %v1618, %v1719
        %v1900 = vmul.f32 %v1618, %v1723
        %v1901 = vmul.f32 %v1618, %v1727
        %v1902 = vmul.f32 %v1618, %v1731
        %v1903 = vmul.f32 %v1618, %v1735
        %v1904 = vmul.f32 %v1622, %v1707
        %v1905 = vmul.f32 %v1622, %v1711
        %v1906 = vmul.f32 %v1622, %v1715
        %v1907 = vmul.f32 %v1622, %v1719
        %v1908 = vmul.f32 %v1622, %v1723
        %v1909 = vmul.f32 %v1622, %v1727
        %v1910 = vmul.f32 %v1622, %v1731
        %v1911 = vmul.f32 %v1622, %v1735
        %v1912 = vmul.f32 %v1626, %v1707
        %v1913 = vmul.f32 %v1626, %v1711
        %v1914 = vmul.f32 %v1626, %v1715
        %v1915 = vmul.f32 %v1626, %v1719
        %v1916 = vmul.f32 %v1626, %v1723
        %v1917 = vmul.f32 %v1626, %v1727
        %v1918 = vmul.f32 %v1626, %v1731
        %v1919 = vmul.f32 %v1626, %v1735
        %v1920 = vmul.f32 %v1630, %v1707
        %v1921 = vmul.f32 %v1630, %v1711
        %v1922 = vmul.f32 %v1630, %v1715
        %v1923 = vmul.f32 %v1630, %v1719
        %v1924 = vmul.f32 %v1630, %v1723
        %v1925 = vmul.f32 %v1630, %v1727
        %v1926 = vmul.f32 %v1630, %v1731
        %v1927 = vmul.f32 %v1630, %v1735
        %v1928 = vmul.f32 %v1634, %v1707
        %v1929 = vmul.f32 %v1634, %v1711
        %v1930 = vmul.f32 %v1634, %v1715
        %v1931 = vmul.f32 %v1634, %v1719
        %v1932 = vmul.f32 %v1634, %v1723
        %v1933 = vmul.f32 %v1634, %v1727
        %v1934 = vmul.f32 %v1634, %v1731
        %v1935 = vmul.f32 %v1634, %v1735
        %v1936 = vmul.f32 %v1638, %v1707
        %v1937 = vmul.f32 %v1638, %v1711
        %v1938 = vmul.f32 %v1638, %v1715
        %v1939 = vmul.f32 %v1638, %v1719
        %v1940 = vmul.f32 %v1638, %v1723
        %v1941 = vmul.f32 %v1638, %v1727
        %v1942 = vmul.f32 %v1638, %v1731
        %v1943 = vmul.f32 %v1638, %v1735
        %v1944 = vmul.f32 %v1642, %v1707
        %v1945 = vmul.f32 %v1642, %v1711
        %v1946 = vmul.f32 %v1642, %v1715
        %v1947 = vmul.f32 %v1642, %v1719
        %v1948 = vmul.f32 %v1642, %v1723
        %v1949 = vmul.f32 %v1642, %v1727
        %v1950 = vmul.f32 %v1642, %v1731
        %v1951 = vmul.f32 %v1642, %v1735
        %v1952 = vmul.f32 %v1646, %v1707
        %v1953 = vmul.f32 %v1646, %v1711
        %v1954 = vmul.f32 %v1646, %v1715
        %v1955 = vmul.f32 %v1646, %v1719
        %v1956 = vmul.f32 %v1646, %v1723
        %v1957 = vmul.f32 %v1646, %v1727
        %v1958 = vmul.f32 %v1646, %v1731
        %v1959 = vmul.f32 %v1646, %v1735
        %v1960 = vmul.f32 %v1650, %v1707
        %v1961 = vmul.f32 %v1650, %v1711
        %v1962 = vmul.f32 %v1650, %v1715
        %v1963 = vmul.f32 %v1650, %v1719
        %v1964 = vmul.f32 %v1650, %v1723
        %v1965 = vmul.f32 %v1650, %v1727
        %v1966 = vmul.f32 %v1650, %v1731
        %v1967 = vmul.f32 %v1650, %v1735
        %v1968 = vmul.f32 %v1654, %v1707
        %v1969 = vmul.f32 %v1654, %v1711
        %v1970 = vmul.f32 %v1654, %v1715
        %v1971 = vmul.f32 %v1654, %v1719
        %v1972 = vmul.f32 %v1654, %v1723
        %v1973 = vmul.f32 %v1654, %v1727
        %v1974 = vmul.f32 %v1654, %v1731
        %v1975 = vmul.f32 %v1654, %v1735
        %v1976 = vmul.f32 %v1658, %v1707
        %v1977 = vmul.f32 %v1658, %v1711
        %v1978 = vmul.f32 %v1658, %v1715
        %v1979 = vmul.f32 %v1658, %v1719
        %v1980 = vmul.f32 %v1658, %v1723
        %v1981 = vmul.f32 %v1658, %v1727
        %v1982 = vmul.f32 %v1658, %v1731
        %v1983 = vmul.f32 %v1658, %v1735
        %v1984 = vmul.f32 %v1662, %v1707
        %v1985 = vmul.f32 %v1662, %v1711
        %v1986 = vmul.f32 %v1662, %v1715
        %v1987 = vmul.f32 %v1662, %v1719
        %v1988 = vmul.f32 %v1662, %v1723
        %v1989 = vmul.f32 %v1662, %v1727
        %v1990 = vmul.f32 %v1662, %v1731
        %v1991 = vmul.f32 %v1662, %v1735
        %v1992 = vadd.f32 %v1280, %v1736
        %v1993 = vadd.f32 %v1281, %v1737
        %v1994 = vadd.f32 %v1282, %v1738
        %v1995 = vadd.f32 %v1283, %v1739
        %v1996 = vadd.f32 %v1284, %v1740
        %v1997 = vadd.f32 %v1285, %v1741
        %v1998 = vadd.f32 %v1286, %v1742
        %v1999 = vadd.f32 %v1287, %v1743
        %v2000 = vadd.f32 %v1288, %v1744
        %v2001 = vadd.f32 %v1289, %v1745
        %v2002 = vadd.f32 %v1290, %v1746
        %v2003 = vadd.f32 %v1291, %v1747
        %v2004 = vadd.f32 %v1292, %v1748
        %v2005 = vadd.f32 %v1293, %v1749
        %v2006 = vadd.f32 %v1294, %v1750
        %v2007 = vadd.f32 %v1295, %v1751
        %v2008 = vadd.f32 %v1296, %v1752
        %v2009 = vadd.f32 %v1297, %v1753
        %v2010 = vadd.f32 %v1298, %v1754
        %v2011 = vadd.f32 %v1299, %v1755
        %v2012 = vadd.f32 %v1300, %v1756
        %v2013 = vadd.f32 %v1301, %v1757
        %v2014 = vadd.f32 %v1302, %v1758
        %v2015 = vadd.f32 %v1303, %v1759
        %v2016 = vadd.f32 %v1304, %v1760
        %v2017 = vadd.f32 %v1305, %v1761
        %v2018 = vadd.f32 %v1306, %v1762
        %v2019 = vadd.f32 %v1307, %v1763
        %v2020 = vadd.f32 %v1308, %v1764
        %v2021 = vadd.f32 %v1309, %v1765
        %v2022 = vadd.f32 %v1310, %v1766
        %v2023 = vadd.f32 %v1311, %v1767
        %v2024 = vadd.f32 %v1312, %v1768
        %v2025 = vadd.f32 %v1313, %v1769
        %v2026 = vadd.f32 %v1314, %v1770
        %v2027 = vadd.f32 %v1315, %v1771
        %v2028 = vadd.f32 %v1316, %v1772
        %v2029 = vadd.f32 %v1317, %v1773
        %v2030 = vadd.f32 %v1318, %v1774
        %v2031 = vadd.f32 %v1319, %v1775
        %v2032 = vadd.f32 %v1320, %v1776
        %v2033 = vadd.f32 %v1321, %v1777
        %v2034 = vadd.f32 %v1322, %v1778
        %v2035 = vadd.f32 %v1323, %v1779
        %v2036 = vadd.f32 %v1324, %v1780
        %v2037 = vadd.f32 %v1325, %v1781
        %v2038 = vadd.f32 %v1326, %v1782
        %v2039 = vadd.f32 %v1327, %v1783
        %v2040 = vadd.f32 %v1328, %v1784
        %v2041 = vadd.f32 %v1329, %v1785
        %v2042 = vadd.f32 %v1330, %v1786
        %v2043 = vadd.f32 %v1331, %v1787
        %v2044 = vadd.f32 %v1332, %v1788
        %v2045 = vadd.f32 %v1333, %v1789
        %v2046 = vadd.f32 %v1334, %v1790
        %v2047 = vadd.f32 %v1335, %v1791
        %v2048 = vadd.f32 %v1336, %v1792
        %v2049 = vadd.f32 %v1337, %v1793
        %v2050 = vadd.f32 %v1338, %v1794
        %v2051 = vadd.f32 %v1339, %v1795
        %v2052 = vadd.f32 %v1340, %v1796
        %v2053 = vadd.f32 %v1341, %v1797
        %v2054 = vadd.f32 %v1342, %v1798
        %v2055 = vadd.f32 %v1343, %v1799
        %v2056 = vadd.f32 %v1344, %v1800
        %v2057 = vadd.f32 %v1345, %v1801
        %v2058 = vadd.f32 %v1346, %v1802
        %v2059 = vadd.f32 %v1347, %v1803
        %v2060 = vadd.f32 %v1348, %v1804
        %v2061 = vadd.f32 %v1349, %v1805
        %v2062 = vadd.f32 %v1350, %v1806
        %v2063 = vadd.f32 %v1351, %v1807
        %v2064 = vadd.f32 %v1352, %v1808
        %v2065 = vadd.f32 %v1353, %v1809
        %v2066 = vadd.f32 %v1354, %v1810
        %v2067 = vadd.f32 %v1355, %v1811
        %v2068 = vadd.f32 %v1356, %v1812
        %v2069 = vadd.f32 %v1357, %v1813
        %v2070 = vadd.f32 %v1358, %v1814
        %v2071 = vadd.f32 %v1359, %v1815
        %v2072 = vadd.f32 %v1360, %v1816
        %v2073 = vadd.f32 %v1361, %v1817
        %v2074 = vadd.f32 %v1362, %v1818
        %v2075 = vadd.f32 %v1363, %v1819
        %v2076 = vadd.f32 %v1364, %v1820
        %v2077 = vadd.f32 %v1365, %v1821
        %v2078 = vadd.f32 %v1366, %v1822
        %v2079 = vadd.f32 %v1367, %v1823
        %v2080 = vadd.f32 %v1368, %v1824
        %v2081 = vadd.f32 %v1369, %v1825
        %v2082 = vadd.f32 %v1370, %v1826
        %v2083 = vadd.f32 %v1371, %v1827
        %v2084 = vadd.f32 %v1372, %v1828
        %v2085 = vadd.f32 %v1373, %v1829
        %v2086 = vadd.f32 %v1374, %v1830
        %v2087 = vadd.f32 %v1375, %v1831
        %v2088 = vadd.f32 %v1376, %v1832
        %v2089 = vadd.f32 %v1377, %v1833
        %v2090 = vadd.f32 %v1378, %v1834
        %v2091 = vadd.f32 %v1379, %v1835
        %v2092 = vadd.f32 %v1380, %v1836
        %v2093 = vadd.f32 %v1381, %v1837
        %v2094 = vadd.f32 %v1382, %v1838
        %v2095 = vadd.f32 %v1383, %v1839
        %v2096 = vadd.f32 %v1384, %v1840
        %v2097 = vadd.f32 %v1385, %v1841
        %v2098 = vadd.f32 %v1386, %v1842
        %v2099 = vadd.f32 %v1387, %v1843
        %v2100 = vadd.f32 %v1388, %v1844
        %v2101 = vadd.f32 %v1389, %v1845
        %v2102 = vadd.f32 %v1390, %v1846
        %v2103 = vadd.f32 %v1391, %v1847
        %v2104 = vadd.f32 %v1392, %v1848
        %v2105 = vadd.f32 %v1393, %v1849
        %v2106 = vadd.f32 %v1394, %v1850
        %v2107 = vadd.f32 %v1395, %v1851
        %v2108 = vadd.f32 %v1396, %v1852
        %v2109 = vadd.f32 %v1397, %v1853
        %v2110 = vadd.f32 %v1398, %v1854
        %v2111 = vadd.f32 %v1399, %v1855
        %v2112 = vadd.f32 %v1400, %v1856
        %v2113 = vadd.f32 %v1401, %v1857
        %v2114 = vadd.f32 %v1402, %v1858
        %v2115 = vadd.f32 %v1403, %v1859
        %v2116 = vadd.f32 %v1404, %v1860
        %v2117 = vadd.f32 %v1405, %v1861
        %v2118 = vadd.f32 %v1406, %v1862
        %v2119 = vadd.f32 %v1407, %v1863
        %v2120 = vadd.f32 %v1408, %v1864
        %v2121 = vadd.f32 %v1409, %v1865
        %v2122 = vadd.f32 %v1410, %v1866
        %v2123 = vadd.f32 %v1411, %v1867
        %v2124 = vadd.f32 %v1412, %v1868
        %v2125 = vadd.f32 %v1413, %v1869
        %v2126 = vadd.f32 %v1414, %v1870
        %v2127 = vadd.f32 %v1415, %v1871
        %v2128 = vadd.f32 %v1416, %v1872
        %v2129 = vadd.f32 %v1417, %v1873
        %v2130 = vadd.f32 %v1418, %v1874
        %v2131 = vadd.f32 %v1419, %v1875
        %v2132 = vadd.f32 %v1420, %v1876
        %v2133 = vadd.f32 %v1421, %v1877
        %v2134 = vadd.f32 %v1422, %v1878
        %v2135 = vadd.f32 %v1423, %v1879
        %v2136 = vadd.f32 %v1424, %v1880
        %v2137 = vadd.f32 %v1425, %v1881
        %v2138 = vadd.f32 %v1426, %v1882
        %v2139 = vadd.f32 %v1427, %v1883
        %v2140 = vadd.f32 %v1428, %v1884
        %v2141 = vadd.f32 %v1429, %v1885
        %v2142 = vadd.f32 %v1430, %v1886
        %v2143 = vadd.f32 %v1431, %v1887
        %v2144 = vadd.f32 %v1432, %v1888
        %v2145 = vadd.f32 %v1433, %v1889
        %v2146 = vadd.f32 %v1434, %v1890
        %v2147 = vadd.f32 %v1435, %v1891
        %v2148 = vadd.f32 %v1436, %v1892
        %v2149 = vadd.f32 %v1437, %v1893
        %v2150 = vadd.f32 %v1438, %v1894
        %v2151 = vadd.f32 %v1439, %v1895
        %v2152 = vadd.f32 %v1440, %v1896
        %v2153 = vadd.f32 %v1441, %v1897
        %v2154 = vadd.f32 %v1442, %v1898
        %v2155 = vadd.f32 %v1443, %v1899
        %v2156 = vadd.f32 %v1444, %v1900
        %v2157 = vadd.f32 %v1445, %v1901
        %v2158 = vadd.f32 %v1446, %v1902
        %v2159 = vadd.f32 %v1447, %v1903
        %v2160 = vadd.f32 %v1448, %v1904
        %v2161 = vadd.f32 %v1449, %v1905
        %v2162 = vadd.f32 %v1450, %v1906
        %v2163 = vadd.f32 %v1451, %v1907
        %v2164 = vadd.f32 %v1452, %v1908
        %v2165 = vadd.f32 %v1453, %v1909
        %v2166 = vadd.f32 %v1454, %v1910
        %v2167 = vadd.f32 %v1455, %v1911
        %v2168 = vadd.f32 %v1456, %v1912
        %v2169 = vadd.f32 %v1457, %v1913
        %v2170 = vadd.f32 %v1458, %v1914
        %v2171 = vadd.f32 %v1459, %v1915
        %v2172 = vadd.f32 %v1460, %v1916
        %v2173 = vadd.f32 %v1461, %v1917
        %v2174 = vadd.f32 %v1462, %v1918
        %v2175 = vadd.f32 %v1463, %v1919
        %v2176 = vadd.f32 %v1464, %v1920
        %v2177 = vadd.f32 %v1465, %v1921
        %v2178 = vadd.f32 %v1466, %v1922
        %v2179 = vadd.f32 %v1467, %v1923
        %v2180 = vadd.f32 %v1468, %v1924
        %v2181 = vadd.f32 %v1469, %v1925
        %v2182 = vadd.f32 %v1470, %v1926
        %v2183 = vadd.f32 %v1471, %v1927
        %v2184 = vadd.f32 %v1472, %v1928
        %v2185 = vadd.f32 %v1473, %v1929
        %v2186 = vadd.f32 %v1474, %v1930
        %v2187 = vadd.f32 %v1475, %v1931
        %v2188 = vadd.f32 %v1476, %v1932
        %v2189 = vadd.f32 %v1477, %v1933
        %v2190 = vadd.f32 %v1478, %v1934
        %v2191 = vadd.f32 %v1479, %v1935
        %v2192 = vadd.f32 %v1480, %v1936
        %v2193 = vadd.f32 %v1481, %v1937
        %v2194 = vadd.f32 %v1482, %v1938
        %v2195 = vadd.f32 %v1483, %v1939
        %v2196 = vadd.f32 %v1484, %v1940
        %v2197 = vadd.f32 %v1485, %v1941
        %v2198 = vadd.f32 %v1486, %v1942
        %v2199 = vadd.f32 %v1487, %v1943
        %v2200 = vadd.f32 %v1488, %v1944
        %v2201 = vadd.f32 %v1489, %v1945
        %v2202 = vadd.f32 %v1490, %v1946
        %v2203 = vadd.f32 %v1491, %v1947
        %v2204 = vadd.f32 %v1492, %v1948
        %v2205 = vadd.f32 %v1493, %v1949
        %v2206 = vadd.f32 %v1494, %v1950
        %v2207 = vadd.f32 %v1495, %v1951
        %v2208 = vadd.f32 %v1496, %v1952
        %v2209 = vadd.f32 %v1497, %v1953
        %v2210 = vadd.f32 %v1498, %v1954
        %v2211 = vadd.f32 %v1499, %v1955
        %v2212 = vadd.f32 %v1500, %v1956
        %v2213 = vadd.f32 %v1501, %v1957
        %v2214 = vadd.f32 %v1502, %v1958
        %v2215 = vadd.f32 %v1503, %v1959
        %v2216 = vadd.f32 %v1504, %v1960
        %v2217 = vadd.f32 %v1505, %v1961
        %v2218 = vadd.f32 %v1506, %v1962
        %v2219 = vadd.f32 %v1507, %v1963
        %v2220 = vadd.f32 %v1508, %v1964
        %v2221 = vadd.f32 %v1509, %v1965
        %v2222 = vadd.f32 %v1510, %v1966
        %v2223 = vadd.f32 %v1511, %v1967
        %v2224 = vadd.f32 %v1512, %v1968
        %v2225 = vadd.f32 %v1513, %v1969
        %v2226 = vadd.f32 %v1514, %v1970
        %v2227 = vadd.f32 %v1515, %v1971
        %v2228 = vadd.f32 %v1516, %v1972
        %v2229 = vadd.f32 %v1517, %v1973
        %v2230 = vadd.f32 %v1518, %v1974
        %v2231 = vadd.f32 %v1519, %v1975
        %v2232 = vadd.f32 %v1520, %v1976
        %v2233 = vadd.f32 %v1521, %v1977
        %v2234 = vadd.f32 %v1522, %v1978
        %v2235 = vadd.f32 %v1523, %v1979
        %v2236 = vadd.f32 %v1524, %v1980
        %v2237 = vadd.f32 %v1525, %v1981
        %v2238 = vadd.f32 %v1526, %v1982
        %v2239 = vadd.f32 %v1527, %v1983
        %v2240 = vadd.f32 %v1528, %v1984
        %v2241 = vadd.f32 %v1529, %v1985
        %v2242 = vadd.f32 %v1530, %v1986
        %v2243 = vadd.f32 %v1531, %v1987
        %v2244 = vadd.f32 %v1532, %v1988
        %v2245 = vadd.f32 %v1533, %v1989
        %v2246 = vadd.f32 %v1534, %v1990
        %v2247 = vadd.f32 %v1535, %v1991
        %v2248 = vld [vmem:[%s2] sm:$0xff]
        %v2250 = vlaneseq
        %v2251 = vshrl.u32 %v2250, 7
        %v2252 = vsub.s32 0, %v2251
        %v2253 = vrot.slane %v2248, %v2252
        %v2254 = vlaneseq
        %v2255 = vshrl.u32 %v2254, 7
        %v2256 = vsub.s32 1, %v2255
        %v2257 = vrot.slane %v2248, %v2256
        %v2258 = vlaneseq
        %v2259 = vshrl.u32 %v2258, 7
        %v2260 = vsub.s32 2, %v2259
        %v2261 = vrot.slane %v2248, %v2260
        %v2262 = vlaneseq
        %v2263 = vshrl.u32 %v2262, 7
        %v2264 = vsub.s32 3, %v2263
        %v2265 = vrot.slane %v2248, %v2264
        %v2266 = vlaneseq
        %v2267 = vshrl.u32 %v2266, 7
        %v2268 = vsub.s32 4, %v2267
        %v2269 = vrot.slane %v2248, %v2268
        %v2270 = vlaneseq
        %v2271 = vshrl.u32 %v2270, 7
        %v2272 = vsub.s32 5, %v2271
        %v2273 = vrot.slane %v2248, %v2272
        %v2274 = vlaneseq
        %v2275 = vshrl.u32 %v2274, 7
        %v2276 = vsub.s32 6, %v2275
        %v2277 = vrot.slane %v2248, %v2276
        %v2278 = vlaneseq
        %v2279 = vshrl.u32 %v2278, 7
        %v2280 = vsub.s32 7, %v2279
        %v2281 = vrot.slane %v2248, %v2280
        %v2290 = vadd.f32 %v1992, %v2253
        %v2291 = vadd.f32 %v1993, %v2257
        %v2292 = vadd.f32 %v1994, %v2261
        %v2293 = vadd.f32 %v1995, %v2265
        %v2294 = vadd.f32 %v1996, %v2269
        %v2295 = vadd.f32 %v1997, %v2273
        %v2296 = vadd.f32 %v1998, %v2277
        %v2297 = vadd.f32 %v1999, %v2281
        %v2298 = vadd.f32 %v2000, %v2253
        %v2299 = vadd.f32 %v2001, %v2257
        %v2300 = vadd.f32 %v2002, %v2261
        %v2301 = vadd.f32 %v2003, %v2265
        %v2302 = vadd.f32 %v2004, %v2269
        %v2303 = vadd.f32 %v2005, %v2273
        %v2304 = vadd.f32 %v2006, %v2277
        %v2305 = vadd.f32 %v2007, %v2281
        %v2306 = vadd.f32 %v2008, %v2253
        %v2307 = vadd.f32 %v2009, %v2257
        %v2308 = vadd.f32 %v2010, %v2261
        %v2309 = vadd.f32 %v2011, %v2265
        %v2310 = vadd.f32 %v2012, %v2269
        %v2311 = vadd.f32 %v2013, %v2273
        %v2312 = vadd.f32 %v2014, %v2277
        %v2313 = vadd.f32 %v2015, %v2281
        %v2314 = vadd.f32 %v2016, %v2253
        %v2315 = vadd.f32 %v2017, %v2257
        %v2316 = vadd.f32 %v2018, %v2261
        %v2317 = vadd.f32 %v2019, %v2265
        %v2318 = vadd.f32 %v2020, %v2269
        %v2319 = vadd.f32 %v2021, %v2273
        %v2320 = vadd.f32 %v2022, %v2277
        %v2321 = vadd.f32 %v2023, %v2281
        %v2322 = vadd.f32 %v2024, %v2253
        %v2323 = vadd.f32 %v2025, %v2257
        %v2324 = vadd.f32 %v2026, %v2261
        %v2325 = vadd.f32 %v2027, %v2265
        %v2326 = vadd.f32 %v2028, %v2269
        %v2327 = vadd.f32 %v2029, %v2273
        %v2328 = vadd.f32 %v2030, %v2277
        %v2329 = vadd.f32 %v2031, %v2281
        %v2330 = vadd.f32 %v2032, %v2253
        %v2331 = vadd.f32 %v2033, %v2257
        %v2332 = vadd.f32 %v2034, %v2261
        %v2333 = vadd.f32 %v2035, %v2265
        %v2334 = vadd.f32 %v2036, %v2269
        %v2335 = vadd.f32 %v2037, %v2273
        %v2336 = vadd.f32 %v2038, %v2277
        %v2337 = vadd.f32 %v2039, %v2281
        %v2338 = vadd.f32 %v2040, %v2253
        %v2339 = vadd.f32 %v2041, %v2257
        %v2340 = vadd.f32 %v2042, %v2261
        %v2341 = vadd.f32 %v2043, %v2265
        %v2342 = vadd.f32 %v2044, %v2269
        %v2343 = vadd.f32 %v2045, %v2273
        %v2344 = vadd.f32 %v2046, %v2277
        %v2345 = vadd.f32 %v2047, %v2281
        %v2346 = vadd.f32 %v2048, %v2253
        %v2347 = vadd.f32 %v2049, %v2257
        %v2348 = vadd.f32 %v2050, %v2261
        %v2349 = vadd.f32 %v2051, %v2265
        %v2350 = vadd.f32 %v2052, %v2269
        %v2351 = vadd.f32 %v2053, %v2273
        %v2352 = vadd.f32 %v2054, %v2277
        %v2353 = vadd.f32 %v2055, %v2281
        %v2354 = vadd.f32 %v2056, %v2253
        %v2355 = vadd.f32 %v2057, %v2257
        %v2356 = vadd.f32 %v2058, %v2261
        %v2357 = vadd.f32 %v2059, %v2265
        %v2358 = vadd.f32 %v2060, %v2269
        %v2359 = vadd.f32 %v2061, %v2273
        %v2360 = vadd.f32 %v2062, %v2277
        %v2361 = vadd.f32 %v2063, %v2281
        %v2362 = vadd.f32 %v2064, %v2253
        %v2363 = vadd.f32 %v2065, %v2257
        %v2364 = vadd.f32 %v2066, %v2261
        %v2365 = vadd.f32 %v2067, %v2265
        %v2366 = vadd.f32 %v2068, %v2269
        %v2367 = vadd.f32 %v2069, %v2273
        %v2368 = vadd.f32 %v2070, %v2277
        %v2369 = vadd.f32 %v2071, %v2281
        %v2370 = vadd.f32 %v2072, %v2253
        %v2371 = vadd.f32 %v2073, %v2257
        %v2372 = vadd.f32 %v2074, %v2261
        %v2373 = vadd.f32 %v2075, %v2265
        %v2374 = vadd.f32 %v2076, %v2269
        %v2375 = vadd.f32 %v2077, %v2273
        %v2376 = vadd.f32 %v2078, %v2277
        %v2377 = vadd.f32 %v2079, %v2281
        %v2378 = vadd.f32 %v2080, %v2253
        %v2379 = vadd.f32 %v2081, %v2257
        %v2380 = vadd.f32 %v2082, %v2261
        %v2381 = vadd.f32 %v2083, %v2265
        %v2382 = vadd.f32 %v2084, %v2269
        %v2383 = vadd.f32 %v2085, %v2273
        %v2384 = vadd.f32 %v2086, %v2277
        %v2385 = vadd.f32 %v2087, %v2281
        %v2386 = vadd.f32 %v2088, %v2253
        %v2387 = vadd.f32 %v2089, %v2257
        %v2388 = vadd.f32 %v2090, %v2261
        %v2389 = vadd.f32 %v2091, %v2265
        %v2390 = vadd.f32 %v2092, %v2269
        %v2391 = vadd.f32 %v2093, %v2273
        %v2392 = vadd.f32 %v2094, %v2277
        %v2393 = vadd.f32 %v2095, %v2281
        %v2394 = vadd.f32 %v2096, %v2253
        %v2395 = vadd.f32 %v2097, %v2257
        %v2396 = vadd.f32 %v2098, %v2261
        %v2397 = vadd.f32 %v2099, %v2265
        %v2398 = vadd.f32 %v2100, %v2269
        %v2399 = vadd.f32 %v2101, %v2273
        %v2400 = vadd.f32 %v2102, %v2277
        %v2401 = vadd.f32 %v2103, %v2281
        %v2402 = vadd.f32 %v2104, %v2253
        %v2403 = vadd.f32 %v2105, %v2257
        %v2404 = vadd.f32 %v2106, %v2261
        %v2405 = vadd.f32 %v2107, %v2265
        %v2406 = vadd.f32 %v2108, %v2269
        %v2407 = vadd.f32 %v2109, %v2273
        %v2408 = vadd.f32 %v2110, %v2277
        %v2409 = vadd.f32 %v2111, %v2281
        %v2410 = vadd.f32 %v2112, %v2253
        %v2411 = vadd.f32 %v2113, %v2257
        %v2412 = vadd.f32 %v2114, %v2261
        %v2413 = vadd.f32 %v2115, %v2265
        %v2414 = vadd.f32 %v2116, %v2269
        %v2415 = vadd.f32 %v2117, %v2273
        %v2416 = vadd.f32 %v2118, %v2277
        %v2417 = vadd.f32 %v2119, %v2281
        %v2418 = vadd.f32 %v2120, %v2253
        %v2419 = vadd.f32 %v2121, %v2257
        %v2420 = vadd.f32 %v2122, %v2261
        %v2421 = vadd.f32 %v2123, %v2265
        %v2422 = vadd.f32 %v2124, %v2269
        %v2423 = vadd.f32 %v2125, %v2273
        %v2424 = vadd.f32 %v2126, %v2277
        %v2425 = vadd.f32 %v2127, %v2281
        %v2426 = vadd.f32 %v2128, %v2253
        %v2427 = vadd.f32 %v2129, %v2257
        %v2428 = vadd.f32 %v2130, %v2261
        %v2429 = vadd.f32 %v2131, %v2265
        %v2430 = vadd.f32 %v2132, %v2269
        %v2431 = vadd.f32 %v2133, %v2273
        %v2432 = vadd.f32 %v2134, %v2277
        %v2433 = vadd.f32 %v2135, %v2281
        %v2434 = vadd.f32 %v2136, %v2253
        %v2435 = vadd.f32 %v2137, %v2257
        %v2436 = vadd.f32 %v2138, %v2261
        %v2437 = vadd.f32 %v2139, %v2265
        %v2438 = vadd.f32 %v2140, %v2269
        %v2439 = vadd.f32 %v2141, %v2273
        %v2440 = vadd.f32 %v2142, %v2277
        %v2441 = vadd.f32 %v2143, %v2281
        %v2442 = vadd.f32 %v2144, %v2253
        %v2443 = vadd.f32 %v2145, %v2257
        %v2444 = vadd.f32 %v2146, %v2261
        %v2445 = vadd.f32 %v2147, %v2265
        %v2446 = vadd.f32 %v2148, %v2269
        %v2447 = vadd.f32 %v2149, %v2273
        %v2448 = vadd.f32 %v2150, %v2277
        %v2449 = vadd.f32 %v2151, %v2281
        %v2450 = vadd.f32 %v2152, %v2253
        %v2451 = vadd.f32 %v2153, %v2257
        %v2452 = vadd.f32 %v2154, %v2261
        %v2453 = vadd.f32 %v2155, %v2265
        %v2454 = vadd.f32 %v2156, %v2269
        %v2455 = vadd.f32 %v2157, %v2273
        %v2456 = vadd.f32 %v2158, %v2277
        %v2457 = vadd.f32 %v2159, %v2281
        %v2458 = vadd.f32 %v2160, %v2253
        %v2459 = vadd.f32 %v2161, %v2257
        %v2460 = vadd.f32 %v2162, %v2261
        %v2461 = vadd.f32 %v2163, %v2265
        %v2462 = vadd.f32 %v2164, %v2269
        %v2463 = vadd.f32 %v2165, %v2273
        %v2464 = vadd.f32 %v2166, %v2277
        %v2465 = vadd.f32 %v2167, %v2281
        %v2466 = vadd.f32 %v2168, %v2253
        %v2467 = vadd.f32 %v2169, %v2257
        %v2468 = vadd.f32 %v2170, %v2261
        %v2469 = vadd.f32 %v2171, %v2265
        %v2470 = vadd.f32 %v2172, %v2269
        %v2471 = vadd.f32 %v2173, %v2273
        %v2472 = vadd.f32 %v2174, %v2277
        %v2473 = vadd.f32 %v2175, %v2281
        %v2474 = vadd.f32 %v2176, %v2253
        %v2475 = vadd.f32 %v2177, %v2257
        %v2476 = vadd.f32 %v2178, %v2261
        %v2477 = vadd.f32 %v2179, %v2265
        %v2478 = vadd.f32 %v2180, %v2269
        %v2479 = vadd.f32 %v2181, %v2273
        %v2480 = vadd.f32 %v2182, %v2277
        %v2481 = vadd.f32 %v2183, %v2281
        %v2482 = vadd.f32 %v2184, %v2253
        %v2483 = vadd.f32 %v2185, %v2257
        %v2484 = vadd.f32 %v2186, %v2261
        %v2485 = vadd.f32 %v2187, %v2265
        %v2486 = vadd.f32 %v2188, %v2269
        %v2487 = vadd.f32 %v2189, %v2273
        %v2488 = vadd.f32 %v2190, %v2277
        %v2489 = vadd.f32 %v2191, %v2281
        %v2490 = vadd.f32 %v2192, %v2253
        %v2491 = vadd.f32 %v2193, %v2257
        %v2492 = vadd.f32 %v2194, %v2261
        %v2493 = vadd.f32 %v2195, %v2265
        %v2494 = vadd.f32 %v2196, %v2269
        %v2495 = vadd.f32 %v2197, %v2273
        %v2496 = vadd.f32 %v2198, %v2277
        %v2497 = vadd.f32 %v2199, %v2281
        %v2498 = vadd.f32 %v2200, %v2253
        %v2499 = vadd.f32 %v2201, %v2257
        %v2500 = vadd.f32 %v2202, %v2261
        %v2501 = vadd.f32 %v2203, %v2265
        %v2502 = vadd.f32 %v2204, %v2269
        %v2503 = vadd.f32 %v2205, %v2273
        %v2504 = vadd.f32 %v2206, %v2277
        %v2505 = vadd.f32 %v2207, %v2281
        %v2506 = vadd.f32 %v2208, %v2253
        %v2507 = vadd.f32 %v2209, %v2257
        %v2508 = vadd.f32 %v2210, %v2261
        %v2509 = vadd.f32 %v2211, %v2265
        %v2510 = vadd.f32 %v2212, %v2269
        %v2511 = vadd.f32 %v2213, %v2273
        %v2512 = vadd.f32 %v2214, %v2277
        %v2513 = vadd.f32 %v2215, %v2281
        %v2514 = vadd.f32 %v2216, %v2253
        %v2515 = vadd.f32 %v2217, %v2257
        %v2516 = vadd.f32 %v2218, %v2261
        %v2517 = vadd.f32 %v2219, %v2265
        %v2518 = vadd.f32 %v2220, %v2269
        %v2519 = vadd.f32 %v2221, %v2273
        %v2520 = vadd.f32 %v2222, %v2277
        %v2521 = vadd.f32 %v2223, %v2281
        %v2522 = vadd.f32 %v2224, %v2253
        %v2523 = vadd.f32 %v2225, %v2257
        %v2524 = vadd.f32 %v2226, %v2261
        %v2525 = vadd.f32 %v2227, %v2265
        %v2526 = vadd.f32 %v2228, %v2269
        %v2527 = vadd.f32 %v2229, %v2273
        %v2528 = vadd.f32 %v2230, %v2277
        %v2529 = vadd.f32 %v2231, %v2281
        %v2530 = vadd.f32 %v2232, %v2253
        %v2531 = vadd.f32 %v2233, %v2257
        %v2532 = vadd.f32 %v2234, %v2261
        %v2533 = vadd.f32 %v2235, %v2265
        %v2534 = vadd.f32 %v2236, %v2269
        %v2535 = vadd.f32 %v2237, %v2273
        %v2536 = vadd.f32 %v2238, %v2277
        %v2537 = vadd.f32 %v2239, %v2281
        %v2538 = vadd.f32 %v2240, %v2253
        %v2539 = vadd.f32 %v2241, %v2257
        %v2540 = vadd.f32 %v2242, %v2261
        %v2541 = vadd.f32 %v2243, %v2265
        %v2542 = vadd.f32 %v2244, %v2269
        %v2543 = vadd.f32 %v2245, %v2273
        %v2544 = vadd.f32 %v2246, %v2277
        %v2545 = vadd.f32 %v2247, %v2281
        %v2546 = vmax.f32 %v2290, 0.0
        %v2547 = vmax.f32 %v2291, 0.0
        %v2548 = vmax.f32 %v2292, 0.0
        %v2549 = vmax.f32 %v2293, 0.0
        %v2550 = vmax.f32 %v2294, 0.0
        %v2551 = vmax.f32 %v2295, 0.0
        %v2552 = vmax.f32 %v2296, 0.0
        %v2553 = vmax.f32 %v2297, 0.0
        %v2554 = vmax.f32 %v2298, 0.0
        %v2555 = vmax.f32 %v2299, 0.0
        %v2556 = vmax.f32 %v2300, 0.0
        %v2557 = vmax.f32 %v2301, 0.0
        %v2558 = vmax.f32 %v2302, 0.0
        %v2559 = vmax.f32 %v2303, 0.0
        %v2560 = vmax.f32 %v2304, 0.0
        %v2561 = vmax.f32 %v2305, 0.0
        %v2562 = vmax.f32 %v2306, 0.0
        %v2563 = vmax.f32 %v2307, 0.0
        %v2564 = vmax.f32 %v2308, 0.0
        %v2565 = vmax.f32 %v2309, 0.0
        %v2566 = vmax.f32 %v2310, 0.0
        %v2567 = vmax.f32 %v2311, 0.0
        %v2568 = vmax.f32 %v2312, 0.0
        %v2569 = vmax.f32 %v2313, 0.0
        %v2570 = vmax.f32 %v2314, 0.0
        %v2571 = vmax.f32 %v2315, 0.0
        %v2572 = vmax.f32 %v2316, 0.0
        %v2573 = vmax.f32 %v2317, 0.0
        %v2574 = vmax.f32 %v2318, 0.0
        %v2575 = vmax.f32 %v2319, 0.0
        %v2576 = vmax.f32 %v2320, 0.0
        %v2577 = vmax.f32 %v2321, 0.0
        %v2578 = vmax.f32 %v2322, 0.0
        %v2579 = vmax.f32 %v2323, 0.0
        %v2580 = vmax.f32 %v2324, 0.0
        %v2581 = vmax.f32 %v2325, 0.0
        %v2582 = vmax.f32 %v2326, 0.0
        %v2583 = vmax.f32 %v2327, 0.0
        %v2584 = vmax.f32 %v2328, 0.0
        %v2585 = vmax.f32 %v2329, 0.0
        %v2586 = vmax.f32 %v2330, 0.0
        %v2587 = vmax.f32 %v2331, 0.0
        %v2588 = vmax.f32 %v2332, 0.0
        %v2589 = vmax.f32 %v2333, 0.0
        %v2590 = vmax.f32 %v2334, 0.0
        %v2591 = vmax.f32 %v2335, 0.0
        %v2592 = vmax.f32 %v2336, 0.0
        %v2593 = vmax.f32 %v2337, 0.0
        %v2594 = vmax.f32 %v2338, 0.0
        %v2595 = vmax.f32 %v2339, 0.0
        %v2596 = vmax.f32 %v2340, 0.0
        %v2597 = vmax.f32 %v2341, 0.0
        %v2598 = vmax.f32 %v2342, 0.0
        %v2599 = vmax.f32 %v2343, 0.0
        %v2600 = vmax.f32 %v2344, 0.0
        %v2601 = vmax.f32 %v2345, 0.0
        %v2602 = vmax.f32 %v2346, 0.0
        %v2603 = vmax.f32 %v2347, 0.0
        %v2604 = vmax.f32 %v2348, 0.0
        %v2605 = vmax.f32 %v2349, 0.0
        %v2606 = vmax.f32 %v2350, 0.0
        %v2607 = vmax.f32 %v2351, 0.0
        %v2608 = vmax.f32 %v2352, 0.0
        %v2609 = vmax.f32 %v2353, 0.0
        %v2610 = vmax.f32 %v2354, 0.0
        %v2611 = vmax.f32 %v2355, 0.0
        %v2612 = vmax.f32 %v2356, 0.0
        %v2613 = vmax.f32 %v2357, 0.0
        %v2614 = vmax.f32 %v2358, 0.0
        %v2615 = vmax.f32 %v2359, 0.0
        %v2616 = vmax.f32 %v2360, 0.0
        %v2617 = vmax.f32 %v2361, 0.0
        %v2618 = vmax.f32 %v2362, 0.0
        %v2619 = vmax.f32 %v2363, 0.0
        %v2620 = vmax.f32 %v2364, 0.0
        %v2621 = vmax.f32 %v2365, 0.0
        %v2622 = vmax.f32 %v2366, 0.0
        %v2623 = vmax.f32 %v2367, 0.0
        %v2624 = vmax.f32 %v2368, 0.0
        %v2625 = vmax.f32 %v2369, 0.0
        %v2626 = vmax.f32 %v2370, 0.0
        %v2627 = vmax.f32 %v2371, 0.0
        %v2628 = vmax.f32 %v2372, 0.0
        %v2629 = vmax.f32 %v2373, 0.0
        %v2630 = vmax.f32 %v2374, 0.0
        %v2631 = vmax.f32 %v2375, 0.0
        %v2632 = vmax.f32 %v2376, 0.0
        %v2633 = vmax.f32 %v2377, 0.0
        %v2634 = vmax.f32 %v2378, 0.0
        %v2635 = vmax.f32 %v2379, 0.0
        %v2636 = vmax.f32 %v2380, 0.0
        %v2637 = vmax.f32 %v2381, 0.0
        %v2638 = vmax.f32 %v2382, 0.0
        %v2639 = vmax.f32 %v2383, 0.0
        %v2640 = vmax.f32 %v2384, 0.0
        %v2641 = vmax.f32 %v2385, 0.0
        %v2642 = vmax.f32 %v2386, 0.0
        %v2643 = vmax.f32 %v2387, 0.0
        %v2644 = vmax.f32 %v2388, 0.0
        %v2645 = vmax.f32 %v2389, 0.0
        %v2646 = vmax.f32 %v2390, 0.0
        %v2647 = vmax.f32 %v2391, 0.0
        %v2648 = vmax.f32 %v2392, 0.0
        %v2649 = vmax.f32 %v2393, 0.0
        %v2650 = vmax.f32 %v2394, 0.0
        %v2651 = vmax.f32 %v2395, 0.0
        %v2652 = vmax.f32 %v2396, 0.0
        %v2653 = vmax.f32 %v2397, 0.0
        %v2654 = vmax.f32 %v2398, 0.0
        %v2655 = vmax.f32 %v2399, 0.0
        %v2656 = vmax.f32 %v2400, 0.0
        %v2657 = vmax.f32 %v2401, 0.0
        %v2658 = vmax.f32 %v2402, 0.0
        %v2659 = vmax.f32 %v2403, 0.0
        %v2660 = vmax.f32 %v2404, 0.0
        %v2661 = vmax.f32 %v2405, 0.0
        %v2662 = vmax.f32 %v2406, 0.0
        %v2663 = vmax.f32 %v2407, 0.0
        %v2664 = vmax.f32 %v2408, 0.0
        %v2665 = vmax.f32 %v2409, 0.0
        %v2666 = vmax.f32 %v2410, 0.0
        %v2667 = vmax.f32 %v2411, 0.0
        %v2668 = vmax.f32 %v2412, 0.0
        %v2669 = vmax.f32 %v2413, 0.0
        %v2670 = vmax.f32 %v2414, 0.0
        %v2671 = vmax.f32 %v2415, 0.0
        %v2672 = vmax.f32 %v2416, 0.0
        %v2673 = vmax.f32 %v2417, 0.0
        %v2674 = vmax.f32 %v2418, 0.0
        %v2675 = vmax.f32 %v2419, 0.0
        %v2676 = vmax.f32 %v2420, 0.0
        %v2677 = vmax.f32 %v2421, 0.0
        %v2678 = vmax.f32 %v2422, 0.0
        %v2679 = vmax.f32 %v2423, 0.0
        %v2680 = vmax.f32 %v2424, 0.0
        %v2681 = vmax.f32 %v2425, 0.0
        %v2682 = vmax.f32 %v2426, 0.0
        %v2683 = vmax.f32 %v2427, 0.0
        %v2684 = vmax.f32 %v2428, 0.0
        %v2685 = vmax.f32 %v2429, 0.0
        %v2686 = vmax.f32 %v2430, 0.0
        %v2687 = vmax.f32 %v2431, 0.0
        %v2688 = vmax.f32 %v2432, 0.0
        %v2689 = vmax.f32 %v2433, 0.0
        %v2690 = vmax.f32 %v2434, 0.0
        %v2691 = vmax.f32 %v2435, 0.0
        %v2692 = vmax.f32 %v2436, 0.0
        %v2693 = vmax.f32 %v2437, 0.0
        %v2694 = vmax.f32 %v2438, 0.0
        %v2695 = vmax.f32 %v2439, 0.0
        %v2696 = vmax.f32 %v2440, 0.0
        %v2697 = vmax.f32 %v2441, 0.0
        %v2698 = vmax.f32 %v2442, 0.0
        %v2699 = vmax.f32 %v2443, 0.0
        %v2700 = vmax.f32 %v2444, 0.0
        %v2701 = vmax.f32 %v2445, 0.0
        %v2702 = vmax.f32 %v2446, 0.0
        %v2703 = vmax.f32 %v2447, 0.0
        %v2704 = vmax.f32 %v2448, 0.0
        %v2705 = vmax.f32 %v2449, 0.0
        %v2706 = vmax.f32 %v2450, 0.0
        %v2707 = vmax.f32 %v2451, 0.0
        %v2708 = vmax.f32 %v2452, 0.0
        %v2709 = vmax.f32 %v2453, 0.0
        %v2710 = vmax.f32 %v2454, 0.0
        %v2711 = vmax.f32 %v2455, 0.0
        %v2712 = vmax.f32 %v2456, 0.0
        %v2713 = vmax.f32 %v2457, 0.0
        %v2714 = vmax.f32 %v2458, 0.0
        %v2715 = vmax.f32 %v2459, 0.0
        %v2716 = vmax.f32 %v2460, 0.0
        %v2717 = vmax.f32 %v2461, 0.0
        %v2718 = vmax.f32 %v2462, 0.0
        %v2719 = vmax.f32 %v2463, 0.0
        %v2720 = vmax.f32 %v2464, 0.0
        %v2721 = vmax.f32 %v2465, 0.0
        %v2722 = vmax.f32 %v2466, 0.0
        %v2723 = vmax.f32 %v2467, 0.0
        %v2724 = vmax.f32 %v2468, 0.0
        %v2725 = vmax.f32 %v2469, 0.0
        %v2726 = vmax.f32 %v2470, 0.0
        %v2727 = vmax.f32 %v2471, 0.0
        %v2728 = vmax.f32 %v2472, 0.0
        %v2729 = vmax.f32 %v2473, 0.0
        %v2730 = vmax.f32 %v2474, 0.0
        %v2731 = vmax.f32 %v2475, 0.0
        %v2732 = vmax.f32 %v2476, 0.0
        %v2733 = vmax.f32 %v2477, 0.0
        %v2734 = vmax.f32 %v2478, 0.0
        %v2735 = vmax.f32 %v2479, 0.0
        %v2736 = vmax.f32 %v2480, 0.0
        %v2737 = vmax.f32 %v2481, 0.0
        %v2738 = vmax.f32 %v2482, 0.0
        %v2739 = vmax.f32 %v2483, 0.0
        %v2740 = vmax.f32 %v2484, 0.0
        %v2741 = vmax.f32 %v2485, 0.0
        %v2742 = vmax.f32 %v2486, 0.0
        %v2743 = vmax.f32 %v2487, 0.0
        %v2744 = vmax.f32 %v2488, 0.0
        %v2745 = vmax.f32 %v2489, 0.0
        %v2746 = vmax.f32 %v2490, 0.0
        %v2747 = vmax.f32 %v2491, 0.0
        %v2748 = vmax.f32 %v2492, 0.0
        %v2749 = vmax.f32 %v2493, 0.0
        %v2750 = vmax.f32 %v2494, 0.0
        %v2751 = vmax.f32 %v2495, 0.0
        %v2752 = vmax.f32 %v2496, 0.0
        %v2753 = vmax.f32 %v2497, 0.0
        %v2754 = vmax.f32 %v2498, 0.0
        %v2755 = vmax.f32 %v2499, 0.0
        %v2756 = vmax.f32 %v2500, 0.0
        %v2757 = vmax.f32 %v2501, 0.0
        %v2758 = vmax.f32 %v2502, 0.0
        %v2759 = vmax.f32 %v2503, 0.0
        %v2760 = vmax.f32 %v2504, 0.0
        %v2761 = vmax.f32 %v2505, 0.0
        %v2762 = vmax.f32 %v2506, 0.0
        %v2763 = vmax.f32 %v2507, 0.0
        %v2764 = vmax.f32 %v2508, 0.0
        %v2765 = vmax.f32 %v2509, 0.0
        %v2766 = vmax.f32 %v2510, 0.0
        %v2767 = vmax.f32 %v2511, 0.0
        %v2768 = vmax.f32 %v2512, 0.0
        %v2769 = vmax.f32 %v2513, 0.0
        %v2770 = vmax.f32 %v2514, 0.0
        %v2771 = vmax.f32 %v2515, 0.0
        %v2772 = vmax.f32 %v2516, 0.0
        %v2773 = vmax.f32 %v2517, 0.0
        %v2774 = vmax.f32 %v2518, 0.0
        %v2775 = vmax.f32 %v2519, 0.0
        %v2776 = vmax.f32 %v2520, 0.0
        %v2777 = vmax.f32 %v2521, 0.0
        %v2778 = vmax.f32 %v2522, 0.0
        %v2779 = vmax.f32 %v2523, 0.0
        %v2780 = vmax.f32 %v2524, 0.0
        %v2781 = vmax.f32 %v2525, 0.0
        %v2782 = vmax.f32 %v2526, 0.0
        %v2783 = vmax.f32 %v2527, 0.0
        %v2784 = vmax.f32 %v2528, 0.0
        %v2785 = vmax.f32 %v2529, 0.0
        %v2786 = vmax.f32 %v2530, 0.0
        %v2787 = vmax.f32 %v2531, 0.0
        %v2788 = vmax.f32 %v2532, 0.0
        %v2789 = vmax.f32 %v2533, 0.0
        %v2790 = vmax.f32 %v2534, 0.0
        %v2791 = vmax.f32 %v2535, 0.0
        %v2792 = vmax.f32 %v2536, 0.0
        %v2793 = vmax.f32 %v2537, 0.0
        %v2794 = vmax.f32 %v2538, 0.0
        %v2795 = vmax.f32 %v2539, 0.0
        %v2796 = vmax.f32 %v2540, 0.0
        %v2797 = vmax.f32 %v2541, 0.0
        %v2798 = vmax.f32 %v2542, 0.0
        %v2799 = vmax.f32 %v2543, 0.0
        %v2800 = vmax.f32 %v2544, 0.0
        %v2801 = vmax.f32 %v2545, 0.0
        %v2802 = vpack.c.bf16 %v2554, %v2546
        %v2803 = vpack.c.bf16 %v2555, %v2547
        %v2804 = vpack.c.bf16 %v2556, %v2548
        %v2805 = vpack.c.bf16 %v2557, %v2549
        %v2806 = vpack.c.bf16 %v2558, %v2550
        %v2807 = vpack.c.bf16 %v2559, %v2551
        %v2808 = vpack.c.bf16 %v2560, %v2552
        %v2809 = vpack.c.bf16 %v2561, %v2553
        %v2810 = vpack.c.bf16 %v2570, %v2562
        %v2811 = vpack.c.bf16 %v2571, %v2563
        %v2812 = vpack.c.bf16 %v2572, %v2564
        %v2813 = vpack.c.bf16 %v2573, %v2565
        %v2814 = vpack.c.bf16 %v2574, %v2566
        %v2815 = vpack.c.bf16 %v2575, %v2567
        %v2816 = vpack.c.bf16 %v2576, %v2568
        %v2817 = vpack.c.bf16 %v2577, %v2569
        %v2818 = vpack.c.bf16 %v2586, %v2578
        %v2819 = vpack.c.bf16 %v2587, %v2579
        %v2820 = vpack.c.bf16 %v2588, %v2580
        %v2821 = vpack.c.bf16 %v2589, %v2581
        %v2822 = vpack.c.bf16 %v2590, %v2582
        %v2823 = vpack.c.bf16 %v2591, %v2583
        %v2824 = vpack.c.bf16 %v2592, %v2584
        %v2825 = vpack.c.bf16 %v2593, %v2585
        %v2826 = vpack.c.bf16 %v2602, %v2594
        %v2827 = vpack.c.bf16 %v2603, %v2595
        %v2828 = vpack.c.bf16 %v2604, %v2596
        %v2829 = vpack.c.bf16 %v2605, %v2597
        %v2830 = vpack.c.bf16 %v2606, %v2598
        %v2831 = vpack.c.bf16 %v2607, %v2599
        %v2832 = vpack.c.bf16 %v2608, %v2600
        %v2833 = vpack.c.bf16 %v2609, %v2601
        %v2834 = vpack.c.bf16 %v2618, %v2610
        %v2835 = vpack.c.bf16 %v2619, %v2611
        %v2836 = vpack.c.bf16 %v2620, %v2612
        %v2837 = vpack.c.bf16 %v2621, %v2613
        %v2838 = vpack.c.bf16 %v2622, %v2614
        %v2839 = vpack.c.bf16 %v2623, %v2615
        %v2840 = vpack.c.bf16 %v2624, %v2616
        %v2841 = vpack.c.bf16 %v2625, %v2617
        %v2842 = vpack.c.bf16 %v2634, %v2626
        %v2843 = vpack.c.bf16 %v2635, %v2627
        %v2844 = vpack.c.bf16 %v2636, %v2628
        %v2845 = vpack.c.bf16 %v2637, %v2629
        %v2846 = vpack.c.bf16 %v2638, %v2630
        %v2847 = vpack.c.bf16 %v2639, %v2631
        %v2848 = vpack.c.bf16 %v2640, %v2632
        %v2849 = vpack.c.bf16 %v2641, %v2633
        %v2850 = vpack.c.bf16 %v2650, %v2642
        %v2851 = vpack.c.bf16 %v2651, %v2643
        %v2852 = vpack.c.bf16 %v2652, %v2644
        %v2853 = vpack.c.bf16 %v2653, %v2645
        %v2854 = vpack.c.bf16 %v2654, %v2646
        %v2855 = vpack.c.bf16 %v2655, %v2647
        %v2856 = vpack.c.bf16 %v2656, %v2648
        %v2857 = vpack.c.bf16 %v2657, %v2649
        %v2858 = vpack.c.bf16 %v2666, %v2658
        %v2859 = vpack.c.bf16 %v2667, %v2659
        %v2860 = vpack.c.bf16 %v2668, %v2660
        %v2861 = vpack.c.bf16 %v2669, %v2661
        %v2862 = vpack.c.bf16 %v2670, %v2662
        %v2863 = vpack.c.bf16 %v2671, %v2663
        %v2864 = vpack.c.bf16 %v2672, %v2664
        %v2865 = vpack.c.bf16 %v2673, %v2665
        %v2866 = vpack.c.bf16 %v2682, %v2674
        %v2867 = vpack.c.bf16 %v2683, %v2675
        %v2868 = vpack.c.bf16 %v2684, %v2676
        %v2869 = vpack.c.bf16 %v2685, %v2677
        %v2870 = vpack.c.bf16 %v2686, %v2678
        %v2871 = vpack.c.bf16 %v2687, %v2679
        %v2872 = vpack.c.bf16 %v2688, %v2680
        %v2873 = vpack.c.bf16 %v2689, %v2681
        %v2874 = vpack.c.bf16 %v2698, %v2690
        %v2875 = vpack.c.bf16 %v2699, %v2691
        %v2876 = vpack.c.bf16 %v2700, %v2692
        %v2877 = vpack.c.bf16 %v2701, %v2693
        %v2878 = vpack.c.bf16 %v2702, %v2694
        %v2879 = vpack.c.bf16 %v2703, %v2695
        %v2880 = vpack.c.bf16 %v2704, %v2696
        %v2881 = vpack.c.bf16 %v2705, %v2697
        %v2882 = vpack.c.bf16 %v2714, %v2706
        %v2883 = vpack.c.bf16 %v2715, %v2707
        %v2884 = vpack.c.bf16 %v2716, %v2708
        %v2885 = vpack.c.bf16 %v2717, %v2709
        %v2886 = vpack.c.bf16 %v2718, %v2710
        %v2887 = vpack.c.bf16 %v2719, %v2711
        %v2888 = vpack.c.bf16 %v2720, %v2712
        %v2889 = vpack.c.bf16 %v2721, %v2713
        %v2890 = vpack.c.bf16 %v2730, %v2722
        %v2891 = vpack.c.bf16 %v2731, %v2723
        %v2892 = vpack.c.bf16 %v2732, %v2724
        %v2893 = vpack.c.bf16 %v2733, %v2725
        %v2894 = vpack.c.bf16 %v2734, %v2726
        %v2895 = vpack.c.bf16 %v2735, %v2727
        %v2896 = vpack.c.bf16 %v2736, %v2728
        %v2897 = vpack.c.bf16 %v2737, %v2729
        %v2898 = vpack.c.bf16 %v2746, %v2738
        %v2899 = vpack.c.bf16 %v2747, %v2739
        %v2900 = vpack.c.bf16 %v2748, %v2740
        %v2901 = vpack.c.bf16 %v2749, %v2741
        %v2902 = vpack.c.bf16 %v2750, %v2742
        %v2903 = vpack.c.bf16 %v2751, %v2743
        %v2904 = vpack.c.bf16 %v2752, %v2744
        %v2905 = vpack.c.bf16 %v2753, %v2745
        %v2906 = vpack.c.bf16 %v2762, %v2754
        %v2907 = vpack.c.bf16 %v2763, %v2755
        %v2908 = vpack.c.bf16 %v2764, %v2756
        %v2909 = vpack.c.bf16 %v2765, %v2757
        %v2910 = vpack.c.bf16 %v2766, %v2758
        %v2911 = vpack.c.bf16 %v2767, %v2759
        %v2912 = vpack.c.bf16 %v2768, %v2760
        %v2913 = vpack.c.bf16 %v2769, %v2761
        %v2914 = vpack.c.bf16 %v2778, %v2770
        %v2915 = vpack.c.bf16 %v2779, %v2771
        %v2916 = vpack.c.bf16 %v2780, %v2772
        %v2917 = vpack.c.bf16 %v2781, %v2773
        %v2918 = vpack.c.bf16 %v2782, %v2774
        %v2919 = vpack.c.bf16 %v2783, %v2775
        %v2920 = vpack.c.bf16 %v2784, %v2776
        %v2921 = vpack.c.bf16 %v2785, %v2777
        %v2922 = vpack.c.bf16 %v2794, %v2786
        %v2923 = vpack.c.bf16 %v2795, %v2787
        %v2924 = vpack.c.bf16 %v2796, %v2788
        %v2925 = vpack.c.bf16 %v2797, %v2789
        %v2926 = vpack.c.bf16 %v2798, %v2790
        %v2927 = vpack.c.bf16 %v2799, %v2791
        %v2928 = vpack.c.bf16 %v2800, %v2792
        %v2929 = vpack.c.bf16 %v2801, %v2793
        %v2930 = vld [vmem:[#allocation3] sm:$0xff]
        %v2931 = vld [vmem:[#allocation3 + $0x8] sm:$0xff]
        %v2932 = vld [vmem:[#allocation3 + $0x10] sm:$0xff]
        %v2933 = vld [vmem:[#allocation3 + $0x18] sm:$0xff]
        %v2934 = vld [vmem:[#allocation3 + $0x20] sm:$0xff]
        %v2935 = vld [vmem:[#allocation3 + $0x28] sm:$0xff]
        %v2936 = vld [vmem:[#allocation3 + $0x30] sm:$0xff]
        %v2937 = vld [vmem:[#allocation3 + $0x38] sm:$0xff]
        %v2938 = vld [vmem:[#allocation3 + $0x40] sm:$0xff]
        %v2939 = vld [vmem:[#allocation3 + $0x48] sm:$0xff]
        %v2940 = vld [vmem:[#allocation3 + $0x50] sm:$0xff]
        %v2941 = vld [vmem:[#allocation3 + $0x58] sm:$0xff]
        %v2942 = vld [vmem:[#allocation3 + $0x60] sm:$0xff]
        %v2943 = vld [vmem:[#allocation3 + $0x68] sm:$0xff]
        %v2944 = vld [vmem:[#allocation3 + $0x70] sm:$0xff]
        %v2945 = vld [vmem:[#allocation3 + $0x78] sm:$0xff]
        %v2946 = vld [vmem:[#allocation3 + $0x80] sm:$0xff]
        %v2947 = vld [vmem:[#allocation3 + $0x88] sm:$0xff]
        %v2948 = vld [vmem:[#allocation3 + $0x90] sm:$0xff]
        %v2949 = vld [vmem:[#allocation3 + $0x98] sm:$0xff]
        %v2950 = vld [vmem:[#allocation3 + $0xa0] sm:$0xff]
        %v2951 = vld [vmem:[#allocation3 + $0xa8] sm:$0xff]
        %v2952 = vld [vmem:[#allocation3 + $0xb0] sm:$0xff]
        %v2953 = vld [vmem:[#allocation3 + $0xb8] sm:$0xff]
        %v2954 = vld [vmem:[#allocation3 + $0xc0] sm:$0xff]
        %v2955 = vld [vmem:[#allocation3 + $0xc8] sm:$0xff]
        %v2956 = vld [vmem:[#allocation3 + $0xd0] sm:$0xff]
        %v2957 = vld [vmem:[#allocation3 + $0xd8] sm:$0xff]
        %v2958 = vld [vmem:[#allocation3 + $0xe0] sm:$0xff]
        %v2959 = vld [vmem:[#allocation3 + $0xe8] sm:$0xff]
        %v2960 = vld [vmem:[#allocation3 + $0xf0] sm:$0xff]
        %v2961 = vld [vmem:[#allocation3 + $0xf8] sm:$0xff]
        %v2962 = vld [vmem:[#allocation3 + $0x100] sm:$0xff]
        %v2963 = vld [vmem:[#allocation3 + $0x108] sm:$0xff]
        %v2964 = vld [vmem:[#allocation3 + $0x110] sm:$0xff]
        %v2965 = vld [vmem:[#allocation3 + $0x118] sm:$0xff]
        %v2966 = vld [vmem:[#allocation3 + $0x120] sm:$0xff]
        %v2967 = vld [vmem:[#allocation3 + $0x128] sm:$0xff]
        %v2968 = vld [vmem:[#allocation3 + $0x130] sm:$0xff]
        %v2969 = vld [vmem:[#allocation3 + $0x138] sm:$0xff]
        %v2970 = vld [vmem:[#allocation3 + $0x140] sm:$0xff]
        %v2971 = vld [vmem:[#allocation3 + $0x148] sm:$0xff]
        %v2972 = vld [vmem:[#allocation3 + $0x150] sm:$0xff]
        %v2973 = vld [vmem:[#allocation3 + $0x158] sm:$0xff]
        %v2974 = vld [vmem:[#allocation3 + $0x160] sm:$0xff]
        %v2975 = vld [vmem:[#allocation3 + $0x168] sm:$0xff]
        %v2976 = vld [vmem:[#allocation3 + $0x170] sm:$0xff]
        %v2977 = vld [vmem:[#allocation3 + $0x178] sm:$0xff]
        %v2978 = vld [vmem:[#allocation3 + $0x180] sm:$0xff]
        %v2979 = vld [vmem:[#allocation3 + $0x188] sm:$0xff]
        %v2980 = vld [vmem:[#allocation3 + $0x190] sm:$0xff]
        %v2981 = vld [vmem:[#allocation3 + $0x198] sm:$0xff]
        %v2982 = vld [vmem:[#allocation3 + $0x1a0] sm:$0xff]
        %v2983 = vld [vmem:[#allocation3 + $0x1a8] sm:$0xff]
        %v2984 = vld [vmem:[#allocation3 + $0x1b0] sm:$0xff]
        %v2985 = vld [vmem:[#allocation3 + $0x1b8] sm:$0xff]
        %v2986 = vld [vmem:[#allocation3 + $0x1c0] sm:$0xff]
        %v2987 = vld [vmem:[#allocation3 + $0x1c8] sm:$0xff]
        %v2988 = vld [vmem:[#allocation3 + $0x1d0] sm:$0xff]
        %v2989 = vld [vmem:[#allocation3 + $0x1d8] sm:$0xff]
        %v2990 = vld [vmem:[#allocation3 + $0x1e0] sm:$0xff]
        %v2991 = vld [vmem:[#allocation3 + $0x1e8] sm:$0xff]
        %v2992 = vld [vmem:[#allocation3 + $0x1f0] sm:$0xff]
        %v2993 = vld [vmem:[#allocation3 + $0x1f8] sm:$0xff]
        %v2994 = vld [vmem:[#allocation3 + $0x200] sm:$0xff]
        %v2995 = vld [vmem:[#allocation3 + $0x208] sm:$0xff]
        %v2996 = vld [vmem:[#allocation3 + $0x210] sm:$0xff]
        %v2997 = vld [vmem:[#allocation3 + $0x218] sm:$0xff]
        %v2998 = vld [vmem:[#allocation3 + $0x220] sm:$0xff]
        %v2999 = vld [vmem:[#allocation3 + $0x228] sm:$0xff]
        %v3000 = vld [vmem:[#allocation3 + $0x230] sm:$0xff]
        %v3001 = vld [vmem:[#allocation3 + $0x238] sm:$0xff]
        %v3002 = vld [vmem:[#allocation3 + $0x240] sm:$0xff]
        %v3003 = vld [vmem:[#allocation3 + $0x248] sm:$0xff]
        %v3004 = vld [vmem:[#allocation3 + $0x250] sm:$0xff]
        %v3005 = vld [vmem:[#allocation3 + $0x258] sm:$0xff]
        %v3006 = vld [vmem:[#allocation3 + $0x260] sm:$0xff]
        %v3007 = vld [vmem:[#allocation3 + $0x268] sm:$0xff]
        %v3008 = vld [vmem:[#allocation3 + $0x270] sm:$0xff]
        %v3009 = vld [vmem:[#allocation3 + $0x278] sm:$0xff]
        %v3010 = vld [vmem:[#allocation3 + $0x280] sm:$0xff]
        %v3011 = vld [vmem:[#allocation3 + $0x288] sm:$0xff]
        %v3012 = vld [vmem:[#allocation3 + $0x290] sm:$0xff]
        %v3013 = vld [vmem:[#allocation3 + $0x298] sm:$0xff]
        %v3014 = vld [vmem:[#allocation3 + $0x2a0] sm:$0xff]
        %v3015 = vld [vmem:[#allocation3 + $0x2a8] sm:$0xff]
        %v3016 = vld [vmem:[#allocation3 + $0x2b0] sm:$0xff]
        %v3017 = vld [vmem:[#allocation3 + $0x2b8] sm:$0xff]
        %v3018 = vld [vmem:[#allocation3 + $0x2c0] sm:$0xff]
        %v3019 = vld [vmem:[#allocation3 + $0x2c8] sm:$0xff]
        %v3020 = vld [vmem:[#allocation3 + $0x2d0] sm:$0xff]
        %v3021 = vld [vmem:[#allocation3 + $0x2d8] sm:$0xff]
        %v3022 = vld [vmem:[#allocation3 + $0x2e0] sm:$0xff]
        %v3023 = vld [vmem:[#allocation3 + $0x2e8] sm:$0xff]
        %v3024 = vld [vmem:[#allocation3 + $0x2f0] sm:$0xff]
        %v3025 = vld [vmem:[#allocation3 + $0x2f8] sm:$0xff]
        %v3026 = vld [vmem:[#allocation3 + $0x300] sm:$0xff]
        %v3027 = vld [vmem:[#allocation3 + $0x308] sm:$0xff]
        %v3028 = vld [vmem:[#allocation3 + $0x310] sm:$0xff]
        %v3029 = vld [vmem:[#allocation3 + $0x318] sm:$0xff]
        %v3030 = vld [vmem:[#allocation3 + $0x320] sm:$0xff]
        %v3031 = vld [vmem:[#allocation3 + $0x328] sm:$0xff]
        %v3032 = vld [vmem:[#allocation3 + $0x330] sm:$0xff]
        %v3033 = vld [vmem:[#allocation3 + $0x338] sm:$0xff]
        %v3034 = vld [vmem:[#allocation3 + $0x340] sm:$0xff]
        %v3035 = vld [vmem:[#allocation3 + $0x348] sm:$0xff]
        %v3036 = vld [vmem:[#allocation3 + $0x350] sm:$0xff]
        %v3037 = vld [vmem:[#allocation3 + $0x358] sm:$0xff]
        %v3038 = vld [vmem:[#allocation3 + $0x360] sm:$0xff]
        %v3039 = vld [vmem:[#allocation3 + $0x368] sm:$0xff]
        %v3040 = vld [vmem:[#allocation3 + $0x370] sm:$0xff]
        %v3041 = vld [vmem:[#allocation3 + $0x378] sm:$0xff]
        %v3042 = vld [vmem:[#allocation3 + $0x380] sm:$0xff]
        %v3043 = vld [vmem:[#allocation3 + $0x388] sm:$0xff]
        %v3044 = vld [vmem:[#allocation3 + $0x390] sm:$0xff]
        %v3045 = vld [vmem:[#allocation3 + $0x398] sm:$0xff]
        %v3046 = vld [vmem:[#allocation3 + $0x3a0] sm:$0xff]
        %v3047 = vld [vmem:[#allocation3 + $0x3a8] sm:$0xff]
        %v3048 = vld [vmem:[#allocation3 + $0x3b0] sm:$0xff]
        %v3049 = vld [vmem:[#allocation3 + $0x3b8] sm:$0xff]
        %v3050 = vld [vmem:[#allocation3 + $0x3c0] sm:$0xff]
        %v3051 = vld [vmem:[#allocation3 + $0x3c8] sm:$0xff]
        %v3052 = vld [vmem:[#allocation3 + $0x3d0] sm:$0xff]
        %v3053 = vld [vmem:[#allocation3 + $0x3d8] sm:$0xff]
        %v3054 = vld [vmem:[#allocation3 + $0x3e0] sm:$0xff]
        %v3055 = vld [vmem:[#allocation3 + $0x3e8] sm:$0xff]
        %v3056 = vld [vmem:[#allocation3 + $0x3f0] sm:$0xff]
        %v3057 = vld [vmem:[#allocation3 + $0x3f8] sm:$0xff]
        %v3058 = vld [vmem:[%s4] sm:$0x3]
        %v3060 = vlaneseq
        %v3061 = vshrl.u32 %v3060, 7
        %v3062 = vsub.s32 0, %v3061
        %v3063 = vrot.slane %v3058, %v3062
        %v3064 = vlaneseq
        %v3065 = vshrl.u32 %v3064, 7
        %v3066 = vsub.s32 1, %v3065
        %v3067 = vrot.slane %v3058, %v3066
        %v3198 = vunpack.c.l.b16 %v2930
        %v3199 = vunpack.c.h.b16 %v2930
        %v3200 = vunpack.c.l.b16 %v2931
        %v3201 = vunpack.c.h.b16 %v2931
        %v3202 = vunpack.c.l.b16 %v2932
        %v3203 = vunpack.c.h.b16 %v2932
        %v3204 = vunpack.c.l.b16 %v2933
        %v3205 = vunpack.c.h.b16 %v2933
        %v3206 = vunpack.c.l.b16 %v2934
        %v3207 = vunpack.c.h.b16 %v2934
        %v3208 = vunpack.c.l.b16 %v2935
        %v3209 = vunpack.c.h.b16 %v2935
        %v3210 = vunpack.c.l.b16 %v2936
        %v3211 = vunpack.c.h.b16 %v2936
        %v3212 = vunpack.c.l.b16 %v2937
        %v3213 = vunpack.c.h.b16 %v2937
        %v3214 = vunpack.c.l.b16 %v2938
        %v3215 = vunpack.c.h.b16 %v2938
        %v3216 = vunpack.c.l.b16 %v2939
        %v3217 = vunpack.c.h.b16 %v2939
        %v3218 = vunpack.c.l.b16 %v2940
        %v3219 = vunpack.c.h.b16 %v2940
        %v3220 = vunpack.c.l.b16 %v2941
        %v3221 = vunpack.c.h.b16 %v2941
        %v3222 = vunpack.c.l.b16 %v2942
        %v3223 = vunpack.c.h.b16 %v2942
        %v3224 = vunpack.c.l.b16 %v2943
        %v3225 = vunpack.c.h.b16 %v2943
        %v3226 = vunpack.c.l.b16 %v2944
        %v3227 = vunpack.c.h.b16 %v2944
        %v3228 = vunpack.c.l.b16 %v2945
        %v3229 = vunpack.c.h.b16 %v2945
        %v3230 = vunpack.c.l.b16 %v2946
        %v3231 = vunpack.c.h.b16 %v2946
        %v3232 = vunpack.c.l.b16 %v2947
        %v3233 = vunpack.c.h.b16 %v2947
        %v3234 = vunpack.c.l.b16 %v2948
        %v3235 = vunpack.c.h.b16 %v2948
        %v3236 = vunpack.c.l.b16 %v2949
        %v3237 = vunpack.c.h.b16 %v2949
        %v3238 = vunpack.c.l.b16 %v2950
        %v3239 = vunpack.c.h.b16 %v2950
        %v3240 = vunpack.c.l.b16 %v2951
        %v3241 = vunpack.c.h.b16 %v2951
        %v3242 = vunpack.c.l.b16 %v2952
        %v3243 = vunpack.c.h.b16 %v2952
        %v3244 = vunpack.c.l.b16 %v2953
        %v3245 = vunpack.c.h.b16 %v2953
        %v3246 = vunpack.c.l.b16 %v2954
        %v3247 = vunpack.c.h.b16 %v2954
        %v3248 = vunpack.c.l.b16 %v2955
        %v3249 = vunpack.c.h.b16 %v2955
        %v3250 = vunpack.c.l.b16 %v2956
        %v3251 = vunpack.c.h.b16 %v2956
        %v3252 = vunpack.c.l.b16 %v2957
        %v3253 = vunpack.c.h.b16 %v2957
        %v3254 = vunpack.c.l.b16 %v2958
        %v3255 = vunpack.c.h.b16 %v2958
        %v3256 = vunpack.c.l.b16 %v2959
        %v3257 = vunpack.c.h.b16 %v2959
        %v3258 = vunpack.c.l.b16 %v2960
        %v3259 = vunpack.c.h.b16 %v2960
        %v3260 = vunpack.c.l.b16 %v2961
        %v3261 = vunpack.c.h.b16 %v2961
        %v3262 = vunpack.c.l.b16 %v2962
        %v3263 = vunpack.c.h.b16 %v2962
        %v3264 = vunpack.c.l.b16 %v2963
        %v3265 = vunpack.c.h.b16 %v2963
        %v3266 = vunpack.c.l.b16 %v2964
        %v3267 = vunpack.c.h.b16 %v2964
        %v3268 = vunpack.c.l.b16 %v2965
        %v3269 = vunpack.c.h.b16 %v2965
        %v3270 = vunpack.c.l.b16 %v2966
        %v3271 = vunpack.c.h.b16 %v2966
        %v3272 = vunpack.c.l.b16 %v2967
        %v3273 = vunpack.c.h.b16 %v2967
        %v3274 = vunpack.c.l.b16 %v2968
        %v3275 = vunpack.c.h.b16 %v2968
        %v3276 = vunpack.c.l.b16 %v2969
        %v3277 = vunpack.c.h.b16 %v2969
        %v3278 = vunpack.c.l.b16 %v2970
        %v3279 = vunpack.c.h.b16 %v2970
        %v3280 = vunpack.c.l.b16 %v2971
        %v3281 = vunpack.c.h.b16 %v2971
        %v3282 = vunpack.c.l.b16 %v2972
        %v3283 = vunpack.c.h.b16 %v2972
        %v3284 = vunpack.c.l.b16 %v2973
        %v3285 = vunpack.c.h.b16 %v2973
        %v3286 = vunpack.c.l.b16 %v2974
        %v3287 = vunpack.c.h.b16 %v2974
        %v3288 = vunpack.c.l.b16 %v2975
        %v3289 = vunpack.c.h.b16 %v2975
        %v3290 = vunpack.c.l.b16 %v2976
        %v3291 = vunpack.c.h.b16 %v2976
        %v3292 = vunpack.c.l.b16 %v2977
        %v3293 = vunpack.c.h.b16 %v2977
        %v3294 = vunpack.c.l.b16 %v2978
        %v3295 = vunpack.c.h.b16 %v2978
        %v3296 = vunpack.c.l.b16 %v2979
        %v3297 = vunpack.c.h.b16 %v2979
        %v3298 = vunpack.c.l.b16 %v2980
        %v3299 = vunpack.c.h.b16 %v2980
        %v3300 = vunpack.c.l.b16 %v2981
        %v3301 = vunpack.c.h.b16 %v2981
        %v3302 = vunpack.c.l.b16 %v2982
        %v3303 = vunpack.c.h.b16 %v2982
        %v3304 = vunpack.c.l.b16 %v2983
        %v3305 = vunpack.c.h.b16 %v2983
        %v3306 = vunpack.c.l.b16 %v2984
        %v3307 = vunpack.c.h.b16 %v2984
        %v3308 = vunpack.c.l.b16 %v2985
        %v3309 = vunpack.c.h.b16 %v2985
        %v3310 = vunpack.c.l.b16 %v2986
        %v3311 = vunpack.c.h.b16 %v2986
        %v3312 = vunpack.c.l.b16 %v2987
        %v3313 = vunpack.c.h.b16 %v2987
        %v3314 = vunpack.c.l.b16 %v2988
        %v3315 = vunpack.c.h.b16 %v2988
        %v3316 = vunpack.c.l.b16 %v2989
        %v3317 = vunpack.c.h.b16 %v2989
        %v3318 = vunpack.c.l.b16 %v2990
        %v3319 = vunpack.c.h.b16 %v2990
        %v3320 = vunpack.c.l.b16 %v2991
        %v3321 = vunpack.c.h.b16 %v2991
        %v3322 = vunpack.c.l.b16 %v2992
        %v3323 = vunpack.c.h.b16 %v2992
        %v3324 = vunpack.c.l.b16 %v2993
        %v3325 = vunpack.c.h.b16 %v2993
        %v3326 = vunpack.c.l.b16 %v2994
        %v3327 = vunpack.c.h.b16 %v2994
        %v3328 = vunpack.c.l.b16 %v2995
        %v3329 = vunpack.c.h.b16 %v2995
        %v3330 = vunpack.c.l.b16 %v2996
        %v3331 = vunpack.c.h.b16 %v2996
        %v3332 = vunpack.c.l.b16 %v2997
        %v3333 = vunpack.c.h.b16 %v2997
        %v3334 = vunpack.c.l.b16 %v2998
        %v3335 = vunpack.c.h.b16 %v2998
        %v3336 = vunpack.c.l.b16 %v2999
        %v3337 = vunpack.c.h.b16 %v2999
        %v3338 = vunpack.c.l.b16 %v3000
        %v3339 = vunpack.c.h.b16 %v3000
        %v3340 = vunpack.c.l.b16 %v3001
        %v3341 = vunpack.c.h.b16 %v3001
        %v3342 = vunpack.c.l.b16 %v3002
        %v3343 = vunpack.c.h.b16 %v3002
        %v3344 = vunpack.c.l.b16 %v3003
        %v3345 = vunpack.c.h.b16 %v3003
        %v3346 = vunpack.c.l.b16 %v3004
        %v3347 = vunpack.c.h.b16 %v3004
        %v3348 = vunpack.c.l.b16 %v3005
        %v3349 = vunpack.c.h.b16 %v3005
        %v3350 = vunpack.c.l.b16 %v3006
        %v3351 = vunpack.c.h.b16 %v3006
        %v3352 = vunpack.c.l.b16 %v3007
        %v3353 = vunpack.c.h.b16 %v3007
        %v3354 = vunpack.c.l.b16 %v3008
        %v3355 = vunpack.c.h.b16 %v3008
        %v3356 = vunpack.c.l.b16 %v3009
        %v3357 = vunpack.c.h.b16 %v3009
        %v3358 = vunpack.c.l.b16 %v3010
        %v3359 = vunpack.c.h.b16 %v3010
        %v3360 = vunpack.c.l.b16 %v3011
        %v3361 = vunpack.c.h.b16 %v3011
        %v3362 = vunpack.c.l.b16 %v3012
        %v3363 = vunpack.c.h.b16 %v3012
        %v3364 = vunpack.c.l.b16 %v3013
        %v3365 = vunpack.c.h.b16 %v3013
        %v3366 = vunpack.c.l.b16 %v3014
        %v3367 = vunpack.c.h.b16 %v3014
        %v3368 = vunpack.c.l.b16 %v3015
        %v3369 = vunpack.c.h.b16 %v3015
        %v3370 = vunpack.c.l.b16 %v3016
        %v3371 = vunpack.c.h.b16 %v3016
        %v3372 = vunpack.c.l.b16 %v3017
        %v3373 = vunpack.c.h.b16 %v3017
        %v3374 = vunpack.c.l.b16 %v3018
        %v3375 = vunpack.c.h.b16 %v3018
        %v3376 = vunpack.c.l.b16 %v3019
        %v3377 = vunpack.c.h.b16 %v3019
        %v3378 = vunpack.c.l.b16 %v3020
        %v3379 = vunpack.c.h.b16 %v3020
        %v3380 = vunpack.c.l.b16 %v3021
        %v3381 = vunpack.c.h.b16 %v3021
        %v3382 = vunpack.c.l.b16 %v3022
        %v3383 = vunpack.c.h.b16 %v3022
        %v3384 = vunpack.c.l.b16 %v3023
        %v3385 = vunpack.c.h.b16 %v3023
        %v3386 = vunpack.c.l.b16 %v3024
        %v3387 = vunpack.c.h.b16 %v3024
        %v3388 = vunpack.c.l.b16 %v3025
        %v3389 = vunpack.c.h.b16 %v3025
        %v3390 = vunpack.c.l.b16 %v3026
        %v3391 = vunpack.c.h.b16 %v3026
        %v3392 = vunpack.c.l.b16 %v3027
        %v3393 = vunpack.c.h.b16 %v3027
        %v3394 = vunpack.c.l.b16 %v3028
        %v3395 = vunpack.c.h.b16 %v3028
        %v3396 = vunpack.c.l.b16 %v3029
        %v3397 = vunpack.c.h.b16 %v3029
        %v3398 = vunpack.c.l.b16 %v3030
        %v3399 = vunpack.c.h.b16 %v3030
        %v3400 = vunpack.c.l.b16 %v3031
        %v3401 = vunpack.c.h.b16 %v3031
        %v3402 = vunpack.c.l.b16 %v3032
        %v3403 = vunpack.c.h.b16 %v3032
        %v3404 = vunpack.c.l.b16 %v3033
        %v3405 = vunpack.c.h.b16 %v3033
        %v3406 = vunpack.c.l.b16 %v3034
        %v3407 = vunpack.c.h.b16 %v3034
        %v3408 = vunpack.c.l.b16 %v3035
        %v3409 = vunpack.c.h.b16 %v3035
        %v3410 = vunpack.c.l.b16 %v3036
        %v3411 = vunpack.c.h.b16 %v3036
        %v3412 = vunpack.c.l.b16 %v3037
        %v3413 = vunpack.c.h.b16 %v3037
        %v3414 = vunpack.c.l.b16 %v3038
        %v3415 = vunpack.c.h.b16 %v3038
        %v3416 = vunpack.c.l.b16 %v3039
        %v3417 = vunpack.c.h.b16 %v3039
        %v3418 = vunpack.c.l.b16 %v3040
        %v3419 = vunpack.c.h.b16 %v3040
        %v3420 = vunpack.c.l.b16 %v3041
        %v3421 = vunpack.c.h.b16 %v3041
        %v3422 = vunpack.c.l.b16 %v3042
        %v3423 = vunpack.c.h.b16 %v3042
        %v3424 = vunpack.c.l.b16 %v3043
        %v3425 = vunpack.c.h.b16 %v3043
        %v3426 = vunpack.c.l.b16 %v3044
        %v3427 = vunpack.c.h.b16 %v3044
        %v3428 = vunpack.c.l.b16 %v3045
        %v3429 = vunpack.c.h.b16 %v3045
        %v3430 = vunpack.c.l.b16 %v3046
        %v3431 = vunpack.c.h.b16 %v3046
        %v3432 = vunpack.c.l.b16 %v3047
        %v3433 = vunpack.c.h.b16 %v3047
        %v3434 = vunpack.c.l.b16 %v3048
        %v3435 = vunpack.c.h.b16 %v3048
        %v3436 = vunpack.c.l.b16 %v3049
        %v3437 = vunpack.c.h.b16 %v3049
        %v3438 = vunpack.c.l.b16 %v3050
        %v3439 = vunpack.c.h.b16 %v3050
        %v3440 = vunpack.c.l.b16 %v3051
        %v3441 = vunpack.c.h.b16 %v3051
        %v3442 = vunpack.c.l.b16 %v3052
        %v3443 = vunpack.c.h.b16 %v3052
        %v3444 = vunpack.c.l.b16 %v3053
        %v3445 = vunpack.c.h.b16 %v3053
        %v3446 = vunpack.c.l.b16 %v3054
        %v3447 = vunpack.c.h.b16 %v3054
        %v3448 = vunpack.c.l.b16 %v3055
        %v3449 = vunpack.c.h.b16 %v3055
        %v3450 = vunpack.c.l.b16 %v3056
        %v3451 = vunpack.c.h.b16 %v3056
        %v3452 = vunpack.c.l.b16 %v3057
        %v3453 = vunpack.c.h.b16 %v3057
        %v3454 = vpack.c.b16 %v3200, %v3198
        %v3455 = vpack.c.b16 %v3201, %v3199
        %v3456 = vpack.c.b16 %v3204, %v3202
        %v3457 = vpack.c.b16 %v3205, %v3203
        %v3458 = vpack.c.b16 %v3208, %v3206
        %v3459 = vpack.c.b16 %v3209, %v3207
        %v3460 = vpack.c.b16 %v3212, %v3210
        %v3461 = vpack.c.b16 %v3213, %v3211
        %v3462 = vpack.c.b16 %v3216, %v3214
        %v3463 = vpack.c.b16 %v3217, %v3215
        %v3464 = vpack.c.b16 %v3220, %v3218
        %v3465 = vpack.c.b16 %v3221, %v3219
        %v3466 = vpack.c.b16 %v3224, %v3222
        %v3467 = vpack.c.b16 %v3225, %v3223
        %v3468 = vpack.c.b16 %v3228, %v3226
        %v3469 = vpack.c.b16 %v3229, %v3227
        %v3470 = vpack.c.b16 %v3232, %v3230
        %v3471 = vpack.c.b16 %v3233, %v3231
        %v3472 = vpack.c.b16 %v3236, %v3234
        %v3473 = vpack.c.b16 %v3237, %v3235
        %v3474 = vpack.c.b16 %v3240, %v3238
        %v3475 = vpack.c.b16 %v3241, %v3239
        %v3476 = vpack.c.b16 %v3244, %v3242
        %v3477 = vpack.c.b16 %v3245, %v3243
        %v3478 = vpack.c.b16 %v3248, %v3246
        %v3479 = vpack.c.b16 %v3249, %v3247
        %v3480 = vpack.c.b16 %v3252, %v3250
        %v3481 = vpack.c.b16 %v3253, %v3251
        %v3482 = vpack.c.b16 %v3256, %v3254
        %v3483 = vpack.c.b16 %v3257, %v3255
        %v3484 = vpack.c.b16 %v3260, %v3258
        %v3485 = vpack.c.b16 %v3261, %v3259
        %v3486 = vpack.c.b16 %v3264, %v3262
        %v3487 = vpack.c.b16 %v3265, %v3263
        %v3488 = vpack.c.b16 %v3268, %v3266
        %v3489 = vpack.c.b16 %v3269, %v3267
        %v3490 = vpack.c.b16 %v3272, %v3270
        %v3491 = vpack.c.b16 %v3273, %v3271
        %v3492 = vpack.c.b16 %v3276, %v3274
        %v3493 = vpack.c.b16 %v3277, %v3275
        %v3494 = vpack.c.b16 %v3280, %v3278
        %v3495 = vpack.c.b16 %v3281, %v3279
        %v3496 = vpack.c.b16 %v3284, %v3282
        %v3497 = vpack.c.b16 %v3285, %v3283
        %v3498 = vpack.c.b16 %v3288, %v3286
        %v3499 = vpack.c.b16 %v3289, %v3287
        %v3500 = vpack.c.b16 %v3292, %v3290
        %v3501 = vpack.c.b16 %v3293, %v3291
        %v3502 = vpack.c.b16 %v3296, %v3294
        %v3503 = vpack.c.b16 %v3297, %v3295
        %v3504 = vpack.c.b16 %v3300, %v3298
        %v3505 = vpack.c.b16 %v3301, %v3299
        %v3506 = vpack.c.b16 %v3304, %v3302
        %v3507 = vpack.c.b16 %v3305, %v3303
        %v3508 = vpack.c.b16 %v3308, %v3306
        %v3509 = vpack.c.b16 %v3309, %v3307
        %v3510 = vpack.c.b16 %v3312, %v3310
        %v3511 = vpack.c.b16 %v3313, %v3311
        %v3512 = vpack.c.b16 %v3316, %v3314
        %v3513 = vpack.c.b16 %v3317, %v3315
        %v3514 = vpack.c.b16 %v3320, %v3318
        %v3515 = vpack.c.b16 %v3321, %v3319
        %v3516 = vpack.c.b16 %v3324, %v3322
        %v3517 = vpack.c.b16 %v3325, %v3323
        %v3518 = vpack.c.b16 %v3328, %v3326
        %v3519 = vpack.c.b16 %v3329, %v3327
        %v3520 = vpack.c.b16 %v3332, %v3330
        %v3521 = vpack.c.b16 %v3333, %v3331
        %v3522 = vpack.c.b16 %v3336, %v3334
        %v3523 = vpack.c.b16 %v3337, %v3335
        %v3524 = vpack.c.b16 %v3340, %v3338
        %v3525 = vpack.c.b16 %v3341, %v3339
        %v3526 = vpack.c.b16 %v3344, %v3342
        %v3527 = vpack.c.b16 %v3345, %v3343
        %v3528 = vpack.c.b16 %v3348, %v3346
        %v3529 = vpack.c.b16 %v3349, %v3347
        %v3530 = vpack.c.b16 %v3352, %v3350
        %v3531 = vpack.c.b16 %v3353, %v3351
        %v3532 = vpack.c.b16 %v3356, %v3354
        %v3533 = vpack.c.b16 %v3357, %v3355
        %v3534 = vpack.c.b16 %v3360, %v3358
        %v3535 = vpack.c.b16 %v3361, %v3359
        %v3536 = vpack.c.b16 %v3364, %v3362
        %v3537 = vpack.c.b16 %v3365, %v3363
        %v3538 = vpack.c.b16 %v3368, %v3366
        %v3539 = vpack.c.b16 %v3369, %v3367
        %v3540 = vpack.c.b16 %v3372, %v3370
        %v3541 = vpack.c.b16 %v3373, %v3371
        %v3542 = vpack.c.b16 %v3376, %v3374
        %v3543 = vpack.c.b16 %v3377, %v3375
        %v3544 = vpack.c.b16 %v3380, %v3378
        %v3545 = vpack.c.b16 %v3381, %v3379
        %v3546 = vpack.c.b16 %v3384, %v3382
        %v3547 = vpack.c.b16 %v3385, %v3383
        %v3548 = vpack.c.b16 %v3388, %v3386
        %v3549 = vpack.c.b16 %v3389, %v3387
        %v3550 = vpack.c.b16 %v3392, %v3390
        %v3551 = vpack.c.b16 %v3393, %v3391
        %v3552 = vpack.c.b16 %v3396, %v3394
        %v3553 = vpack.c.b16 %v3397, %v3395
        %v3554 = vpack.c.b16 %v3400, %v3398
        %v3555 = vpack.c.b16 %v3401, %v3399
        %v3556 = vpack.c.b16 %v3404, %v3402
        %v3557 = vpack.c.b16 %v3405, %v3403
        %v3558 = vpack.c.b16 %v3408, %v3406
        %v3559 = vpack.c.b16 %v3409, %v3407
        %v3560 = vpack.c.b16 %v3412, %v3410
        %v3561 = vpack.c.b16 %v3413, %v3411
        %v3562 = vpack.c.b16 %v3416, %v3414
        %v3563 = vpack.c.b16 %v3417, %v3415
        %v3564 = vpack.c.b16 %v3420, %v3418
        %v3565 = vpack.c.b16 %v3421, %v3419
        %v3566 = vpack.c.b16 %v3424, %v3422
        %v3567 = vpack.c.b16 %v3425, %v3423
        %v3568 = vpack.c.b16 %v3428, %v3426
        %v3569 = vpack.c.b16 %v3429, %v3427
        %v3570 = vpack.c.b16 %v3432, %v3430
        %v3571 = vpack.c.b16 %v3433, %v3431
        %v3572 = vpack.c.b16 %v3436, %v3434
        %v3573 = vpack.c.b16 %v3437, %v3435
        %v3574 = vpack.c.b16 %v3440, %v3438
        %v3575 = vpack.c.b16 %v3441, %v3439
        %v3576 = vpack.c.b16 %v3444, %v3442
        %v3577 = vpack.c.b16 %v3445, %v3443
        %v3578 = vpack.c.b16 %v3448, %v3446
        %v3579 = vpack.c.b16 %v3449, %v3447
        %v3580 = vpack.c.b16 %v3452, %v3450
        %v3581 = vpack.c.b16 %v3453, %v3451
        %3710 = vmatprep.subr.bf16.mxu0 %v3455
        %3711 = vmatpush1.bf16.msra.mxu0 %v3454
        %3712 = vmatprep.subr.bf16.mxu0 %v3457
        %3713 = vmatpush1.bf16.msra.mxu0 %v3456
        %3714 = vmatprep.subr.bf16.mxu0 %v3459
        %3715 = vmatpush1.bf16.msra.mxu0 %v3458
        %3716 = vmatprep.subr.bf16.mxu0 %v3461
        %3717 = vmatpush1.bf16.msra.mxu0 %v3460
        %3718 = vmatprep.subr.bf16.mxu0 %v3463
        %3719 = vmatpush1.bf16.msra.mxu0 %v3462
        %3720 = vmatprep.subr.bf16.mxu0 %v3465
        %3721 = vmatpush1.bf16.msra.mxu0 %v3464
        %3722 = vmatprep.subr.bf16.mxu0 %v3467
        %3723 = vmatpush1.bf16.msra.mxu0 %v3466
        %3724 = vmatprep.subr.bf16.mxu0 %v3469
        %3725 = vmatpush1.bf16.msra.mxu0 %v3468
        %3726 = vmatprep.subr.bf16.mxu0 %v3471
        %3727 = vmatpush1.bf16.msra.mxu0 %v3470
        %3728 = vmatprep.subr.bf16.mxu0 %v3473
        %3729 = vmatpush1.bf16.msra.mxu0 %v3472
        %3730 = vmatprep.subr.bf16.mxu0 %v3475
        %3731 = vmatpush1.bf16.msra.mxu0 %v3474
        %3732 = vmatprep.subr.bf16.mxu0 %v3477
        %3733 = vmatpush1.bf16.msra.mxu0 %v3476
        %3734 = vmatprep.subr.bf16.mxu0 %v3479
        %3735 = vmatpush1.bf16.msra.mxu0 %v3478
        %3736 = vmatprep.subr.bf16.mxu0 %v3481
        %3737 = vmatpush1.bf16.msra.mxu0 %v3480
        %3738 = vmatprep.subr.bf16.mxu0 %v3483
        %3739 = vmatpush1.bf16.msra.mxu0 %v3482
        %3740 = vmatprep.subr.bf16.mxu0 %v3485
        %3741 = vmatpush1.bf16.msra.mxu0 %v3484
        %3742 = vmatprep.mubr.bf16.mxu0 %v2803
        %3743 = vmatmul.mubr.bf16.gmra.mrb[0].mxu0 %v2802
        %v3744 = vpop.f32.mrb[0].mxu0
        %v3745 = vadd.f32 %v3063, %v3744
        %v3746 = vpop.f32.mrb[0].mxu0
        %v3747 = vadd.f32 %v3067, %v3746
        %v3748 = vpop.f32.mrb[0].mxu0
        %v3749 = vadd.f32 %v3063, %v3748
        %v3750 = vpop.f32.mrb[0].mxu0
        %v3751 = vadd.f32 %v3067, %v3750
        %3752 = vmatprep.mubr.bf16.mxu0 %v2811
        %3753 = vmatmul.mubr.bf16.gmra.mrb[0].mxu0 %v2810
        %v3754 = vpop.f32.mrb[0].mxu0
        %v3755 = vadd.f32 %v3063, %v3754
        %v3756 = vpop.f32.mrb[0].mxu0
        %v3757 = vadd.f32 %v3067, %v3756
        %v3758 = vpop.f32.mrb[0].mxu0
        %v3759 = vadd.f32 %v3063, %v3758
        %v3760 = vpop.f32.mrb[0].mxu0
        %v3761 = vadd.f32 %v3067, %v3760
        %3762 = vmatprep.mubr.bf16.mxu0 %v2819
        %3763 = vmatmul.mubr.bf16.gmra.mrb[0].mxu0 %v2818
        %v3764 = vpop.f32.mrb[0].mxu0
        %v3765 = vadd.f32 %v3063, %v3764
        %v3766 = vpop.f32.mrb[0].mxu0
        %v3767 = vadd.f32 %v3067, %v3766
        %v3768 = vpop.f32.mrb[0].mxu0
        %v3769 = vadd.f32 %v3063, %v3768
        %v3770 = vpop.f32.mrb[0].mxu0
        %v3771 = vadd.f32 %v3067, %v3770
        %3772 = vmatprep.mubr.bf16.mxu0 %v2827
        %3773 = vmatmul.mubr.bf16.gmra.mrb[0].mxu0 %v2826
        %v3774 = vpop.f32.mrb[0].mxu0
        %v3775 = vadd.f32 %v3063, %v3774
        %v3776 = vpop.f32.mrb[0].mxu0
        %v3777 = vadd.f32 %v3067, %v3776
        %v3778 = vpop.f32.mrb[0].mxu0
        %v3779 = vadd.f32 %v3063, %v3778
        %v3780 = vpop.f32.mrb[0].mxu0
        %v3781 = vadd.f32 %v3067, %v3780
        %3782 = vmatprep.mubr.bf16.mxu0 %v2835
        %3783 = vmatmul.mubr.bf16.gmra.mrb[0].mxu0 %v2834
        %v3784 = vpop.f32.mrb[0].mxu0
        %v3785 = vadd.f32 %v3063, %v3784
        %v3786 = vpop.f32.mrb[0].mxu0
        %v3787 = vadd.f32 %v3067, %v3786
        %v3788 = vpop.f32.mrb[0].mxu0
        %v3789 = vadd.f32 %v3063, %v3788
        %v3790 = vpop.f32.mrb[0].mxu0
        %v3791 = vadd.f32 %v3067, %v3790
        %3792 = vmatprep.mubr.bf16.mxu0 %v2843
        %3793 = vmatmul.mubr.bf16.gmra.mrb[0].mxu0 %v2842
        %v3794 = vpop.f32.mrb[0].mxu0
        %v3795 = vadd.f32 %v3063, %v3794
        %v3796 = vpop.f32.mrb[0].mxu0
        %v3797 = vadd.f32 %v3067, %v3796
        %v3798 = vpop.f32.mrb[0].mxu0
        %v3799 = vadd.f32 %v3063, %v3798
        %v3800 = vpop.f32.mrb[0].mxu0
        %v3801 = vadd.f32 %v3067, %v3800
        %3802 = vmatprep.mubr.bf16.mxu0 %v2851
        %3803 = vmatmul.mubr.bf16.gmra.mrb[0].mxu0 %v2850
        %v3804 = vpop.f32.mrb[0].mxu0
        %v3805 = vadd.f32 %v3063, %v3804
        %v3806 = vpop.f32.mrb[0].mxu0
        %v3807 = vadd.f32 %v3067, %v3806
        %v3808 = vpop.f32.mrb[0].mxu0
        %v3809 = vadd.f32 %v3063, %v3808
        %v3810 = vpop.f32.mrb[0].mxu0
        %v3811 = vadd.f32 %v3067, %v3810
        %3812 = vmatprep.mubr.bf16.mxu0 %v2859
        %3813 = vmatmul.mubr.bf16.gmra.mrb[0].mxu0 %v2858
        %v3814 = vpop.f32.mrb[0].mxu0
        %v3815 = vadd.f32 %v3063, %v3814
        %v3816 = vpop.f32.mrb[0].mxu0
        %v3817 = vadd.f32 %v3067, %v3816
        %v3818 = vpop.f32.mrb[0].mxu0
        %v3819 = vadd.f32 %v3063, %v3818
        %v3820 = vpop.f32.mrb[0].mxu0
        %v3821 = vadd.f32 %v3067, %v3820
        %3822 = vmatprep.mubr.bf16.mxu0 %v2867
        %3823 = vmatmul.mubr.bf16.gmra.mrb[0].mxu0 %v2866
        %v3824 = vpop.f32.mrb[0].mxu0
        %v3825 = vadd.f32 %v3063, %v3824
        %v3826 = vpop.f32.mrb[0].mxu0
        %v3827 = vadd.f32 %v3067, %v3826
        %v3828 = vpop.f32.mrb[0].mxu0
        %v3829 = vadd.f32 %v3063, %v3828
        %v3830 = vpop.f32.mrb[0].mxu0
        %v3831 = vadd.f32 %v3067, %v3830
        %3832 = vmatprep.mubr.bf16.mxu0 %v2875
        %3833 = vmatmul.mubr.bf16.gmra.mrb[0].mxu0 %v2874
        %v3834 = vpop.f32.mrb[0].mxu0
        %v3835 = vadd.f32 %v3063, %v3834
        %v3836 = vpop.f32.mrb[0].mxu0
        %v3837 = vadd.f32 %v3067, %v3836
        %v3838 = vpop.f32.mrb[0].mxu0
        %v3839 = vadd.f32 %v3063, %v3838
        %v3840 = vpop.f32.mrb[0].mxu0
        %v3841 = vadd.f32 %v3067, %v3840
        %3842 = vmatprep.mubr.bf16.mxu0 %v2883
        %3843 = vmatmul.mubr.bf16.gmra.mrb[0].mxu0 %v2882
        %v3844 = vpop.f32.mrb[0].mxu0
        %v3845 = vadd.f32 %v3063, %v3844
        %v3846 = vpop.f32.mrb[0].mxu0
        %v3847 = vadd.f32 %v3067, %v3846
        %v3848 = vpop.f32.mrb[0].mxu0
        %v3849 = vadd.f32 %v3063, %v3848
        %v3850 = vpop.f32.mrb[0].mxu0
        %v3851 = vadd.f32 %v3067, %v3850
        %3852 = vmatprep.mubr.bf16.mxu0 %v2891
        %3853 = vmatmul.mubr.bf16.gmra.mrb[0].mxu0 %v2890
        %v3854 = vpop.f32.mrb[0].mxu0
        %v3855 = vadd.f32 %v3063, %v3854
        %v3856 = vpop.f32.mrb[0].mxu0
        %v3857 = vadd.f32 %v3067, %v3856
        %v3858 = vpop.f32.mrb[0].mxu0
        %v3859 = vadd.f32 %v3063, %v3858
        %v3860 = vpop.f32.mrb[0].mxu0
        %v3861 = vadd.f32 %v3067, %v3860
        %3862 = vmatprep.mubr.bf16.mxu0 %v2899
        %3863 = vmatmul.mubr.bf16.gmra.mrb[0].mxu0 %v2898
        %v3864 = vpop.f32.mrb[0].mxu0
        %v3865 = vadd.f32 %v3063, %v3864
        %v3866 = vpop.f32.mrb[0].mxu0
        %v3867 = vadd.f32 %v3067, %v3866
        %v3868 = vpop.f32.mrb[0].mxu0
        %v3869 = vadd.f32 %v3063, %v3868
        %v3870 = vpop.f32.mrb[0].mxu0
        %v3871 = vadd.f32 %v3067, %v3870
        %3872 = vmatprep.mubr.bf16.mxu0 %v2907
        %3873 = vmatmul.mubr.bf16.gmra.mrb[0].mxu0 %v2906
        %v3874 = vpop.f32.mrb[0].mxu0
        %v3875 = vadd.f32 %v3063, %v3874
        %v3876 = vpop.f32.mrb[0].mxu0
        %v3877 = vadd.f32 %v3067, %v3876
        %v3878 = vpop.f32.mrb[0].mxu0
        %v3879 = vadd.f32 %v3063, %v3878
        %v3880 = vpop.f32.mrb[0].mxu0
        %v3881 = vadd.f32 %v3067, %v3880
        %3882 = vmatprep.mubr.bf16.mxu0 %v2915
        %3883 = vmatmul.mubr.bf16.gmra.mrb[0].mxu0 %v2914
        %v3884 = vpop.f32.mrb[0].mxu0
        %v3885 = vadd.f32 %v3063, %v3884
        %v3886 = vpop.f32.mrb[0].mxu0
        %v3887 = vadd.f32 %v3067, %v3886
        %v3888 = vpop.f32.mrb[0].mxu0
        %v3889 = vadd.f32 %v3063, %v3888
        %v3890 = vpop.f32.mrb[0].mxu0
        %v3891 = vadd.f32 %v3067, %v3890
        %3892 = vmatprep.mubr.bf16.mxu0 %v2923
        %3893 = vmatmul.mubr.bf16.gmra.mrb[0].mxu0 %v2922
        %v3894 = vpop.f32.mrb[0].mxu0
        %v3895 = vadd.f32 %v3063, %v3894
        %v3896 = vpop.f32.mrb[0].mxu0
        %v3897 = vadd.f32 %v3067, %v3896
        %v3898 = vpop.f32.mrb[0].mxu0
        %v3899 = vadd.f32 %v3063, %v3898
        %v3900 = vpop.f32.mrb[0].mxu0
        %v3901 = vadd.f32 %v3067, %v3900
        %3902 = vdwg.mxu0
        %3903 = vmatprep.subr.bf16.mxu0 %v3487
        %3904 = vmatpush1.bf16.msra.mxu0 %v3486
        %3905 = vmatprep.subr.bf16.mxu0 %v3489
        %3906 = vmatpush1.bf16.msra.mxu0 %v3488
        %3907 = vmatprep.subr.bf16.mxu0 %v3491
        %3908 = vmatpush1.bf16.msra.mxu0 %v3490
        %3909 = vmatprep.subr.bf16.mxu0 %v3493
        %3910 = vmatpush1.bf16.msra.mxu0 %v3492
        %3911 = vmatprep.subr.bf16.mxu0 %v3495
        %3912 = vmatpush1.bf16.msra.mxu0 %v3494
        %3913 = vmatprep.subr.bf16.mxu0 %v3497
        %3914 = vmatpush1.bf16.msra.mxu0 %v3496
        %3915 = vmatprep.subr.bf16.mxu0 %v3499
        %3916 = vmatpush1.bf16.msra.mxu0 %v3498
        %3917 = vmatprep.subr.bf16.mxu0 %v3501
        %3918 = vmatpush1.bf16.msra.mxu0 %v3500
        %3919 = vmatprep.subr.bf16.mxu0 %v3503
        %3920 = vmatpush1.bf16.msra.mxu0 %v3502
        %3921 = vmatprep.subr.bf16.mxu0 %v3505
        %3922 = vmatpush1.bf16.msra.mxu0 %v3504
        %3923 = vmatprep.subr.bf16.mxu0 %v3507
        %3924 = vmatpush1.bf16.msra.mxu0 %v3506
        %3925 = vmatprep.subr.bf16.mxu0 %v3509
        %3926 = vmatpush1.bf16.msra.mxu0 %v3508
        %3927 = vmatprep.subr.bf16.mxu0 %v3511
        %3928 = vmatpush1.bf16.msra.mxu0 %v3510
        %3929 = vmatprep.subr.bf16.mxu0 %v3513
        %3930 = vmatpush1.bf16.msra.mxu0 %v3512
        %3931 = vmatprep.subr.bf16.mxu0 %v3515
        %3932 = vmatpush1.bf16.msra.mxu0 %v3514
        %3933 = vmatprep.subr.bf16.mxu0 %v3517
        %3934 = vmatpush1.bf16.msra.mxu0 %v3516
        %3935 = vmatprep.mubr.bf16.mxu0 %v2805
        %3936 = vmatmul.mubr.bf16.gmra.mrb[0].mxu0 %v2804
        %v3937 = vpop.f32.mrb[0].mxu0
        %v3938 = vadd.f32 %v3745, %v3937
        %v3939 = vpop.f32.mrb[0].mxu0
        %v3940 = vadd.f32 %v3747, %v3939
        %v3941 = vpop.f32.mrb[0].mxu0
        %v3942 = vadd.f32 %v3749, %v3941
        %v3943 = vpop.f32.mrb[0].mxu0
        %v3944 = vadd.f32 %v3751, %v3943
        %3945 = vmatprep.mubr.bf16.mxu0 %v2813
        %3946 = vmatmul.mubr.bf16.gmra.mrb[0].mxu0 %v2812
        %v3947 = vpop.f32.mrb[0].mxu0
        %v3948 = vadd.f32 %v3755, %v3947
        %v3949 = vpop.f32.mrb[0].mxu0
        %v3950 = vadd.f32 %v3757, %v3949
        %v3951 = vpop.f32.mrb[0].mxu0
        %v3952 = vadd.f32 %v3759, %v3951
        %v3953 = vpop.f32.mrb[0].mxu0
        %v3954 = vadd.f32 %v3761, %v3953
        %3955 = vmatprep.mubr.bf16.mxu0 %v2821
        %3956 = vmatmul.mubr.bf16.gmra.mrb[0].mxu0 %v2820
        %v3957 = vpop.f32.mrb[0].mxu0
        %v3958 = vadd.f32 %v3765, %v3957
        %v3959 = vpop.f32.mrb[0].mxu0
        %v3960 = vadd.f32 %v3767, %v3959
        %v3961 = vpop.f32.mrb[0].mxu0
        %v3962 = vadd.f32 %v3769, %v3961
        %v3963 = vpop.f32.mrb[0].mxu0
        %v3964 = vadd.f32 %v3771, %v3963
        %3965 = vmatprep.mubr.bf16.mxu0 %v2829
        %3966 = vmatmul.mubr.bf16.gmra.mrb[0].mxu0 %v2828
        %v3967 = vpop.f32.mrb[0].mxu0
        %v3968 = vadd.f32 %v3775, %v3967
        %v3969 = vpop.f32.mrb[0].mxu0
        %v3970 = vadd.f32 %v3777, %v3969
        %v3971 = vpop.f32.mrb[0].mxu0
        %v3972 = vadd.f32 %v3779, %v3971
        %v3973 = vpop.f32.mrb[0].mxu0
        %v3974 = vadd.f32 %v3781, %v3973
        %3975 = vmatprep.mubr.bf16.mxu0 %v2837
        %3976 = vmatmul.mubr.bf16.gmra.mrb[0].mxu0 %v2836
        %v3977 = vpop.f32.mrb[0].mxu0
        %v3978 = vadd.f32 %v3785, %v3977
        %v3979 = vpop.f32.mrb[0].mxu0
        %v3980 = vadd.f32 %v3787, %v3979
        %v3981 = vpop.f32.mrb[0].mxu0
        %v3982 = vadd.f32 %v3789, %v3981
        %v3983 = vpop.f32.mrb[0].mxu0
        %v3984 = vadd.f32 %v3791, %v3983
        %3985 = vmatprep.mubr.bf16.mxu0 %v2845
        %3986 = vmatmul.mubr.bf16.gmra.mrb[0].mxu0 %v2844
        %v3987 = vpop.f32.mrb[0].mxu0
        %v3988 = vadd.f32 %v3795, %v3987
        %v3989 = vpop.f32.mrb[0].mxu0
        %v3990 = vadd.f32 %v3797, %v3989
        %v3991 = vpop.f32.mrb[0].mxu0
        %v3992 = vadd.f32 %v3799, %v3991
        %v3993 = vpop.f32.mrb[0].mxu0
        %v3994 = vadd.f32 %v3801, %v3993
        %3995 = vmatprep.mubr.bf16.mxu0 %v2853
        %3996 = vmatmul.mubr.bf16.gmra.mrb[0].mxu0 %v2852
        %v3997 = vpop.f32.mrb[0].mxu0
        %v3998 = vadd.f32 %v3805, %v3997
        %v3999 = vpop.f32.mrb[0].mxu0
        %v4000 = vadd.f32 %v3807, %v3999
        %v4001 = vpop.f32.mrb[0].mxu0
        %v4002 = vadd.f32 %v3809, %v4001
        %v4003 = vpop.f32.mrb[0].mxu0
        %v4004 = vadd.f32 %v3811, %v4003
        %4005 = vmatprep.mubr.bf16.mxu0 %v2861
        %4006 = vmatmul.mubr.bf16.gmra.mrb[0].mxu0 %v2860
        %v4007 = vpop.f32.mrb[0].mxu0
        %v4008 = vadd.f32 %v3815, %v4007
        %v4009 = vpop.f32.mrb[0].mxu0
        %v4010 = vadd.f32 %v3817, %v4009
        %v4011 = vpop.f32.mrb[0].mxu0
        %v4012 = vadd.f32 %v3819, %v4011
        %v4013 = vpop.f32.mrb[0].mxu0
        %v4014 = vadd.f32 %v3821, %v4013
        %4015 = vmatprep.mubr.bf16.mxu0 %v2869
        %4016 = vmatmul.mubr.bf16.gmra.mrb[0].mxu0 %v2868
        %v4017 = vpop.f32.mrb[0].mxu0
        %v4018 = vadd.f32 %v3825, %v4017
        %v4019 = vpop.f32.mrb[0].mxu0
        %v4020 = vadd.f32 %v3827, %v4019
        %v4021 = vpop.f32.mrb[0].mxu0
        %v4022 = vadd.f32 %v3829, %v4021
        %v4023 = vpop.f32.mrb[0].mxu0
        %v4024 = vadd.f32 %v3831, %v4023
        %4025 = vmatprep.mubr.bf16.mxu0 %v2877
        %4026 = vmatmul.mubr.bf16.gmra.mrb[0].mxu0 %v2876
        %v4027 = vpop.f32.mrb[0].mxu0
        %v4028 = vadd.f32 %v3835, %v4027
        %v4029 = vpop.f32.mrb[0].mxu0
        %v4030 = vadd.f32 %v3837, %v4029
        %v4031 = vpop.f32.mrb[0].mxu0
        %v4032 = vadd.f32 %v3839, %v4031
        %v4033 = vpop.f32.mrb[0].mxu0
        %v4034 = vadd.f32 %v3841, %v4033
        %4035 = vmatprep.mubr.bf16.mxu0 %v2885
        %4036 = vmatmul.mubr.bf16.gmra.mrb[0].mxu0 %v2884
        %v4037 = vpop.f32.mrb[0].mxu0
        %v4038 = vadd.f32 %v3845, %v4037
        %v4039 = vpop.f32.mrb[0].mxu0
        %v4040 = vadd.f32 %v3847, %v4039
        %v4041 = vpop.f32.mrb[0].mxu0
        %v4042 = vadd.f32 %v3849, %v4041
        %v4043 = vpop.f32.mrb[0].mxu0
        %v4044 = vadd.f32 %v3851, %v4043
        %4045 = vmatprep.mubr.bf16.mxu0 %v2893
        %4046 = vmatmul.mubr.bf16.gmra.mrb[0].mxu0 %v2892
        %v4047 = vpop.f32.mrb[0].mxu0
        %v4048 = vadd.f32 %v3855, %v4047
        %v4049 = vpop.f32.mrb[0].mxu0
        %v4050 = vadd.f32 %v3857, %v4049
        %v4051 = vpop.f32.mrb[0].mxu0
        %v4052 = vadd.f32 %v3859, %v4051
        %v4053 = vpop.f32.mrb[0].mxu0
        %v4054 = vadd.f32 %v3861, %v4053
        %4055 = vmatprep.mubr.bf16.mxu0 %v2901
        %4056 = vmatmul.mubr.bf16.gmra.mrb[0].mxu0 %v2900
        %v4057 = vpop.f32.mrb[0].mxu0
        %v4058 = vadd.f32 %v3865, %v4057
        %v4059 = vpop.f32.mrb[0].mxu0
        %v4060 = vadd.f32 %v3867, %v4059
        %v4061 = vpop.f32.mrb[0].mxu0
        %v4062 = vadd.f32 %v3869, %v4061
        %v4063 = vpop.f32.mrb[0].mxu0
        %v4064 = vadd.f32 %v3871, %v4063
        %4065 = vmatprep.mubr.bf16.mxu0 %v2909
        %4066 = vmatmul.mubr.bf16.gmra.mrb[0].mxu0 %v2908
        %v4067 = vpop.f32.mrb[0].mxu0
        %v4068 = vadd.f32 %v3875, %v4067
        %v4069 = vpop.f32.mrb[0].mxu0
        %v4070 = vadd.f32 %v3877, %v4069
        %v4071 = vpop.f32.mrb[0].mxu0
        %v4072 = vadd.f32 %v3879, %v4071
        %v4073 = vpop.f32.mrb[0].mxu0
        %v4074 = vadd.f32 %v3881, %v4073
        %4075 = vmatprep.mubr.bf16.mxu0 %v2917
        %4076 = vmatmul.mubr.bf16.gmra.mrb[0].mxu0 %v2916
        %v4077 = vpop.f32.mrb[0].mxu0
        %v4078 = vadd.f32 %v3885, %v4077
        %v4079 = vpop.f32.mrb[0].mxu0
        %v4080 = vadd.f32 %v3887, %v4079
        %v4081 = vpop.f32.mrb[0].mxu0
        %v4082 = vadd.f32 %v3889, %v4081
        %v4083 = vpop.f32.mrb[0].mxu0
        %v4084 = vadd.f32 %v3891, %v4083
        %4085 = vmatprep.mubr.bf16.mxu0 %v2925
        %4086 = vmatmul.mubr.bf16.gmra.mrb[0].mxu0 %v2924
        %v4087 = vpop.f32.mrb[0].mxu0
        %v4088 = vadd.f32 %v3895, %v4087
        %v4089 = vpop.f32.mrb[0].mxu0
        %v4090 = vadd.f32 %v3897, %v4089
        %v4091 = vpop.f32.mrb[0].mxu0
        %v4092 = vadd.f32 %v3899, %v4091
        %v4093 = vpop.f32.mrb[0].mxu0
        %v4094 = vadd.f32 %v3901, %v4093
        %4095 = vdwg.mxu0
        %4096 = vmatprep.subr.bf16.mxu0 %v3519
        %4097 = vmatpush1.bf16.msra.mxu0 %v3518
        %4098 = vmatprep.subr.bf16.mxu0 %v3521
        %4099 = vmatpush1.bf16.msra.mxu0 %v3520
        %4100 = vmatprep.subr.bf16.mxu0 %v3523
        %4101 = vmatpush1.bf16.msra.mxu0 %v3522
        %4102 = vmatprep.subr.bf16.mxu0 %v3525
        %4103 = vmatpush1.bf16.msra.mxu0 %v3524
        %4104 = vmatprep.subr.bf16.mxu0 %v3527
        %4105 = vmatpush1.bf16.msra.mxu0 %v3526
        %4106 = vmatprep.subr.bf16.mxu0 %v3529
        %4107 = vmatpush1.bf16.msra.mxu0 %v3528
        %4108 = vmatprep.subr.bf16.mxu0 %v3531
        %4109 = vmatpush1.bf16.msra.mxu0 %v3530
        %4110 = vmatprep.subr.bf16.mxu0 %v3533
        %4111 = vmatpush1.bf16.msra.mxu0 %v3532
        %4112 = vmatprep.subr.bf16.mxu0 %v3535
        %4113 = vmatpush1.bf16.msra.mxu0 %v3534
        %4114 = vmatprep.subr.bf16.mxu0 %v3537
        %4115 = vmatpush1.bf16.msra.mxu0 %v3536
        %4116 = vmatprep.subr.bf16.mxu0 %v3539
        %4117 = vmatpush1.bf16.msra.mxu0 %v3538
        %4118 = vmatprep.subr.bf16.mxu0 %v3541
        %4119 = vmatpush1.bf16.msra.mxu0 %v3540
        %4120 = vmatprep.subr.bf16.mxu0 %v3543
        %4121 = vmatpush1.bf16.msra.mxu0 %v3542
        %4122 = vmatprep.subr.bf16.mxu0 %v3545
        %4123 = vmatpush1.bf16.msra.mxu0 %v3544
        %4124 = vmatprep.subr.bf16.mxu0 %v3547
        %4125 = vmatpush1.bf16.msra.mxu0 %v3546
        %4126 = vmatprep.subr.bf16.mxu0 %v3549
        %4127 = vmatpush1.bf16.msra.mxu0 %v3548
        %4128 = vmatprep.mubr.bf16.mxu0 %v2807
        %4129 = vmatmul.mubr.bf16.gmra.mrb[0].mxu0 %v2806
        %v4130 = vpop.f32.mrb[0].mxu0
        %v4131 = vadd.f32 %v3938, %v4130
        %v4132 = vpop.f32.mrb[0].mxu0
        %v4133 = vadd.f32 %v3940, %v4132
        %v4134 = vpop.f32.mrb[0].mxu0
        %v4135 = vadd.f32 %v3942, %v4134
        %v4136 = vpop.f32.mrb[0].mxu0
        %v4137 = vadd.f32 %v3944, %v4136
        %4138 = vmatprep.mubr.bf16.mxu0 %v2815
        %4139 = vmatmul.mubr.bf16.gmra.mrb[0].mxu0 %v2814
        %v4140 = vpop.f32.mrb[0].mxu0
        %v4141 = vadd.f32 %v3948, %v4140
        %v4142 = vpop.f32.mrb[0].mxu0
        %v4143 = vadd.f32 %v3950, %v4142
        %v4144 = vpop.f32.mrb[0].mxu0
        %v4145 = vadd.f32 %v3952, %v4144
        %v4146 = vpop.f32.mrb[0].mxu0
        %v4147 = vadd.f32 %v3954, %v4146
        %4148 = vmatprep.mubr.bf16.mxu0 %v2823
        %4149 = vmatmul.mubr.bf16.gmra.mrb[0].mxu0 %v2822
        %v4150 = vpop.f32.mrb[0].mxu0
        %v4151 = vadd.f32 %v3958, %v4150
        %v4152 = vpop.f32.mrb[0].mxu0
        %v4153 = vadd.f32 %v3960, %v4152
        %v4154 = vpop.f32.mrb[0].mxu0
        %v4155 = vadd.f32 %v3962, %v4154
        %v4156 = vpop.f32.mrb[0].mxu0
        %v4157 = vadd.f32 %v3964, %v4156
        %4158 = vmatprep.mubr.bf16.mxu0 %v2831
        %4159 = vmatmul.mubr.bf16.gmra.mrb[0].mxu0 %v2830
        %v4160 = vpop.f32.mrb[0].mxu0
        %v4161 = vadd.f32 %v3968, %v4160
        %v4162 = vpop.f32.mrb[0].mxu0
        %v4163 = vadd.f32 %v3970, %v4162
        %v4164 = vpop.f32.mrb[0].mxu0
        %v4165 = vadd.f32 %v3972, %v4164
        %v4166 = vpop.f32.mrb[0].mxu0
        %v4167 = vadd.f32 %v3974, %v4166
        %4168 = vmatprep.mubr.bf16.mxu0 %v2839
        %4169 = vmatmul.mubr.bf16.gmra.mrb[0].mxu0 %v2838
        %v4170 = vpop.f32.mrb[0].mxu0
        %v4171 = vadd.f32 %v3978, %v4170
        %v4172 = vpop.f32.mrb[0].mxu0
        %v4173 = vadd.f32 %v3980, %v4172
        %v4174 = vpop.f32.mrb[0].mxu0
        %v4175 = vadd.f32 %v3982, %v4174
        %v4176 = vpop.f32.mrb[0].mxu0
        %v4177 = vadd.f32 %v3984, %v4176
        %4178 = vmatprep.mubr.bf16.mxu0 %v2847
        %4179 = vmatmul.mubr.bf16.gmra.mrb[0].mxu0 %v2846
        %v4180 = vpop.f32.mrb[0].mxu0
        %v4181 = vadd.f32 %v3988, %v4180
        %v4182 = vpop.f32.mrb[0].mxu0
        %v4183 = vadd.f32 %v3990, %v4182
        %v4184 = vpop.f32.mrb[0].mxu0
        %v4185 = vadd.f32 %v3992, %v4184
        %v4186 = vpop.f32.mrb[0].mxu0
        %v4187 = vadd.f32 %v3994, %v4186
        %4188 = vmatprep.mubr.bf16.mxu0 %v2855
        %4189 = vmatmul.mubr.bf16.gmra.mrb[0].mxu0 %v2854
        %v4190 = vpop.f32.mrb[0].mxu0
        %v4191 = vadd.f32 %v3998, %v4190
        %v4192 = vpop.f32.mrb[0].mxu0
        %v4193 = vadd.f32 %v4000, %v4192
        %v4194 = vpop.f32.mrb[0].mxu0
        %v4195 = vadd.f32 %v4002, %v4194
        %v4196 = vpop.f32.mrb[0].mxu0
        %v4197 = vadd.f32 %v4004, %v4196
        %4198 = vmatprep.mubr.bf16.mxu0 %v2863
        %4199 = vmatmul.mubr.bf16.gmra.mrb[0].mxu0 %v2862
        %v4200 = vpop.f32.mrb[0].mxu0
        %v4201 = vadd.f32 %v4008, %v4200
        %v4202 = vpop.f32.mrb[0].mxu0
        %v4203 = vadd.f32 %v4010, %v4202
        %v4204 = vpop.f32.mrb[0].mxu0
        %v4205 = vadd.f32 %v4012, %v4204
        %v4206 = vpop.f32.mrb[0].mxu0
        %v4207 = vadd.f32 %v4014, %v4206
        %4208 = vmatprep.mubr.bf16.mxu0 %v2871
        %4209 = vmatmul.mubr.bf16.gmra.mrb[0].mxu0 %v2870
        %v4210 = vpop.f32.mrb[0].mxu0
        %v4211 = vadd.f32 %v4018, %v4210
        %v4212 = vpop.f32.mrb[0].mxu0
        %v4213 = vadd.f32 %v4020, %v4212
        %v4214 = vpop.f32.mrb[0].mxu0
        %v4215 = vadd.f32 %v4022, %v4214
        %v4216 = vpop.f32.mrb[0].mxu0
        %v4217 = vadd.f32 %v4024, %v4216
        %4218 = vmatprep.mubr.bf16.mxu0 %v2879
        %4219 = vmatmul.mubr.bf16.gmra.mrb[0].mxu0 %v2878
        %v4220 = vpop.f32.mrb[0].mxu0
        %v4221 = vadd.f32 %v4028, %v4220
        %v4222 = vpop.f32.mrb[0].mxu0
        %v4223 = vadd.f32 %v4030, %v4222
        %v4224 = vpop.f32.mrb[0].mxu0
        %v4225 = vadd.f32 %v4032, %v4224
        %v4226 = vpop.f32.mrb[0].mxu0
        %v4227 = vadd.f32 %v4034, %v4226
        %4228 = vmatprep.mubr.bf16.mxu0 %v2887
        %4229 = vmatmul.mubr.bf16.gmra.mrb[0].mxu0 %v2886
        %v4230 = vpop.f32.mrb[0].mxu0
        %v4231 = vadd.f32 %v4038, %v4230
        %v4232 = vpop.f32.mrb[0].mxu0
        %v4233 = vadd.f32 %v4040, %v4232
        %v4234 = vpop.f32.mrb[0].mxu0
        %v4235 = vadd.f32 %v4042, %v4234
        %v4236 = vpop.f32.mrb[0].mxu0
        %v4237 = vadd.f32 %v4044, %v4236
        %4238 = vmatprep.mubr.bf16.mxu0 %v2895
        %4239 = vmatmul.mubr.bf16.gmra.mrb[0].mxu0 %v2894
        %v4240 = vpop.f32.mrb[0].mxu0
        %v4241 = vadd.f32 %v4048, %v4240
        %v4242 = vpop.f32.mrb[0].mxu0
        %v4243 = vadd.f32 %v4050, %v4242
        %v4244 = vpop.f32.mrb[0].mxu0
        %v4245 = vadd.f32 %v4052, %v4244
        %v4246 = vpop.f32.mrb[0].mxu0
        %v4247 = vadd.f32 %v4054, %v4246
        %4248 = vmatprep.mubr.bf16.mxu0 %v2903
        %4249 = vmatmul.mubr.bf16.gmra.mrb[0].mxu0 %v2902
        %v4250 = vpop.f32.mrb[0].mxu0
        %v4251 = vadd.f32 %v4058, %v4250
        %v4252 = vpop.f32.mrb[0].mxu0
        %v4253 = vadd.f32 %v4060, %v4252
        %v4254 = vpop.f32.mrb[0].mxu0
        %v4255 = vadd.f32 %v4062, %v4254
        %v4256 = vpop.f32.mrb[0].mxu0
        %v4257 = vadd.f32 %v4064, %v4256
        %4258 = vmatprep.mubr.bf16.mxu0 %v2911
        %4259 = vmatmul.mubr.bf16.gmra.mrb[0].mxu0 %v2910
        %v4260 = vpop.f32.mrb[0].mxu0
        %v4261 = vadd.f32 %v4068, %v4260
        %v4262 = vpop.f32.mrb[0].mxu0
        %v4263 = vadd.f32 %v4070, %v4262
        %v4264 = vpop.f32.mrb[0].mxu0
        %v4265 = vadd.f32 %v4072, %v4264
        %v4266 = vpop.f32.mrb[0].mxu0
        %v4267 = vadd.f32 %v4074, %v4266
        %4268 = vmatprep.mubr.bf16.mxu0 %v2919
        %4269 = vmatmul.mubr.bf16.gmra.mrb[0].mxu0 %v2918
        %v4270 = vpop.f32.mrb[0].mxu0
        %v4271 = vadd.f32 %v4078, %v4270
        %v4272 = vpop.f32.mrb[0].mxu0
        %v4273 = vadd.f32 %v4080, %v4272
        %v4274 = vpop.f32.mrb[0].mxu0
        %v4275 = vadd.f32 %v4082, %v4274
        %v4276 = vpop.f32.mrb[0].mxu0
        %v4277 = vadd.f32 %v4084, %v4276
        %4278 = vmatprep.mubr.bf16.mxu0 %v2927
        %4279 = vmatmul.mubr.bf16.gmra.mrb[0].mxu0 %v2926
        %v4280 = vpop.f32.mrb[0].mxu0
        %v4281 = vadd.f32 %v4088, %v4280
        %v4282 = vpop.f32.mrb[0].mxu0
        %v4283 = vadd.f32 %v4090, %v4282
        %v4284 = vpop.f32.mrb[0].mxu0
        %v4285 = vadd.f32 %v4092, %v4284
        %v4286 = vpop.f32.mrb[0].mxu0
        %v4287 = vadd.f32 %v4094, %v4286
        %4288 = vdwg.mxu0
        %4289 = vmatprep.subr.bf16.mxu0 %v3551
        %4290 = vmatpush1.bf16.msra.mxu0 %v3550
        %4291 = vmatprep.subr.bf16.mxu0 %v3553
        %4292 = vmatpush1.bf16.msra.mxu0 %v3552
        %4293 = vmatprep.subr.bf16.mxu0 %v3555
        %4294 = vmatpush1.bf16.msra.mxu0 %v3554
        %4295 = vmatprep.subr.bf16.mxu0 %v3557
        %4296 = vmatpush1.bf16.msra.mxu0 %v3556
        %4297 = vmatprep.subr.bf16.mxu0 %v3559
        %4298 = vmatpush1.bf16.msra.mxu0 %v3558
        %4299 = vmatprep.subr.bf16.mxu0 %v3561
        %4300 = vmatpush1.bf16.msra.mxu0 %v3560
        %4301 = vmatprep.subr.bf16.mxu0 %v3563
        %4302 = vmatpush1.bf16.msra.mxu0 %v3562
        %4303 = vmatprep.subr.bf16.mxu0 %v3565
        %4304 = vmatpush1.bf16.msra.mxu0 %v3564
        %4305 = vmatprep.subr.bf16.mxu0 %v3567
        %4306 = vmatpush1.bf16.msra.mxu0 %v3566
        %4307 = vmatprep.subr.bf16.mxu0 %v3569
        %4308 = vmatpush1.bf16.msra.mxu0 %v3568
        %4309 = vmatprep.subr.bf16.mxu0 %v3571
        %4310 = vmatpush1.bf16.msra.mxu0 %v3570
        %4311 = vmatprep.subr.bf16.mxu0 %v3573
        %4312 = vmatpush1.bf16.msra.mxu0 %v3572
        %4313 = vmatprep.subr.bf16.mxu0 %v3575
        %4314 = vmatpush1.bf16.msra.mxu0 %v3574
        %4315 = vmatprep.subr.bf16.mxu0 %v3577
        %4316 = vmatpush1.bf16.msra.mxu0 %v3576
        %4317 = vmatprep.subr.bf16.mxu0 %v3579
        %4318 = vmatpush1.bf16.msra.mxu0 %v3578
        %4319 = vmatprep.subr.bf16.mxu0 %v3581
        %4320 = vmatpush1.bf16.msra.mxu0 %v3580
        %4321 = vmatprep.mubr.bf16.mxu0 %v2809
        %4322 = vmatmul.mubr.bf16.gmra.mrb[0].mxu0 %v2808
        %v4323 = vpop.f32.mrb[0].mxu0
        %v4324 = vadd.f32 %v4131, %v4323
        %v4325 = vpop.f32.mrb[0].mxu0
        %v4326 = vadd.f32 %v4133, %v4325
        %v4327 = vpop.f32.mrb[0].mxu0
        %v4328 = vadd.f32 %v4135, %v4327
        %v4329 = vpop.f32.mrb[0].mxu0
        %v4330 = vadd.f32 %v4137, %v4329
        %4331 = vmatprep.mubr.bf16.mxu0 %v2817
        %4332 = vmatmul.mubr.bf16.gmra.mrb[0].mxu0 %v2816
        %v4333 = vpop.f32.mrb[0].mxu0
        %v4334 = vadd.f32 %v4141, %v4333
        %v4335 = vpop.f32.mrb[0].mxu0
        %v4336 = vadd.f32 %v4143, %v4335
        %v4337 = vpop.f32.mrb[0].mxu0
        %v4338 = vadd.f32 %v4145, %v4337
        %v4339 = vpop.f32.mrb[0].mxu0
        %v4340 = vadd.f32 %v4147, %v4339
        %4341 = vmatprep.mubr.bf16.mxu0 %v2825
        %4342 = vmatmul.mubr.bf16.gmra.mrb[0].mxu0 %v2824
        %v4343 = vpop.f32.mrb[0].mxu0
        %v4344 = vadd.f32 %v4151, %v4343
        %v4345 = vpop.f32.mrb[0].mxu0
        %v4346 = vadd.f32 %v4153, %v4345
        %v4347 = vpop.f32.mrb[0].mxu0
        %v4348 = vadd.f32 %v4155, %v4347
        %v4349 = vpop.f32.mrb[0].mxu0
        %v4350 = vadd.f32 %v4157, %v4349
        %4351 = vmatprep.mubr.bf16.mxu0 %v2833
        %4352 = vmatmul.mubr.bf16.gmra.mrb[0].mxu0 %v2832
        %v4353 = vpop.f32.mrb[0].mxu0
        %v4354 = vadd.f32 %v4161, %v4353
        %v4355 = vpop.f32.mrb[0].mxu0
        %v4356 = vadd.f32 %v4163, %v4355
        %v4357 = vpop.f32.mrb[0].mxu0
        %v4358 = vadd.f32 %v4165, %v4357
        %v4359 = vpop.f32.mrb[0].mxu0
        %v4360 = vadd.f32 %v4167, %v4359
        %4361 = vmatprep.mubr.bf16.mxu0 %v2841
        %4362 = vmatmul.mubr.bf16.gmra.mrb[0].mxu0 %v2840
        %v4363 = vpop.f32.mrb[0].mxu0
        %v4364 = vadd.f32 %v4171, %v4363
        %v4365 = vpop.f32.mrb[0].mxu0
        %v4366 = vadd.f32 %v4173, %v4365
        %v4367 = vpop.f32.mrb[0].mxu0
        %v4368 = vadd.f32 %v4175, %v4367
        %v4369 = vpop.f32.mrb[0].mxu0
        %v4370 = vadd.f32 %v4177, %v4369
        %4371 = vmatprep.mubr.bf16.mxu0 %v2849
        %4372 = vmatmul.mubr.bf16.gmra.mrb[0].mxu0 %v2848
        %v4373 = vpop.f32.mrb[0].mxu0
        %v4374 = vadd.f32 %v4181, %v4373
        %v4375 = vpop.f32.mrb[0].mxu0
        %v4376 = vadd.f32 %v4183, %v4375
        %v4377 = vpop.f32.mrb[0].mxu0
        %v4378 = vadd.f32 %v4185, %v4377
        %v4379 = vpop.f32.mrb[0].mxu0
        %v4380 = vadd.f32 %v4187, %v4379
        %4381 = vmatprep.mubr.bf16.mxu0 %v2857
        %4382 = vmatmul.mubr.bf16.gmra.mrb[0].mxu0 %v2856
        %v4383 = vpop.f32.mrb[0].mxu0
        %v4384 = vadd.f32 %v4191, %v4383
        %v4385 = vpop.f32.mrb[0].mxu0
        %v4386 = vadd.f32 %v4193, %v4385
        %v4387 = vpop.f32.mrb[0].mxu0
        %v4388 = vadd.f32 %v4195, %v4387
        %v4389 = vpop.f32.mrb[0].mxu0
        %v4390 = vadd.f32 %v4197, %v4389
        %4391 = vmatprep.mubr.bf16.mxu0 %v2865
        %4392 = vmatmul.mubr.bf16.gmra.mrb[0].mxu0 %v2864
        %v4393 = vpop.f32.mrb[0].mxu0
        %v4394 = vadd.f32 %v4201, %v4393
        %v4395 = vpop.f32.mrb[0].mxu0
        %v4396 = vadd.f32 %v4203, %v4395
        %v4397 = vpop.f32.mrb[0].mxu0
        %v4398 = vadd.f32 %v4205, %v4397
        %v4399 = vpop.f32.mrb[0].mxu0
        %v4400 = vadd.f32 %v4207, %v4399
        %4401 = vmatprep.mubr.bf16.mxu0 %v2873
        %4402 = vmatmul.mubr.bf16.gmra.mrb[0].mxu0 %v2872
        %v4403 = vpop.f32.mrb[0].mxu0
        %v4404 = vadd.f32 %v4211, %v4403
        %v4405 = vpop.f32.mrb[0].mxu0
        %v4406 = vadd.f32 %v4213, %v4405
        %v4407 = vpop.f32.mrb[0].mxu0
        %v4408 = vadd.f32 %v4215, %v4407
        %v4409 = vpop.f32.mrb[0].mxu0
        %v4410 = vadd.f32 %v4217, %v4409
        %4411 = vmatprep.mubr.bf16.mxu0 %v2881
        %4412 = vmatmul.mubr.bf16.gmra.mrb[0].mxu0 %v2880
        %v4413 = vpop.f32.mrb[0].mxu0
        %v4414 = vadd.f32 %v4221, %v4413
        %v4415 = vpop.f32.mrb[0].mxu0
        %v4416 = vadd.f32 %v4223, %v4415
        %v4417 = vpop.f32.mrb[0].mxu0
        %v4418 = vadd.f32 %v4225, %v4417
        %v4419 = vpop.f32.mrb[0].mxu0
        %v4420 = vadd.f32 %v4227, %v4419
        %4421 = vmatprep.mubr.bf16.mxu0 %v2889
        %4422 = vmatmul.mubr.bf16.gmra.mrb[0].mxu0 %v2888
        %v4423 = vpop.f32.mrb[0].mxu0
        %v4424 = vadd.f32 %v4231, %v4423
        %v4425 = vpop.f32.mrb[0].mxu0
        %v4426 = vadd.f32 %v4233, %v4425
        %v4427 = vpop.f32.mrb[0].mxu0
        %v4428 = vadd.f32 %v4235, %v4427
        %v4429 = vpop.f32.mrb[0].mxu0
        %v4430 = vadd.f32 %v4237, %v4429
        %4431 = vmatprep.mubr.bf16.mxu0 %v2897
        %4432 = vmatmul.mubr.bf16.gmra.mrb[0].mxu0 %v2896
        %v4433 = vpop.f32.mrb[0].mxu0
        %v4434 = vadd.f32 %v4241, %v4433
        %v4435 = vpop.f32.mrb[0].mxu0
        %v4436 = vadd.f32 %v4243, %v4435
        %v4437 = vpop.f32.mrb[0].mxu0
        %v4438 = vadd.f32 %v4245, %v4437
        %v4439 = vpop.f32.mrb[0].mxu0
        %v4440 = vadd.f32 %v4247, %v4439
        %4441 = vmatprep.mubr.bf16.mxu0 %v2905
        %4442 = vmatmul.mubr.bf16.gmra.mrb[0].mxu0 %v2904
        %v4443 = vpop.f32.mrb[0].mxu0
        %v4444 = vadd.f32 %v4251, %v4443
        %v4445 = vpop.f32.mrb[0].mxu0
        %v4446 = vadd.f32 %v4253, %v4445
        %v4447 = vpop.f32.mrb[0].mxu0
        %v4448 = vadd.f32 %v4255, %v4447
        %v4449 = vpop.f32.mrb[0].mxu0
        %v4450 = vadd.f32 %v4257, %v4449
        %4451 = vmatprep.mubr.bf16.mxu0 %v2913
        %4452 = vmatmul.mubr.bf16.gmra.mrb[0].mxu0 %v2912
        %v4453 = vpop.f32.mrb[0].mxu0
        %v4454 = vadd.f32 %v4261, %v4453
        %v4455 = vpop.f32.mrb[0].mxu0
        %v4456 = vadd.f32 %v4263, %v4455
        %v4457 = vpop.f32.mrb[0].mxu0
        %v4458 = vadd.f32 %v4265, %v4457
        %v4459 = vpop.f32.mrb[0].mxu0
        %v4460 = vadd.f32 %v4267, %v4459
        %4461 = vmatprep.mubr.bf16.mxu0 %v2921
        %4462 = vmatmul.mubr.bf16.gmra.mrb[0].mxu0 %v2920
        %v4463 = vpop.f32.mrb[0].mxu0
        %v4464 = vadd.f32 %v4271, %v4463
        %v4465 = vpop.f32.mrb[0].mxu0
        %v4466 = vadd.f32 %v4273, %v4465
        %v4467 = vpop.f32.mrb[0].mxu0
        %v4468 = vadd.f32 %v4275, %v4467
        %v4469 = vpop.f32.mrb[0].mxu0
        %v4470 = vadd.f32 %v4277, %v4469
        %4471 = vmatprep.mubr.bf16.mxu0 %v2929
        %4472 = vmatmul.mubr.bf16.gmra.mrb[0].mxu0 %v2928
        %v4473 = vpop.f32.mrb[0].mxu0
        %v4474 = vadd.f32 %v4281, %v4473
        %v4475 = vpop.f32.mrb[0].mxu0
        %v4476 = vadd.f32 %v4283, %v4475
        %v4477 = vpop.f32.mrb[0].mxu0
        %v4478 = vadd.f32 %v4285, %v4477
        %v4479 = vpop.f32.mrb[0].mxu0
        %v4480 = vadd.f32 %v4287, %v4479
        %4481 = vdwg.mxu0
        %v4482 = vmax.f32 %v4324, 0.0
        %v4483 = vmax.f32 %v4326, 0.0
        %v4484 = vmax.f32 %v4328, 0.0
        %v4485 = vmax.f32 %v4330, 0.0
        %v4486 = vmax.f32 %v4334, 0.0
        %v4487 = vmax.f32 %v4336, 0.0
        %v4488 = vmax.f32 %v4338, 0.0
        %v4489 = vmax.f32 %v4340, 0.0
        %v4490 = vmax.f32 %v4344, 0.0
        %v4491 = vmax.f32 %v4346, 0.0
        %v4492 = vmax.f32 %v4348, 0.0
        %v4493 = vmax.f32 %v4350, 0.0
        %v4494 = vmax.f32 %v4354, 0.0
        %v4495 = vmax.f32 %v4356, 0.0
        %v4496 = vmax.f32 %v4358, 0.0
        %v4497 = vmax.f32 %v4360, 0.0
        %v4498 = vmax.f32 %v4364, 0.0
        %v4499 = vmax.f32 %v4366, 0.0
        %v4500 = vmax.f32 %v4368, 0.0
        %v4501 = vmax.f32 %v4370, 0.0
        %v4502 = vmax.f32 %v4374, 0.0
        %v4503 = vmax.f32 %v4376, 0.0
        %v4504 = vmax.f32 %v4378, 0.0
        %v4505 = vmax.f32 %v4380, 0.0
        %v4506 = vmax.f32 %v4384, 0.0
        %v4507 = vmax.f32 %v4386, 0.0
        %v4508 = vmax.f32 %v4388, 0.0
        %v4509 = vmax.f32 %v4390, 0.0
        %v4510 = vmax.f32 %v4394, 0.0
        %v4511 = vmax.f32 %v4396, 0.0
        %v4512 = vmax.f32 %v4398, 0.0
        %v4513 = vmax.f32 %v4400, 0.0
        %v4514 = vmax.f32 %v4404, 0.0
        %v4515 = vmax.f32 %v4406, 0.0
        %v4516 = vmax.f32 %v4408, 0.0
        %v4517 = vmax.f32 %v4410, 0.0
        %v4518 = vmax.f32 %v4414, 0.0
        %v4519 = vmax.f32 %v4416, 0.0
        %v4520 = vmax.f32 %v4418, 0.0
        %v4521 = vmax.f32 %v4420, 0.0
        %v4522 = vmax.f32 %v4424, 0.0
        %v4523 = vmax.f32 %v4426, 0.0
        %v4524 = vmax.f32 %v4428, 0.0
        %v4525 = vmax.f32 %v4430, 0.0
        %v4526 = vmax.f32 %v4434, 0.0
        %v4527 = vmax.f32 %v4436, 0.0
        %v4528 = vmax.f32 %v4438, 0.0
        %v4529 = vmax.f32 %v4440, 0.0
        %v4530 = vmax.f32 %v4444, 0.0
        %v4531 = vmax.f32 %v4446, 0.0
        %v4532 = vmax.f32 %v4448, 0.0
        %v4533 = vmax.f32 %v4450, 0.0
        %v4534 = vmax.f32 %v4454, 0.0
        %v4535 = vmax.f32 %v4456, 0.0
        %v4536 = vmax.f32 %v4458, 0.0
        %v4537 = vmax.f32 %v4460, 0.0
        %v4538 = vmax.f32 %v4464, 0.0
        %v4539 = vmax.f32 %v4466, 0.0
        %v4540 = vmax.f32 %v4468, 0.0
        %v4541 = vmax.f32 %v4470, 0.0
        %v4542 = vmax.f32 %v4474, 0.0
        %v4543 = vmax.f32 %v4476, 0.0
        %v4544 = vmax.f32 %v4478, 0.0
        %v4545 = vmax.f32 %v4480, 0.0
        %v4546 = vld [vmem:[%s5] sm:$0x3]
        %v4547 = vpack.c.bf16 %v4484, %v4482
        %v4548 = vpack.c.bf16 %v4485, %v4483
        %v4549 = vpack.c.bf16 %v4488, %v4486
        %v4550 = vpack.c.bf16 %v4489, %v4487
        %v4551 = vpack.c.bf16 %v4492, %v4490
        %v4552 = vpack.c.bf16 %v4493, %v4491
        %v4553 = vpack.c.bf16 %v4496, %v4494
        %v4554 = vpack.c.bf16 %v4497, %v4495
        %v4555 = vpack.c.bf16 %v4500, %v4498
        %v4556 = vpack.c.bf16 %v4501, %v4499
        %v4557 = vpack.c.bf16 %v4504, %v4502
        %v4558 = vpack.c.bf16 %v4505, %v4503
        %v4559 = vpack.c.bf16 %v4508, %v4506
        %v4560 = vpack.c.bf16 %v4509, %v4507
        %v4561 = vpack.c.bf16 %v4512, %v4510
        %v4562 = vpack.c.bf16 %v4513, %v4511
        %v4563 = vpack.c.bf16 %v4516, %v4514
        %v4564 = vpack.c.bf16 %v4517, %v4515
        %v4565 = vpack.c.bf16 %v4520, %v4518
        %v4566 = vpack.c.bf16 %v4521, %v4519
        %v4567 = vpack.c.bf16 %v4524, %v4522
        %v4568 = vpack.c.bf16 %v4525, %v4523
        %v4569 = vpack.c.bf16 %v4528, %v4526
        %v4570 = vpack.c.bf16 %v4529, %v4527
        %v4571 = vpack.c.bf16 %v4532, %v4530
        %v4572 = vpack.c.bf16 %v4533, %v4531
        %v4573 = vpack.c.bf16 %v4536, %v4534
        %v4574 = vpack.c.bf16 %v4537, %v4535
        %v4575 = vpack.c.bf16 %v4540, %v4538
        %v4576 = vpack.c.bf16 %v4541, %v4539
        %v4577 = vpack.c.bf16 %v4544, %v4542
        %v4578 = vpack.c.bf16 %v4545, %v4543
        %s4579 = sld [smem:[#allocation2]]
        %v4580 = vstv %s4579
        %v4583 = vunpack.c.l.s4 1966171168
        %v4584 = vunpack.c.0.s8 %v4583
        %v4585 = vlaneseq
        %v4586 = vshrl.u32 %v4585, 7
        %v4587 = vsub.s32 %v4584, %v4586
        %v4588 = vrot.slane %v4546, %v4587
        %v4589 = vcombine.high %v4588, %v4588
        %v4591 = vunpack.c.l.s4 1966171168
        %v4592 = vunpack.c.0.s8 %v4591
        %v4593 = vlaneseq
        %v4594 = vshrl.u32 %v4593, 7
        %v4595 = vsub.s32 %v4592, %v4594
        %v4596 = vrot.slane %v4588, %v4595
        %v4598 = vunpack.c.l.s4 1966171168
        %v4599 = vunpack.c.0.s8 %v4598
        %v4600 = vlaneseq
        %v4601 = vshrl.u32 %v4600, 7
        %v4602 = vsub.s32 %v4599, %v4601
        %v4603 = vrot.slane %v4589, %v4602
        %4606 = vmatprep.subr.bf16.mxu0 %v4548
        %4607 = vmatpush1.bf16.xpose.msra.mxu0 %v4547
        %4608 = vmatprep.subr.bf16.mxu0 %v4550
        %4609 = vmatpush1.bf16.xpose.msra.mxu0 %v4549
        %4610 = vmatprep.subr.bf16.mxu0 %v4552
        %4611 = vmatpush1.bf16.xpose.msra.mxu0 %v4551
        %4612 = vmatprep.subr.bf16.mxu0 %v4554
        %4613 = vmatpush1.bf16.xpose.msra.mxu0 %v4553
        %4614 = vmatprep.subr.bf16.mxu0 %v4556
        %4615 = vmatpush1.bf16.xpose.msra.mxu0 %v4555
        %4616 = vmatprep.subr.bf16.mxu0 %v4558
        %4617 = vmatpush1.bf16.xpose.msra.mxu0 %v4557
        %4618 = vmatprep.subr.bf16.mxu0 %v4560
        %4619 = vmatpush1.bf16.xpose.msra.mxu0 %v4559
        %4620 = vmatprep.subr.bf16.mxu0 %v4562
        %4621 = vmatpush1.bf16.xpose.msra.mxu0 %v4561
        %4622 = vmatprep.subr.bf16.mxu0 %v4564
        %4623 = vmatpush1.bf16.xpose.msra.mxu0 %v4563
        %4624 = vmatprep.subr.bf16.mxu0 %v4566
        %4625 = vmatpush1.bf16.xpose.msra.mxu0 %v4565
        %4626 = vmatprep.subr.bf16.mxu0 %v4568
        %4627 = vmatpush1.bf16.xpose.msra.mxu0 %v4567
        %4628 = vmatprep.subr.bf16.mxu0 %v4570
        %4629 = vmatpush1.bf16.xpose.msra.mxu0 %v4569
        %4630 = vmatprep.subr.bf16.mxu0 %v4572
        %4631 = vmatpush1.bf16.xpose.msra.mxu0 %v4571
        %4632 = vmatprep.subr.bf16.mxu0 %v4574
        %4633 = vmatpush1.bf16.xpose.msra.mxu0 %v4573
        %4634 = vmatprep.subr.bf16.mxu0 %v4576
        %4635 = vmatpush1.bf16.xpose.msra.mxu0 %v4575
        %4636 = vmatprep.subr.bf16.mxu0 %v4578
        %4637 = vmatpush1.bf16.xpose.msra.mxu0 %v4577
        %4638 = vmatprep.mubr.bf16.mxu0 %v4603
        %4639 = vmatmul.mubr.bf16.gmra.mrb[0].mxu0 %v4596
        %v4640 = vpop.f32.mrb[0].mxu0
        %v4641 = vadd.f32 %v4580, %v4640
        %v4642 = vpop.f32.mrb[0].mxu0
        %v4643 = vadd.f32 %v4580, %v4642
        %v4644 = vpop.f32.mrb[0].mxu0
        %v4645 = vpop.f32.mrb[0].mxu0
        %4646 = vdwg.mxu0
        %v4649 = vcombine.low %v4641, %v4643
        %v4651 = vunpack.c.l.s4 1966171168
        %v4652 = vunpack.c.0.s8 %v4651
        %v4653 = vlaneseq
        %v4654 = vshrl.u32 %v4653, 7
        %v4655 = vsub.s32 %v4652, %v4654
        %v4656 = vrot.slane %v4649, %v4655
        %v4658 = vunpack.c.l.s4 1966171168
        %v4659 = vunpack.c.0.s8 %v4658
        %v4660 = vlaneseq
        %v4661 = vshrl.u32 %v4660, 7
        %v4662 = vsub.s32 %v4659, %v4661
        %v4663 = vrot.slane %v4656, %v4662
        %v4665 = vlaneseq
        %vm4666 = vcmp.ge.s32.totalorder %v4665, 0
        %vm4667 = vcmp.lt.s32.totalorder %v4665, 256
        %vm4668 = vmand %vm4666, %vm4667
        %4669 = vst.msk [vmem:[%s288] sm:$0x3] %vm4668, %v4663
        %s4670 = sand.u32 %s183, 1
        %s4671 = scalar_lea.sflag [#allocation5], %s4670
        %s4672 = sand.u32 %s183, 1
        %s4673 = smul.addr %s4672, 2
        %s4674 = scalar_lea.vmem [#allocation6], %s4673
        // Predicated region
        $region53: #{tpu_custom_call.1} parent=47 // pred_check
          %p4675 = pneg %p193
        $region54: #{tpu_custom_call.1} parent=47 // pred_check_branch
          %4677 = sbr.rel (%p4675) target = $region56
        $region55: #{tpu_custom_call.1} parent=47 // pred_region
          %s4678 = smul.u32 2, %s23
          %s4680 = ssub.s32 32, 32
          %4681 = vsyncadd %s4671, %s4680
          %s4682 = smul.addr %s4678, 16
          %s4683 = scalar_lea.hbm %s7, %s4682
          %s4685 = sshll.u32 %s4674, 4
          %s4686 = int_to_ptr.vmem [resolvable:$true] %s4685
          %4688 = dma.vmem_to_hbm [thread:$0]  %s4686, 32, %s4683, %s4671
        $region56: #{tpu_custom_call.1} parent=47 // pred_fallthru
          _
      $region48: #{tpu_custom_call.1} parent=5 // pred_fallthru
        _
      %p4689 = scmp.le.s32.totalorder 2, %s18
      // Predicated region
      $region57: #{tpu_custom_call.1} parent=5 // pred_check
        %p4690 = pneg %p4689
      $region58: #{tpu_custom_call.1} parent=5 // pred_check_branch
        %4692 = sbr.rel (%p4690) target = $region60
      $region59: #{tpu_custom_call.1} parent=5 // pred_region
        %s4693 = ssub.s32 %s18, 2
        // Predicated region
        $region61: #{tpu_custom_call.1} parent=59 // pred_check
          %p4694 = pneg %p199
        $region62: #{tpu_custom_call.1} parent=59 // pred_check_branch
          %4696 = sbr.rel (%p4694) target = $region64
        $region63: #{tpu_custom_call.1} parent=59 // pred_region
          %s4697 = sand.u32 %s184, 1
          %s4698 = scalar_lea.sflag [#allocation5], %s4697
          %s4699 = sand.u32 %s184, 1
          %s4700 = smul.addr %s4699, 2
          %s4701 = scalar_lea.vmem [#allocation6], %s4700
          %4702 = dma.done %s4698, 32
        $region64: #{tpu_custom_call.1} parent=59 // pred_fallthru
          _
      $region60: #{tpu_custom_call.1} parent=5 // pred_fallthru
        _
    $region6: #{tpu_custom_call.1} parent=1 // loop_footer
      %s22 = sadd.s32 1, %s18
    $region7: #{tpu_custom_call.1} parent=1 // loop_footer_branch
      %17 = sbr.rel target = $region3
    $region8: #{tpu_custom_call.1} parent=1 // loop_exit
      _
    %4703 = vsyncpa [#allocation4], 1
    %s4704 = scalar_lea.sflag [#allocation4], 1
    %4705 = vsyncpa %s4704, 1
    %4706 = vsyncpa [#allocation5], 1
    %s4707 = scalar_lea.sflag [#allocation5], 1
    %4708 = vsyncpa %s4707, 1

</llo_original>
